<compile_context>
chip_gen: v6e
topology: v6e:2x2x1
jax: 0.10.0
libtpu: 0.0.40
codegen_flags: <defaults>
</compile_context>

<pallas_src>
import functools

import jax
import jax.numpy as jnp
from jax import lax
from jax.experimental import pallas as pl
from jax.experimental.pallas import tpu as pltpu

LRELU_SLOPE = 0.1
PERIODS = (2, 3)      # MPD periods
NUM_SCALES = 2        # MSD scales (identity + one avg-pool)
TAU = 0.04

# (weight key, bias key, stride, padding, lrelu slope or None)
MPD_CFG = (("w0", "b0", 3, 2, LRELU_SLOPE),
           ("w1", "b1", 3, 2, LRELU_SLOPE),
           ("wp", "bp", 1, 1, None))
MSD_CFG = (("w0", "b0", 2, 3, LRELU_SLOPE),
           ("w1", "b1", 2, 3, LRELU_SLOPE),
           ("wp", "bp", 1, 1, None))


def _cdiv(a, b):
    return -(-a // b)


def _round_up(a, b):
    return _cdiv(a, b) * b


# ---------------------------------------------------------------------------
# Pallas kernel 1: fused conv (matmul+bias+lrelu) over the (real, gen) pair
# with feature-matching / generator-loss partial sums in the epilogue.
# ---------------------------------------------------------------------------
def _conv_pair_kernel(a_ref, w_ref, b_ref, o_ref, fm_ref, gen_ref, *,
                      negative_slope, m_valid, tm):
    i = pl.program_id(0)
    w = w_ref[...]                     # (Cout, Kc) bf16
    b = b_ref[...]                     # (Cout, 1)  f32
    acts = []
    for s in range(2):                 # 0 = real, 1 = generated
        acc = jnp.dot(w, a_ref[s], preferred_element_type=jnp.float32)
        acc = acc + b                  # (Cout, TM) f32, lane-dense in TM
        if negative_slope is not None:
            acc = jnp.where(acc > 0, acc, acc * negative_slope)
        o_ref[s] = acc
        acts.append(acc)

    # Feature-matching partial: padded columns are zero in BOTH streams, so
    # their activations are identical and contribute exactly 0 (no mask).
    fm_val = jnp.sum(jnp.abs(acts[0] - acts[1]))

    # Generator-loss partial on the generated stream (only consumed for the
    # final layer). Padded columns give (1 - bias)^2 != 0, so mask them out.
    col = jax.lax.broadcasted_iota(jnp.int32, acts[1].shape, 1) + i * tm
    valid = (col < m_valid).astype(jnp.float32)
    gen_val = jnp.sum(jnp.square(1.0 - acts[1]) * valid)

    # Per-block partials are written as full (8,128) tiles (tile-aligned,
    # unmasked stores); host sums partials[:, 0, 0].
    fm_ref[...] = jnp.full((1, 8, 128), fm_val, jnp.float32)
    gen_ref[...] = jnp.full((1, 8, 128), gen_val, jnp.float32)


def im2col_T(x, K, stride, padding):
    """x: (Cin, NB, L) -> (Cin*K, NB*Lout) transposed im2col (K tap slices)."""
    Cin, NB, L = x.shape
    xp = jnp.pad(x, ((0, 0), (0, 0), (padding, padding)))
    Lp = L + 2 * padding
    Lout = (Lp - K) // stride + 1
    cols = [lax.slice(xp, (0, 0, k), (Cin, NB, k + stride * (Lout - 1) + 1),
                      (1, 1, stride)) for k in range(K)]
    p = jnp.stack(cols, axis=1)                      # (Cin, K, NB, Lout)
    return p.reshape(Cin * K, NB * Lout), Lout


def conv_pair(x_pair, w, b, stride, padding, act_slope, tm_max=2048):
    """Fused conv for the (real, generated) pair.

    x_pair: (2, Cin, NB, L) channels-first activations for both streams.
    Returns: activations (2, Cout, NB, Lout),
             sum|real - gen|, element count, sum(1 - gen)^2.
    """
    _, Cin, NB, L = x_pair.shape
    Cout, _, K = w.shape
    a0, Lout = im2col_T(x_pair[0], K, stride, padding)
    a1, _ = im2col_T(x_pair[1], K, stride, padding)
    Kc = Cin * K
    M = NB * Lout
    TM = min(tm_max, _round_up(M, 128))              # lane-dense row tile
    G = _cdiv(M, TM)
    Mpad = G * TM

    aT = jnp.stack([a0, a1], axis=0)                 # (2, Kc, M)
    aT = jnp.pad(aT, ((0, 0), (0, 0), (0, Mpad - M))).astype(jnp.bfloat16)
    wT = w.reshape(Cout, Kc).astype(jnp.bfloat16)
    b2 = b.reshape(Cout, 1).astype(jnp.float32)

    kern = functools.partial(_conv_pair_kernel, negative_slope=act_slope,
                             m_valid=M, tm=TM)
    act, fm_p, gen_p = pl.pallas_call(
        kern,
        grid=(G,),
        in_specs=[pl.BlockSpec((2, Kc, TM), lambda i: (0, 0, i)),
                  pl.BlockSpec((Cout, Kc), lambda i: (0, 0)),
                  pl.BlockSpec((Cout, 1), lambda i: (0, 0))],
        out_specs=(pl.BlockSpec((2, Cout, TM), lambda i: (0, 0, i)),
                   pl.BlockSpec((1, 8, 128), lambda i: (i, 0, 0)),
                   pl.BlockSpec((1, 8, 128), lambda i: (i, 0, 0))),
        out_shape=(jax.ShapeDtypeStruct((2, Cout, Mpad), jnp.float32),
                   jax.ShapeDtypeStruct((G, 8, 128), jnp.float32),
                   jax.ShapeDtypeStruct((G, 8, 128), jnp.float32)),
        compiler_params=pltpu.CompilerParams(
            dimension_semantics=("parallel",)),
    )(aT, wT, b2)

    act = act[:, :, :M].reshape(2, Cout, NB, Lout)
    fm_sum = jnp.sum(fm_p[:, 0, 0])
    gen_sum = jnp.sum(gen_p[:, 0, 0])
    return act, fm_sum, Cout * M, gen_sum


# ---------------------------------------------------------------------------
# Pallas kernel 2: TPRLS masked second moment, tiled (R,128) layout.
# ---------------------------------------------------------------------------
def _tprls_kernel(m_ref, d_ref, num_ref, den_ref, *, n_valid, tr):
    i = pl.program_id(0)
    d = d_ref[...]                                   # (TR, 128) f32
    m = m_ref[...]                                   # (1, 1) median, broadcasts
    idx = (i * tr * 128
           + jax.lax.broadcasted_iota(jnp.int32, d.shape, 0) * 128
           + jax.lax.broadcasted_iota(jnp.int32, d.shape, 1))
    sel = jnp.logical_and(d < m, idx < n_valid)
    diff = d - m
    num = jnp.sum(jnp.where(sel, diff * diff, 0.0))
    den = jnp.sum(sel.astype(jnp.float32))
    num_ref[...] = jnp.full((1, 8, 128), num, jnp.float32)
    den_ref[...] = jnp.full((1, 8, 128), den, jnp.float32)


def tprls_loss(r_score, g_score):
    """Reference quirk kept: dr <- generated, dg <- real (variable-name swap)."""
    d = (g_score - r_score).reshape(-1).astype(jnp.float32)
    n = d.shape[0]
    # TODO(synk): no Pallas sort/selection primitive; median (lower middle
    # element, matching torch.median for even n) uses an XLA sort.
    m = jnp.sort(d)[(n - 1) // 2]

    R = _cdiv(n, 128)
    TR = min(256, _round_up(R, 8))
    G = _cdiv(R, TR)
    Rpad = G * TR
    d2 = jnp.pad(d, (0, Rpad * 128 - n)).reshape(Rpad, 128)

    kern = functools.partial(_tprls_kernel, n_valid=n, tr=TR)
    num_p, den_p = pl.pallas_call(
        kern,
        grid=(G,),
        in_specs=[pl.BlockSpec((1, 1), lambda i: (0, 0)),
                  pl.BlockSpec((TR, 128), lambda i: (i, 0))],
        out_specs=(pl.BlockSpec((1, 8, 128), lambda i: (i, 0, 0)),
                   pl.BlockSpec((1, 8, 128), lambda i: (i, 0, 0))),
        out_shape=(jax.ShapeDtypeStruct((G, 8, 128), jnp.float32),
                   jax.ShapeDtypeStruct((G, 8, 128), jnp.float32)),
        compiler_params=pltpu.CompilerParams(
            dimension_semantics=("parallel",)),
    )(m.reshape(1, 1), d2)
    num = jnp.sum(num_p[:, 0, 0])
    den = jnp.sum(den_p[:, 0, 0])
    # Guard den == 0 (torch's empty masked mean would be NaN); with the median
    # threshold this only triggers for degenerate inputs.
    l_rel = jnp.where(den > 0, num / jnp.maximum(den, 1.0), 0.0)
    return TAU - jax.nn.relu(TAU - l_rel)


# ---------------------------------------------------------------------------
# Synthetic MPD / MSD discriminator stacks (channels-first "C, N, L" layout).
# ---------------------------------------------------------------------------
def to_period_cnl(x, period):
    """(B, C, T) -> (C, B*period, T//period): MPD's (K,1) conv2d as conv1d."""
    B, C, T = x.shape
    assert T % period == 0  # TODO(synk): reference reflect-pads arbitrary T.
    x = x.reshape(B, C, T // period, period)          # (B, C, H, W)
    return x.transpose(1, 0, 3, 2).reshape(C, B * period, T // period)


def to_cnl(x):
    return x.transpose(1, 0, 2)                        # (B,C,T) -> (C,B,T)


def avg_pool1d_cnl(x, kernel=4, stride=2, padding=2):
    xp = jnp.pad(x, ((0, 0), (0, 0), (padding, padding)))
    Lp = xp.shape[-1]
    Lout = (Lp - kernel) // stride + 1
    acc = None
    for k in range(kernel):
        s = lax.slice(xp, (0, 0, k),
                      (xp.shape[0], xp.shape[1], k + stride * (Lout - 1) + 1),
                      (1, 1, stride))
        acc = s if acc is None else acc + s
    return acc / float(kernel)


def disc_pair_losses(params, x_pair, cfg):
    """Both streams through one conv stack; fused per-layer loss pieces."""
    fm_terms = []
    h = x_pair
    gen_sum = None
    gen_numel = None
    for wk, bk, stride, padding, slope in cfg:
        h, fm_sum, numel, gsum = conv_pair(h, params[wk], params[bk],
                                           stride, padding, slope)
        fm_terms.append((fm_sum, numel))
        gen_sum, gen_numel = gsum, numel               # final layer = score
    r_score = h[0].reshape(-1)
    g_score = h[1].reshape(-1)
    return fm_terms, gen_sum, gen_numel, r_score, g_score


def family_losses(params_list, x_pairs, cfg):
    fm = jnp.float32(0.0)
    gen = jnp.float32(0.0)
    rel = jnp.float32(0.0)
    for prm, xp in zip(params_list, x_pairs):
        fm_terms, gsum, gnum, r, g = disc_pair_losses(prm, xp, cfg)
        for s, n in fm_terms:                          # mean|r-g| per fmap
            fm = fm + s / jnp.float32(n)
        gen = gen + gsum / jnp.float32(gnum)           # mean((1-g)^2)
        rel = rel + tprls_loss(r, g)
    return fm * 2.0, gen, rel


# ---------------------------------------------------------------------------
# GeneratorLoss.forward
# ---------------------------------------------------------------------------
@jax.jit
def generator_total_loss(mpd_params, msd_params, y, y_hat):
    mpd_pairs = [jnp.stack([to_period_cnl(y, p), to_period_cnl(y_hat, p)], 0)
                 for p in PERIODS]
    yr, yg = to_cnl(y), to_cnl(y_hat)
    msd_pairs = []
    for i in range(NUM_SCALES):
        if i > 0:
            yr = avg_pool1d_cnl(yr)
            yg = avg_pool1d_cnl(yg)
        msd_pairs.append(jnp.stack([yr, yg], 0))

    loss_fm_f, loss_gen_f, rel_f = family_losses(mpd_params, mpd_pairs, MPD_CFG)
    loss_fm_s, loss_gen_s, rel_s = family_losses(msd_params, msd_pairs, MSD_CFG)
    loss_rel = rel_f + rel_s
    loss_gen_all = loss_gen_s + loss_gen_f + loss_fm_s + loss_fm_f + loss_rel
    return jnp.mean(loss_gen_all)   # .mean() on a scalar is a no-op


# ---------------------------------------------------------------------------
# Deterministic parameter init + driver
# ---------------------------------------------------------------------------
def init_params(key):
    def conv_init(k, cout, cin, ksz):
        kw, kb = jax.random.split(k)
        w = 0.02 * jax.random.normal(kw, (cout, cin, ksz), jnp.float32)
        b = 0.01 * jax.random.normal(kb, (cout,), jnp.float32)
        return w, b

    mpd = []
    for _ in PERIODS:
        key, k0, k1, k2 = jax.random.split(key, 4)
        w0, b0 = conv_init(k0, 4, 1, 5)
        w1, b1 = conv_init(k1, 8, 4, 5)
        wp, bp = conv_init(k2, 1, 8, 3)
        mpd.append(dict(w0=w0, b0=b0, w1=w1, b1=b1, wp=wp, bp=bp))

    msd = []
    for _ in range(NUM_SCALES):
        key, k0, k1, k2 = jax.random.split(key, 4)
        w0, b0 = conv_init(k0, 4, 1, 7)
        w1, b1 = conv_init(k1, 8, 4, 7)
        wp, bp = conv_init(k2, 1, 8, 3)
        msd.append(dict(w0=w0, b0=b0, w1=w1, b1=b1, wp=wp, bp=bp))
    return mpd, msd


if __name__ == "__main__":
    key = jax.random.PRNGKey(0)
    kp, ky, kyh = jax.random.split(key, 3)
    mpd_params, msd_params = init_params(kp)

    B, T = 2, 96  # T divisible by all periods -> no reflect padding needed
    y = jax.random.normal(ky, (B, 1, T), jnp.float32)
    y_hat = jax.random.normal(kyh, (B, 1, T), jnp.float32)

    loss = generator_total_loss(mpd_params, msd_params, y, y_hat)
    jax.block_until_ready(loss)
    assert loss.shape == () and bool(jnp.isfinite(loss))
    print("KERNEL_OK")
</pallas_src>

<mosaic_0001>
module attributes {stable_mosaic.version = 11 : i64} {
  func.func @_conv_pair_kernel(%arg0: i32, %arg1: memref<2x7x128xbf16, #tpu.memory_space<vmem>>, %arg2: memref<4x7xbf16, #tpu.memory_space<vmem>>, %arg3: memref<4x1xf32, #tpu.memory_space<vmem>>, %arg4: memref<2x4x128xf32, #tpu.memory_space<vmem>>, %arg5: memref<1x8x128xf32, #tpu.memory_space<vmem>>, %arg6: memref<1x8x128xf32, #tpu.memory_space<vmem>>) attributes {dimension_semantics = [#tpu.dimension_semantics<parallel>], iteration_bounds = array<i64: 1>, scalar_prefetch = 0 : i64, scratch_operands = 0 : i64, tpu.core_type = #tpu.core_type<tc>, window_params = [{transform_indices = @transform_0, window_bounds = array<i64: 2, 7, 128>}, {pipeline_mode = #tpu.pipeline_mode<synchronous>, transform_indices = @transform_1, window_bounds = array<i64: 4, 7>}, {pipeline_mode = #tpu.pipeline_mode<synchronous>, transform_indices = @transform_2, window_bounds = array<i64: 4, 1>}, {transform_indices = @transform_3, window_bounds = array<i64: 2, 4, 128>}, {transform_indices = @transform_4, window_bounds = array<i64: 1, 8, 128>}, {transform_indices = @transform_5, window_bounds = array<i64: 1, 8, 128>}]} {
    %c0 = arith.constant 0 : index
    %c0_0 = arith.constant 0 : index
    %0 = vector.load %arg2[%c0, %c0_0] : memref<4x7xbf16, #tpu.memory_space<vmem>>, vector<4x7xbf16>
    %c0_1 = arith.constant 0 : index
    %c0_2 = arith.constant 0 : index
    %1 = vector.load %arg3[%c0_1, %c0_2] : memref<4x1xf32, #tpu.memory_space<vmem>>, vector<4x1xf32>
    %c0_3 = arith.constant 0 : index
    %c0_4 = arith.constant 0 : index
    %c0_5 = arith.constant 0 : index
    %2 = vector.load %arg1[%c0_3, %c0_4, %c0_5] : memref<2x7x128xbf16, #tpu.memory_space<vmem>>, vector<1x7x128xbf16>
    %3 = vector.shape_cast %2 : vector<1x7x128xbf16> to vector<7x128xbf16>
    %cst = arith.constant dense<0.000000e+00> : vector<4x128xf32>
    %4 = tpu.matmul %0, %3, %cst {dimension_numbers = #tpu.dot_dimension_numbers<[1], [0], [0], [1], [0, 0, 1, 1], [], []>} : vector<4x7xbf16>, vector<7x128xbf16>, vector<4x128xf32> -> vector<4x128xf32>
    %5 = vector.broadcast %1 : vector<4x1xf32> to vector<4x128xf32>
    %6 = arith.addf %4, %5 : vector<4x128xf32>
    %cst_6 = arith.constant 0.000000e+00 : f32
    %7 = vector.broadcast %cst_6 : f32 to vector<4x128xf32>
    %8 = arith.cmpf ogt, %6, %7 : vector<4x128xf32>
    %cst_7 = arith.constant 1.000000e-01 : f32
    %9 = vector.broadcast %cst_7 : f32 to vector<4x128xf32>
    %10 = arith.mulf %6, %9 : vector<4x128xf32>
    %11 = arith.select %8, %6, %10 : vector<4x128xi1>, vector<4x128xf32>
    %c0_8 = arith.constant 0 : index
    %c0_9 = arith.constant 0 : index
    %c0_10 = arith.constant 0 : index
    %12 = vector.load %arg4[%c0_8, %c0_9, %c0_10] : memref<2x4x128xf32, #tpu.memory_space<vmem>>, vector<1x4x128xf32>
    %13 = vector.shape_cast %12 : vector<1x4x128xf32> to vector<4x128xf32>
    %14 = vector.shape_cast %11 : vector<4x128xf32> to vector<1x4x128xf32>
    tpu.vector_store %arg4[%c0_8, %c0_9, %c0_10], %14 {strides = array<i32>} : memref<2x4x128xf32, #tpu.memory_space<vmem>>, vector<1x4x128xf32>,
    %c1 = arith.constant 1 : index
    %c0_11 = arith.constant 0 : index
    %c0_12 = arith.constant 0 : index
    %15 = vector.load %arg1[%c1, %c0_11, %c0_12] : memref<2x7x128xbf16, #tpu.memory_space<vmem>>, vector<1x7x128xbf16>
    %16 = vector.shape_cast %15 : vector<1x7x128xbf16> to vector<7x128xbf16>
    %cst_13 = arith.constant dense<0.000000e+00> : vector<4x128xf32>
    %17 = tpu.matmul %0, %16, %cst_13 {dimension_numbers = #tpu.dot_dimension_numbers<[1], [0], [0], [1], [0, 0, 1, 1], [], []>} : vector<4x7xbf16>, vector<7x128xbf16>, vector<4x128xf32> -> vector<4x128xf32>
    %18 = vector.broadcast %1 : vector<4x1xf32> to vector<4x128xf32>
    %19 = arith.addf %17, %18 : vector<4x128xf32>
    %cst_14 = arith.constant 0.000000e+00 : f32
    %20 = vector.broadcast %cst_14 : f32 to vector<4x128xf32>
    %21 = arith.cmpf ogt, %19, %20 : vector<4x128xf32>
    %cst_15 = arith.constant 1.000000e-01 : f32
    %22 = vector.broadcast %cst_15 : f32 to vector<4x128xf32>
    %23 = arith.mulf %19, %22 : vector<4x128xf32>
    %24 = arith.select %21, %19, %23 : vector<4x128xi1>, vector<4x128xf32>
    %c1_16 = arith.constant 1 : index
    %c0_17 = arith.constant 0 : index
    %c0_18 = arith.constant 0 : index
    %25 = vector.load %arg4[%c1_16, %c0_17, %c0_18] : memref<2x4x128xf32, #tpu.memory_space<vmem>>, vector<1x4x128xf32>
    %26 = vector.shape_cast %25 : vector<1x4x128xf32> to vector<4x128xf32>
    %27 = vector.shape_cast %24 : vector<4x128xf32> to vector<1x4x128xf32>
    tpu.vector_store %arg4[%c1_16, %c0_17, %c0_18], %27 {strides = array<i32>} : memref<2x4x128xf32, #tpu.memory_space<vmem>>, vector<1x4x128xf32>,
    %28 = arith.subf %11, %24 : vector<4x128xf32>
    %29 = math.absf %28 : vector<4x128xf32>
    %30 = vector.shape_cast %29 : vector<4x128xf32> to vector<1x4x128xf32>
    %cst_19 = arith.constant dense<0.000000e+00> : vector<1xf32>
    %31 = vector.multi_reduction <add>, %30, %cst_19 [1, 2] : vector<1x4x128xf32> to vector<1xf32>
    %32 = vector.shape_cast %31 : vector<1xf32> to vector<1x1x1xf32>
    %33 = vector.extract %32[0, 0, 0] : f32 from vector<1x1x1xf32>
    %34 = tpu.iota {dimensions = array<i32: 1>} : vector<4x128xi32>
    %c128_i32 = arith.constant 128 : i32
    %35 = arith.muli %arg0, %c128_i32 : i32
    %36 = vector.broadcast %35 : i32 to vector<4x128xi32>
    %37 = arith.addi %34, %36 : vector<4x128xi32>
    %c50_i32 = arith.constant 50 : i32
    %38 = vector.broadcast %c50_i32 : i32 to vector<4x128xi32>
    %39 = arith.cmpi slt, %37, %38 : vector<4x128xi32>
    %40 = arith.extui %39 : vector<4x128xi1> to vector<4x128xi32>
    %41 = arith.sitofp %40 : vector<4x128xi32> to vector<4x128xf32>
    %cst_20 = arith.constant 1.000000e+00 : f32
    %42 = vector.broadcast %cst_20 : f32 to vector<4x128xf32>
    %43 = arith.subf %42, %24 : vector<4x128xf32>
    %44 = arith.mulf %43, %43 : vector<4x128xf32>
    %45 = arith.mulf %44, %41 : vector<4x128xf32>
    %46 = vector.shape_cast %45 : vector<4x128xf32> to vector<1x4x128xf32>
    %cst_21 = arith.constant dense<0.000000e+00> : vector<1xf32>
    %47 = vector.multi_reduction <add>, %46, %cst_21 [1, 2] : vector<1x4x128xf32> to vector<1xf32>
    %48 = vector.shape_cast %47 : vector<1xf32> to vector<1x1x1xf32>
    %49 = vector.extract %48[0, 0, 0] : f32 from vector<1x1x1xf32>
    %50 = vector.broadcast %33 : f32 to vector<1x8x128xf32>
    %c0_22 = arith.constant 0 : index
    %c0_23 = arith.constant 0 : index
    %c0_24 = arith.constant 0 : index
    %51 = vector.load %arg5[%c0_22, %c0_23, %c0_24] : memref<1x8x128xf32, #tpu.memory_space<vmem>>, vector<1x8x128xf32>
    tpu.vector_store %arg5[%c0_22, %c0_23, %c0_24], %50 {strides = array<i32>} : memref<1x8x128xf32, #tpu.memory_space<vmem>>, vector<1x8x128xf32>,
    %52 = vector.broadcast %49 : f32 to vector<1x8x128xf32>
    %c0_25 = arith.constant 0 : index
    %c0_26 = arith.constant 0 : index
    %c0_27 = arith.constant 0 : index
    %53 = vector.load %arg6[%c0_25, %c0_26, %c0_27] : memref<1x8x128xf32, #tpu.memory_space<vmem>>, vector<1x8x128xf32>
    tpu.vector_store %arg6[%c0_25, %c0_26, %c0_27], %52 {strides = array<i32>} : memref<1x8x128xf32, #tpu.memory_space<vmem>>, vector<1x8x128xf32>,
    return
  }
  func.func @transform_0(%arg0: i32) -> (i32, i32, i32) {
    %c0_i32 = arith.constant 0 : i32
    %c0_i32_0 = arith.constant 0 : i32
    %c0_i32_1 = arith.constant 0 : i32
    return %c0_i32, %c0_i32_0, %arg0 : i32, i32, i32
  }
  func.func @transform_1(%arg0: i32) -> (i32, i32) {
    %c0_i32 = arith.constant 0 : i32
    %c0_i32_0 = arith.constant 0 : i32
    %c0_i32_1 = arith.constant 0 : i32
    return %c0_i32, %c0_i32_0 : i32, i32
  }
  func.func @transform_2(%arg0: i32) -> (i32, i32) {
    %c0_i32 = arith.constant 0 : i32
    %c0_i32_0 = arith.constant 0 : i32
    %c0_i32_1 = arith.constant 0 : i32
    return %c0_i32, %c0_i32_0 : i32, i32
  }
  func.func @transform_3(%arg0: i32) -> (i32, i32, i32) {
    %c0_i32 = arith.constant 0 : i32
    %c0_i32_0 = arith.constant 0 : i32
    %c0_i32_1 = arith.constant 0 : i32
    return %c0_i32, %c0_i32_0, %arg0 : i32, i32, i32
  }
  func.func @transform_4(%arg0: i32) -> (i32, i32, i32) {
    %c0_i32 = arith.constant 0 : i32
    %c0_i32_0 = arith.constant 0 : i32
    %c0_i32_1 = arith.constant 0 : i32
    return %arg0, %c0_i32, %c0_i32_0 : i32, i32, i32
  }
  func.func @transform_5(%arg0: i32) -> (i32, i32, i32) {
    %c0_i32 = arith.constant 0 : i32
    %c0_i32_0 = arith.constant 0 : i32
    %c0_i32_1 = arith.constant 0 : i32
    return %arg0, %c0_i32, %c0_i32_0 : i32, i32, i32
  }
}

module attributes {stable_mosaic.version = 11 : i64} {
  func.func @_conv_pair_kernel(%arg0: i32, %arg1: memref<2x28x128xbf16, #tpu.memory_space<vmem>>, %arg2: memref<8x28xbf16, #tpu.memory_space<vmem>>, %arg3: memref<8x1xf32, #tpu.memory_space<vmem>>, %arg4: memref<2x8x128xf32, #tpu.memory_space<vmem>>, %arg5: memref<1x8x128xf32, #tpu.memory_space<vmem>>, %arg6: memref<1x8x128xf32, #tpu.memory_space<vmem>>) attributes {dimension_semantics = [#tpu.dimension_semantics<parallel>], iteration_bounds = array<i64: 1>, scalar_prefetch = 0 : i64, scratch_operands = 0 : i64, tpu.core_type = #tpu.core_type<tc>, window_params = [{transform_indices = @transform_0, window_bounds = array<i64: 2, 28, 128>}, {pipeline_mode = #tpu.pipeline_mode<synchronous>, transform_indices = @transform_1, window_bounds = array<i64: 8, 28>}, {pipeline_mode = #tpu.pipeline_mode<synchronous>, transform_indices = @transform_2, window_bounds = array<i64: 8, 1>}, {transform_indices = @transform_3, window_bounds = array<i64: 2, 8, 128>}, {transform_indices = @transform_4, window_bounds = array<i64: 1, 8, 128>}, {transform_indices = @transform_5, window_bounds = array<i64: 1, 8, 128>}]} {
    %c0 = arith.constant 0 : index
    %c0_0 = arith.constant 0 : index
    %0 = vector.load %arg2[%c0, %c0_0] : memref<8x28xbf16, #tpu.memory_space<vmem>>, vector<8x28xbf16>
    %c0_1 = arith.constant 0 : index
    %c0_2 = arith.constant 0 : index
    %1 = vector.load %arg3[%c0_1, %c0_2] : memref<8x1xf32, #tpu.memory_space<vmem>>, vector<8x1xf32>
    %c0_3 = arith.constant 0 : index
    %c0_4 = arith.constant 0 : index
    %c0_5 = arith.constant 0 : index
    %2 = vector.load %arg1[%c0_3, %c0_4, %c0_5] : memref<2x28x128xbf16, #tpu.memory_space<vmem>>, vector<1x28x128xbf16>
    %3 = vector.shape_cast %2 : vector<1x28x128xbf16> to vector<28x128xbf16>
    %cst = arith.constant dense<0.000000e+00> : vector<8x128xf32>
    %4 = tpu.matmul %0, %3, %cst {dimension_numbers = #tpu.dot_dimension_numbers<[1], [0], [0], [1], [0, 0, 1, 1], [], []>} : vector<8x28xbf16>, vector<28x128xbf16>, vector<8x128xf32> -> vector<8x128xf32>
    %5 = vector.broadcast %1 : vector<8x1xf32> to vector<8x128xf32>
    %6 = arith.addf %4, %5 : vector<8x128xf32>
    %cst_6 = arith.constant 0.000000e+00 : f32
    %7 = vector.broadcast %cst_6 : f32 to vector<8x128xf32>
    %8 = arith.cmpf ogt, %6, %7 : vector<8x128xf32>
    %cst_7 = arith.constant 1.000000e-01 : f32
    %9 = vector.broadcast %cst_7 : f32 to vector<8x128xf32>
    %10 = arith.mulf %6, %9 : vector<8x128xf32>
    %11 = arith.select %8, %6, %10 : vector<8x128xi1>, vector<8x128xf32>
    %c0_8 = arith.constant 0 : index
    %c0_9 = arith.constant 0 : index
    %c0_10 = arith.constant 0 : index
    %12 = vector.load %arg4[%c0_8, %c0_9, %c0_10] : memref<2x8x128xf32, #tpu.memory_space<vmem>>, vector<1x8x128xf32>
    %13 = vector.shape_cast %12 : vector<1x8x128xf32> to vector<8x128xf32>
    %14 = vector.shape_cast %11 : vector<8x128xf32> to vector<1x8x128xf32>
    tpu.vector_store %arg4[%c0_8, %c0_9, %c0_10], %14 {strides = array<i32>} : memref<2x8x128xf32, #tpu.memory_space<vmem>>, vector<1x8x128xf32>,
    %c1 = arith.constant 1 : index
    %c0_11 = arith.constant 0 : index
    %c0_12 = arith.constant 0 : index
    %15 = vector.load %arg1[%c1, %c0_11, %c0_12] : memref<2x28x128xbf16, #tpu.memory_space<vmem>>, vector<1x28x128xbf16>
    %16 = vector.shape_cast %15 : vector<1x28x128xbf16> to vector<28x128xbf16>
    %cst_13 = arith.constant dense<0.000000e+00> : vector<8x128xf32>
    %17 = tpu.matmul %0, %16, %cst_13 {dimension_numbers = #tpu.dot_dimension_numbers<[1], [0], [0], [1], [0, 0, 1, 1], [], []>} : vector<8x28xbf16>, vector<28x128xbf16>, vector<8x128xf32> -> vector<8x128xf32>
    %18 = vector.broadcast %1 : vector<8x1xf32> to vector<8x128xf32>
    %19 = arith.addf %17, %18 : vector<8x128xf32>
    %cst_14 = arith.constant 0.000000e+00 : f32
    %20 = vector.broadcast %cst_14 : f32 to vector<8x128xf32>
    %21 = arith.cmpf ogt, %19, %20 : vector<8x128xf32>
    %cst_15 = arith.constant 1.000000e-01 : f32
    %22 = vector.broadcast %cst_15 : f32 to vector<8x128xf32>
    %23 = arith.mulf %19, %22 : vector<8x128xf32>
    %24 = arith.select %21, %19, %23 : vector<8x128xi1>, vector<8x128xf32>
    %c1_16 = arith.constant 1 : index
    %c0_17 = arith.constant 0 : index
    %c0_18 = arith.constant 0 : index
    %25 = vector.load %arg4[%c1_16, %c0_17, %c0_18] : memref<2x8x128xf32, #tpu.memory_space<vmem>>, vector<1x8x128xf32>
    %26 = vector.shape_cast %25 : vector<1x8x128xf32> to vector<8x128xf32>
    %27 = vector.shape_cast %24 : vector<8x128xf32> to vector<1x8x128xf32>
    tpu.vector_store %arg4[%c1_16, %c0_17, %c0_18], %27 {strides = array<i32>} : memref<2x8x128xf32, #tpu.memory_space<vmem>>, vector<1x8x128xf32>,
    %28 = arith.subf %11, %24 : vector<8x128xf32>
    %29 = math.absf %28 : vector<8x128xf32>
    %30 = vector.shape_cast %29 : vector<8x128xf32> to vector<1x8x128xf32>
    %cst_19 = arith.constant dense<0.000000e+00> : vector<1xf32>
    %31 = vector.multi_reduction <add>, %30, %cst_19 [1, 2] : vector<1x8x128xf32> to vector<1xf32>
    %32 = vector.shape_cast %31 : vector<1xf32> to vector<1x1x1xf32>
    %33 = vector.extract %32[0, 0, 0] : f32 from vector<1x1x1xf32>
    %34 = tpu.iota {dimensions = array<i32: 1>} : vector<8x128xi32>
    %c128_i32 = arith.constant 128 : i32
    %35 = arith.muli %arg0, %c128_i32 : i32
    %36 = vector.broadcast %35 : i32 to vector<8x128xi32>
    %37 = arith.addi %34, %36 : vector<8x128xi32>
    %c26_i32 = arith.constant 26 : i32
    %38 = vector.broadcast %c26_i32 : i32 to vector<8x128xi32>
    %39 = arith.cmpi slt, %37, %38 : vector<8x128xi32>
    %40 = arith.extui %39 : vector<8x128xi1> to vector<8x128xi32>
    %41 = arith.sitofp %40 : vector<8x128xi32> to vector<8x128xf32>
    %cst_20 = arith.constant 1.000000e+00 : f32
    %42 = vector.broadcast %cst_20 : f32 to vector<8x128xf32>
    %43 = arith.subf %42, %24 : vector<8x128xf32>
    %44 = arith.mulf %43, %43 : vector<8x128xf32>
    %45 = arith.mulf %44, %41 : vector<8x128xf32>
    %46 = vector.shape_cast %45 : vector<8x128xf32> to vector<1x8x128xf32>
    %cst_21 = arith.constant dense<0.000000e+00> : vector<1xf32>
    %47 = vector.multi_reduction <add>, %46, %cst_21 [1, 2] : vector<1x8x128xf32> to vector<1xf32>
    %48 = vector.shape_cast %47 : vector<1xf32> to vector<1x1x1xf32>
    %49 = vector.extract %48[0, 0, 0] : f32 from vector<1x1x1xf32>
    %50 = vector.broadcast %33 : f32 to vector<1x8x128xf32>
    %c0_22 = arith.constant 0 : index
    %c0_23 = arith.constant 0 : index
    %c0_24 = arith.constant 0 : index
    %51 = vector.load %arg5[%c0_22, %c0_23, %c0_24] : memref<1x8x128xf32, #tpu.memory_space<vmem>>, vector<1x8x128xf32>
    tpu.vector_store %arg5[%c0_22, %c0_23, %c0_24], %50 {strides = array<i32>} : memref<1x8x128xf32, #tpu.memory_space<vmem>>, vector<1x8x128xf32>,
    %52 = vector.broadcast %49 : f32 to vector<1x8x128xf32>
    %c0_25 = arith.constant 0 : index
    %c0_26 = arith.constant 0 : index
    %c0_27 = arith.constant 0 : index
    %53 = vector.load %arg6[%c0_25, %c0_26, %c0_27] : memref<1x8x128xf32, #tpu.memory_space<vmem>>, vector<1x8x128xf32>
    tpu.vector_store %arg6[%c0_25, %c0_26, %c0_27], %52 {strides = array<i32>} : memref<1x8x128xf32, #tpu.memory_space<vmem>>, vector<1x8x128xf32>,
    return
  }
  func.func @transform_0(%arg0: i32) -> (i32, i32, i32) {
    %c0_i32 = arith.constant 0 : i32
    %c0_i32_0 = arith.constant 0 : i32
    %c0_i32_1 = arith.constant 0 : i32
    return %c0_i32, %c0_i32_0, %arg0 : i32, i32, i32
  }
  func.func @transform_1(%arg0: i32) -> (i32, i32) {
    %c0_i32 = arith.constant 0 : i32
    %c0_i32_0 = arith.constant 0 : i32
    %c0_i32_1 = arith.constant 0 : i32
    return %c0_i32, %c0_i32_0 : i32, i32
  }
  func.func @transform_2(%arg0: i32) -> (i32, i32) {
    %c0_i32 = arith.constant 0 : i32
    %c0_i32_0 = arith.constant 0 : i32
    %c0_i32_1 = arith.constant 0 : i32
    return %c0_i32, %c0_i32_0 : i32, i32
  }
  func.func @transform_3(%arg0: i32) -> (i32, i32, i32) {
    %c0_i32 = arith.constant 0 : i32
    %c0_i32_0 = arith.constant 0 : i32
    %c0_i32_1 = arith.constant 0 : i32
    return %c0_i32, %c0_i32_0, %arg0 : i32, i32, i32
  }
  func.func @transform_4(%arg0: i32) -> (i32, i32, i32) {
    %c0_i32 = arith.constant 0 : i32
    %c0_i32_0 = arith.constant 0 : i32
    %c0_i32_1 = arith.constant 0 : i32
    return %arg0, %c0_i32, %c0_i32_0 : i32, i32, i32
  }
  func.func @transform_5(%arg0: i32) -> (i32, i32, i32) {
    %c0_i32 = arith.constant 0 : i32
    %c0_i32_0 = arith.constant 0 : i32
    %c0_i32_1 = arith.constant 0 : i32
    return %arg0, %c0_i32, %c0_i32_0 : i32, i32, i32
  }
}

module attributes {stable_mosaic.version = 11 : i64} {
  func.func @_conv_pair_kernel(%arg0: i32, %arg1: memref<2x24x128xbf16, #tpu.memory_space<vmem>>, %arg2: memref<1x24xbf16, #tpu.memory_space<vmem>>, %arg3: memref<1x1xf32, #tpu.memory_space<vmem>>, %arg4: memref<2x1x128xf32, #tpu.memory_space<vmem>>, %arg5: memref<1x8x128xf32, #tpu.memory_space<vmem>>, %arg6: memref<1x8x128xf32, #tpu.memory_space<vmem>>) attributes {dimension_semantics = [#tpu.dimension_semantics<parallel>], iteration_bounds = array<i64: 1>, scalar_prefetch = 0 : i64, scratch_operands = 0 : i64, tpu.core_type = #tpu.core_type<tc>, window_params = [{transform_indices = @transform_0, window_bounds = array<i64: 2, 24, 128>}, {pipeline_mode = #tpu.pipeline_mode<synchronous>, transform_indices = @transform_1, window_bounds = array<i64: 1, 24>}, {pipeline_mode = #tpu.pipeline_mode<synchronous>, transform_indices = @transform_2, window_bounds = array<i64: 1, 1>}, {transform_indices = @transform_3, window_bounds = array<i64: 2, 1, 128>}, {transform_indices = @transform_4, window_bounds = array<i64: 1, 8, 128>}, {transform_indices = @transform_5, window_bounds = array<i64: 1, 8, 128>}]} {
    %c0 = arith.constant 0 : index
    %c0_0 = arith.constant 0 : index
    %0 = vector.load %arg2[%c0, %c0_0] : memref<1x24xbf16, #tpu.memory_space<vmem>>, vector<1x24xbf16>
    %c0_1 = arith.constant 0 : index
    %c0_2 = arith.constant 0 : index
    %1 = vector.load %arg3[%c0_1, %c0_2] : memref<1x1xf32, #tpu.memory_space<vmem>>, vector<1x1xf32>
    %c0_3 = arith.constant 0 : index
    %c0_4 = arith.constant 0 : index
    %c0_5 = arith.constant 0 : index
    %2 = vector.load %arg1[%c0_3, %c0_4, %c0_5] : memref<2x24x128xbf16, #tpu.memory_space<vmem>>, vector<1x24x128xbf16>
    %3 = vector.shape_cast %2 : vector<1x24x128xbf16> to vector<24x128xbf16>
    %cst = arith.constant dense<0.000000e+00> : vector<1x128xf32>
    %4 = tpu.matmul %0, %3, %cst {dimension_numbers = #tpu.dot_dimension_numbers<[1], [0], [0], [1], [0, 0, 1, 1], [], []>} : vector<1x24xbf16>, vector<24x128xbf16>, vector<1x128xf32> -> vector<1x128xf32>
    %5 = vector.broadcast %1 : vector<1x1xf32> to vector<1x128xf32>
    %6 = arith.addf %4, %5 : vector<1x128xf32>
    %c0_6 = arith.constant 0 : index
    %c0_7 = arith.constant 0 : index
    %c0_8 = arith.constant 0 : index
    %7 = vector.load %arg4[%c0_6, %c0_7, %c0_8] : memref<2x1x128xf32, #tpu.memory_space<vmem>>, vector<1x1x128xf32>
    %8 = vector.shape_cast %7 : vector<1x1x128xf32> to vector<1x128xf32>
    %9 = vector.shape_cast %6 : vector<1x128xf32> to vector<1x1x128xf32>
    tpu.vector_store %arg4[%c0_6, %c0_7, %c0_8], %9 {strides = array<i32>} : memref<2x1x128xf32, #tpu.memory_space<vmem>>, vector<1x1x128xf32>,
    %c1 = arith.constant 1 : index
    %c0_9 = arith.constant 0 : index
    %c0_10 = arith.constant 0 : index
    %10 = vector.load %arg1[%c1, %c0_9, %c0_10] : memref<2x24x128xbf16, #tpu.memory_space<vmem>>, vector<1x24x128xbf16>
    %11 = vector.shape_cast %10 : vector<1x24x128xbf16> to vector<24x128xbf16>
    %cst_11 = arith.constant dense<0.000000e+00> : vector<1x128xf32>
    %12 = tpu.matmul %0, %11, %cst_11 {dimension_numbers = #tpu.dot_dimension_numbers<[1], [0], [0], [1], [0, 0, 1, 1], [], []>} : vector<1x24xbf16>, vector<24x128xbf16>, vector<1x128xf32> -> vector<1x128xf32>
    %13 = vector.broadcast %1 : vector<1x1xf32> to vector<1x128xf32>
    %14 = arith.addf %12, %13 : vector<1x128xf32>
    %c1_12 = arith.constant 1 : index
    %c0_13 = arith.constant 0 : index
    %c0_14 = arith.constant 0 : index
    %15 = vector.load %arg4[%c1_12, %c0_13, %c0_14] : memref<2x1x128xf32, #tpu.memory_space<vmem>>, vector<1x1x128xf32>
    %16 = vector.shape_cast %15 : vector<1x1x128xf32> to vector<1x128xf32>
    %17 = vector.shape_cast %14 : vector<1x128xf32> to vector<1x1x128xf32>
    tpu.vector_store %arg4[%c1_12, %c0_13, %c0_14], %17 {strides = array<i32>} : memref<2x1x128xf32, #tpu.memory_space<vmem>>, vector<1x1x128xf32>,
    %18 = arith.subf %6, %14 : vector<1x128xf32>
    %19 = math.absf %18 : vector<1x128xf32>
    %20 = vector.shape_cast %19 : vector<1x128xf32> to vector<1x1x128xf32>
    %cst_15 = arith.constant dense<0.000000e+00> : vector<1xf32>
    %21 = vector.multi_reduction <add>, %20, %cst_15 [1, 2] : vector<1x1x128xf32> to vector<1xf32>
    %22 = vector.shape_cast %21 : vector<1xf32> to vector<1x1x1xf32>
    %23 = vector.extract %22[0, 0, 0] : f32 from vector<1x1x1xf32>
    %24 = tpu.iota {dimensions = array<i32: 1>} : vector<1x128xi32>
    %c128_i32 = arith.constant 128 : i32
    %25 = arith.muli %arg0, %c128_i32 : i32
    %26 = vector.broadcast %25 : i32 to vector<1x128xi32>
    %27 = arith.addi %24, %26 : vector<1x128xi32>
    %c26_i32 = arith.constant 26 : i32
    %28 = vector.broadcast %c26_i32 : i32 to vector<1x128xi32>
    %29 = arith.cmpi slt, %27, %28 : vector<1x128xi32>
    %30 = arith.extui %29 : vector<1x128xi1> to vector<1x128xi32>
    %31 = arith.sitofp %30 : vector<1x128xi32> to vector<1x128xf32>
    %cst_16 = arith.constant 1.000000e+00 : f32
    %32 = vector.broadcast %cst_16 : f32 to vector<1x128xf32>
    %33 = arith.subf %32, %14 : vector<1x128xf32>
    %34 = arith.mulf %33, %33 : vector<1x128xf32>
    %35 = arith.mulf %34, %31 : vector<1x128xf32>
    %36 = vector.shape_cast %35 : vector<1x128xf32> to vector<1x1x128xf32>
    %cst_17 = arith.constant dense<0.000000e+00> : vector<1xf32>
    %37 = vector.multi_reduction <add>, %36, %cst_17 [1, 2] : vector<1x1x128xf32> to vector<1xf32>
    %38 = vector.shape_cast %37 : vector<1xf32> to vector<1x1x1xf32>
    %39 = vector.extract %38[0, 0, 0] : f32 from vector<1x1x1xf32>
    %40 = vector.broadcast %23 : f32 to vector<1x8x128xf32>
    %c0_18 = arith.constant 0 : index
    %c0_19 = arith.constant 0 : index
    %c0_20 = arith.constant 0 : index
    %41 = vector.load %arg5[%c0_18, %c0_19, %c0_20] : memref<1x8x128xf32, #tpu.memory_space<vmem>>, vector<1x8x128xf32>
    tpu.vector_store %arg5[%c0_18, %c0_19, %c0_20], %40 {strides = array<i32>} : memref<1x8x128xf32, #tpu.memory_space<vmem>>, vector<1x8x128xf32>,
    %42 = vector.broadcast %39 : f32 to vector<1x8x128xf32>
    %c0_21 = arith.constant 0 : index
    %c0_22 = arith.constant 0 : index
    %c0_23 = arith.constant 0 : index
    %43 = vector.load %arg6[%c0_21, %c0_22, %c0_23] : memref<1x8x128xf32, #tpu.memory_space<vmem>>, vector<1x8x128xf32>
    tpu.vector_store %arg6[%c0_21, %c0_22, %c0_23], %42 {strides = array<i32>} : memref<1x8x128xf32, #tpu.memory_space<vmem>>, vector<1x8x128xf32>,
    return
  }
  func.func @transform_0(%arg0: i32) -> (i32, i32, i32) {
    %c0_i32 = arith.constant 0 : i32
    %c0_i32_0 = arith.constant 0 : i32
    %c0_i32_1 = arith.constant 0 : i32
    return %c0_i32, %c0_i32_0, %arg0 : i32, i32, i32
  }
  func.func @transform_1(%arg0: i32) -> (i32, i32) {
    %c0_i32 = arith.constant 0 : i32
    %c0_i32_0 = arith.constant 0 : i32
    %c0_i32_1 = arith.constant 0 : i32
    return %c0_i32, %c0_i32_0 : i32, i32
  }
  func.func @transform_2(%arg0: i32) -> (i32, i32) {
    %c0_i32 = arith.constant 0 : i32
    %c0_i32_0 = arith.constant 0 : i32
    %c0_i32_1 = arith.constant 0 : i32
    return %c0_i32, %c0_i32_0 : i32, i32
  }
  func.func @transform_3(%arg0: i32) -> (i32, i32, i32) {
    %c0_i32 = arith.constant 0 : i32
    %c0_i32_0 = arith.constant 0 : i32
    %c0_i32_1 = arith.constant 0 : i32
    return %c0_i32, %c0_i32_0, %arg0 : i32, i32, i32
  }
  func.func @transform_4(%arg0: i32) -> (i32, i32, i32) {
    %c0_i32 = arith.constant 0 : i32
    %c0_i32_0 = arith.constant 0 : i32
    %c0_i32_1 = arith.constant 0 : i32
    return %arg0, %c0_i32, %c0_i32_0 : i32, i32, i32
  }
  func.func @transform_5(%arg0: i32) -> (i32, i32, i32) {
    %c0_i32 = arith.constant 0 : i32
    %c0_i32_0 = arith.constant 0 : i32
    %c0_i32_1 = arith.constant 0 : i32
    return %arg0, %c0_i32, %c0_i32_0 : i32, i32, i32
  }
}

module attributes {stable_mosaic.version = 11 : i64} {
  func.func @_tprls_kernel(%arg0: i32, %arg1: memref<1x1xf32, #tpu.memory_space<vmem>>, %arg2: memref<8x128xf32, #tpu.memory_space<vmem>>, %arg3: memref<1x8x128xf32, #tpu.memory_space<vmem>>, %arg4: memref<1x8x128xf32, #tpu.memory_space<vmem>>) attributes {dimension_semantics = [#tpu.dimension_semantics<parallel>], iteration_bounds = array<i64: 1>, scalar_prefetch = 0 : i64, scratch_operands = 0 : i64, tpu.core_type = #tpu.core_type<tc>, window_params = [{pipeline_mode = #tpu.pipeline_mode<synchronous>, transform_indices = @transform_0, window_bounds = array<i64: 1, 1>}, {transform_indices = @transform_1, window_bounds = array<i64: 8, 128>}, {transform_indices = @transform_2, window_bounds = array<i64: 1, 8, 128>}, {transform_indices = @transform_3, window_bounds = array<i64: 1, 8, 128>}]} {
    %c0 = arith.constant 0 : index
    %c0_0 = arith.constant 0 : index
    %0 = vector.load %arg2[%c0, %c0_0] : memref<8x128xf32, #tpu.memory_space<vmem>>, vector<8x128xf32>
    %c0_1 = arith.constant 0 : index
    %c0_2 = arith.constant 0 : index
    %1 = vector.load %arg1[%c0_1, %c0_2] : memref<1x1xf32, #tpu.memory_space<vmem>>, vector<1x1xf32>
    %c8_i32 = arith.constant 8 : i32
    %2 = arith.muli %arg0, %c8_i32 : i32
    %c128_i32 = arith.constant 128 : i32
    %3 = arith.muli %2, %c128_i32 : i32
    %4 = tpu.iota {dimensions = array<i32: 0>} : vector<8x128xi32>
    %c128_i32_3 = arith.constant 128 : i32
    %5 = vector.broadcast %c128_i32_3 : i32 to vector<8x128xi32>
    %6 = arith.muli %4, %5 : vector<8x128xi32>
    %7 = vector.broadcast %3 : i32 to vector<8x128xi32>
    %8 = arith.addi %7, %6 : vector<8x128xi32>
    %9 = tpu.iota {dimensions = array<i32: 1>} : vector<8x128xi32>
    %10 = arith.addi %8, %9 : vector<8x128xi32>
    %11 = vector.broadcast %1 : vector<1x1xf32> to vector<8x128xf32>
    %12 = arith.cmpf olt, %0, %11 : vector<8x128xf32>
    %c26_i32 = arith.constant 26 : i32
    %13 = vector.broadcast %c26_i32 : i32 to vector<8x128xi32>
    %14 = arith.cmpi slt, %10, %13 : vector<8x128xi32>
    %15 = arith.andi %12, %14 : vector<8x128xi1>
    %16 = vector.broadcast %1 : vector<1x1xf32> to vector<8x128xf32>
    %17 = arith.subf %0, %16 : vector<8x128xf32>
    %18 = arith.mulf %17, %17 : vector<8x128xf32>
    %cst = arith.constant 0.000000e+00 : f32
    %19 = vector.broadcast %cst : f32 to vector<8x128xf32>
    %20 = arith.select %15, %18, %19 : vector<8x128xi1>, vector<8x128xf32>
    %21 = vector.shape_cast %20 : vector<8x128xf32> to vector<1x8x128xf32>
    %cst_4 = arith.constant dense<0.000000e+00> : vector<1xf32>
    %22 = vector.multi_reduction <add>, %21, %cst_4 [1, 2] : vector<1x8x128xf32> to vector<1xf32>
    %23 = vector.shape_cast %22 : vector<1xf32> to vector<1x1x1xf32>
    %24 = vector.extract %23[0, 0, 0] : f32 from vector<1x1x1xf32>
    %25 = arith.extui %15 : vector<8x128xi1> to vector<8x128xi32>
    %26 = arith.sitofp %25 : vector<8x128xi32> to vector<8x128xf32>
    %27 = vector.shape_cast %26 : vector<8x128xf32> to vector<1x8x128xf32>
    %cst_5 = arith.constant dense<0.000000e+00> : vector<1xf32>
    %28 = vector.multi_reduction <add>, %27, %cst_5 [1, 2] : vector<1x8x128xf32> to vector<1xf32>
    %29 = vector.shape_cast %28 : vector<1xf32> to vector<1x1x1xf32>
    %30 = vector.extract %29[0, 0, 0] : f32 from vector<1x1x1xf32>
    %31 = vector.broadcast %24 : f32 to vector<1x8x128xf32>
    %c0_6 = arith.constant 0 : index
    %c0_7 = arith.constant 0 : index
    %c0_8 = arith.constant 0 : index
    %32 = vector.load %arg3[%c0_6, %c0_7, %c0_8] : memref<1x8x128xf32, #tpu.memory_space<vmem>>, vector<1x8x128xf32>
    tpu.vector_store %arg3[%c0_6, %c0_7, %c0_8], %31 {strides = array<i32>} : memref<1x8x128xf32, #tpu.memory_space<vmem>>, vector<1x8x128xf32>,
    %33 = vector.broadcast %30 : f32 to vector<1x8x128xf32>
    %c0_9 = arith.constant 0 : index
    %c0_10 = arith.constant 0 : index
    %c0_11 = arith.constant 0 : index
    %34 = vector.load %arg4[%c0_9, %c0_10, %c0_11] : memref<1x8x128xf32, #tpu.memory_space<vmem>>, vector<1x8x128xf32>
    tpu.vector_store %arg4[%c0_9, %c0_10, %c0_11], %33 {strides = array<i32>} : memref<1x8x128xf32, #tpu.memory_space<vmem>>, vector<1x8x128xf32>,
    return
  }
  func.func @transform_0(%arg0: i32) -> (i32, i32) {
    %c0_i32 = arith.constant 0 : i32
    %c0_i32_0 = arith.constant 0 : i32
    %c0_i32_1 = arith.constant 0 : i32
    return %c0_i32, %c0_i32_0 : i32, i32
  }
  func.func @transform_1(%arg0: i32) -> (i32, i32) {
    %c0_i32 = arith.constant 0 : i32
    %c0_i32_0 = arith.constant 0 : i32
    return %arg0, %c0_i32 : i32, i32
  }
  func.func @transform_2(%arg0: i32) -> (i32, i32, i32) {
    %c0_i32 = arith.constant 0 : i32
    %c0_i32_0 = arith.constant 0 : i32
    %c0_i32_1 = arith.constant 0 : i32
    return %arg0, %c0_i32, %c0_i32_0 : i32, i32, i32
  }
  func.func @transform_3(%arg0: i32) -> (i32, i32, i32) {
    %c0_i32 = arith.constant 0 : i32
    %c0_i32_0 = arith.constant 0 : i32
    %c0_i32_1 = arith.constant 0 : i32
    return %arg0, %c0_i32, %c0_i32_0 : i32, i32, i32
  }
}

module attributes {stable_mosaic.version = 11 : i64} {
  func.func @_conv_pair_kernel(%arg0: i32, %arg1: memref<2x7x128xbf16, #tpu.memory_space<vmem>>, %arg2: memref<4x7xbf16, #tpu.memory_space<vmem>>, %arg3: memref<4x1xf32, #tpu.memory_space<vmem>>, %arg4: memref<2x4x128xf32, #tpu.memory_space<vmem>>, %arg5: memref<1x8x128xf32, #tpu.memory_space<vmem>>, %arg6: memref<1x8x128xf32, #tpu.memory_space<vmem>>) attributes {dimension_semantics = [#tpu.dimension_semantics<parallel>], iteration_bounds = array<i64: 1>, scalar_prefetch = 0 : i64, scratch_operands = 0 : i64, tpu.core_type = #tpu.core_type<tc>, window_params = [{transform_indices = @transform_0, window_bounds = array<i64: 2, 7, 128>}, {pipeline_mode = #tpu.pipeline_mode<synchronous>, transform_indices = @transform_1, window_bounds = array<i64: 4, 7>}, {pipeline_mode = #tpu.pipeline_mode<synchronous>, transform_indices = @transform_2, window_bounds = array<i64: 4, 1>}, {transform_indices = @transform_3, window_bounds = array<i64: 2, 4, 128>}, {transform_indices = @transform_4, window_bounds = array<i64: 1, 8, 128>}, {transform_indices = @transform_5, window_bounds = array<i64: 1, 8, 128>}]} {
    %c0 = arith.constant 0 : index
    %c0_0 = arith.constant 0 : index
    %0 = vector.load %arg2[%c0, %c0_0] : memref<4x7xbf16, #tpu.memory_space<vmem>>, vector<4x7xbf16>
    %c0_1 = arith.constant 0 : index
    %c0_2 = arith.constant 0 : index
    %1 = vector.load %arg3[%c0_1, %c0_2] : memref<4x1xf32, #tpu.memory_space<vmem>>, vector<4x1xf32>
    %c0_3 = arith.constant 0 : index
    %c0_4 = arith.constant 0 : index
    %c0_5 = arith.constant 0 : index
    %2 = vector.load %arg1[%c0_3, %c0_4, %c0_5] : memref<2x7x128xbf16, #tpu.memory_space<vmem>>, vector<1x7x128xbf16>
    %3 = vector.shape_cast %2 : vector<1x7x128xbf16> to vector<7x128xbf16>
    %cst = arith.constant dense<0.000000e+00> : vector<4x128xf32>
    %4 = tpu.matmul %0, %3, %cst {dimension_numbers = #tpu.dot_dimension_numbers<[1], [0], [0], [1], [0, 0, 1, 1], [], []>} : vector<4x7xbf16>, vector<7x128xbf16>, vector<4x128xf32> -> vector<4x128xf32>
    %5 = vector.broadcast %1 : vector<4x1xf32> to vector<4x128xf32>
    %6 = arith.addf %4, %5 : vector<4x128xf32>
    %cst_6 = arith.constant 0.000000e+00 : f32
    %7 = vector.broadcast %cst_6 : f32 to vector<4x128xf32>
    %8 = arith.cmpf ogt, %6, %7 : vector<4x128xf32>
    %cst_7 = arith.constant 1.000000e-01 : f32
    %9 = vector.broadcast %cst_7 : f32 to vector<4x128xf32>
    %10 = arith.mulf %6, %9 : vector<4x128xf32>
    %11 = arith.select %8, %6, %10 : vector<4x128xi1>, vector<4x128xf32>
    %c0_8 = arith.constant 0 : index
    %c0_9 = arith.constant 0 : index
    %c0_10 = arith.constant 0 : index
    %12 = vector.load %arg4[%c0_8, %c0_9, %c0_10] : memref<2x4x128xf32, #tpu.memory_space<vmem>>, vector<1x4x128xf32>
    %13 = vector.shape_cast %12 : vector<1x4x128xf32> to vector<4x128xf32>
    %14 = vector.shape_cast %11 : vector<4x128xf32> to vector<1x4x128xf32>
    tpu.vector_store %arg4[%c0_8, %c0_9, %c0_10], %14 {strides = array<i32>} : memref<2x4x128xf32, #tpu.memory_space<vmem>>, vector<1x4x128xf32>,
    %c1 = arith.constant 1 : index
    %c0_11 = arith.constant 0 : index
    %c0_12 = arith.constant 0 : index
    %15 = vector.load %arg1[%c1, %c0_11, %c0_12] : memref<2x7x128xbf16, #tpu.memory_space<vmem>>, vector<1x7x128xbf16>
    %16 = vector.shape_cast %15 : vector<1x7x128xbf16> to vector<7x128xbf16>
    %cst_13 = arith.constant dense<0.000000e+00> : vector<4x128xf32>
    %17 = tpu.matmul %0, %16, %cst_13 {dimension_numbers = #tpu.dot_dimension_numbers<[1], [0], [0], [1], [0, 0, 1, 1], [], []>} : vector<4x7xbf16>, vector<7x128xbf16>, vector<4x128xf32> -> vector<4x128xf32>
    %18 = vector.broadcast %1 : vector<4x1xf32> to vector<4x128xf32>
    %19 = arith.addf %17, %18 : vector<4x128xf32>
    %cst_14 = arith.constant 0.000000e+00 : f32
    %20 = vector.broadcast %cst_14 : f32 to vector<4x128xf32>
    %21 = arith.cmpf ogt, %19, %20 : vector<4x128xf32>
    %cst_15 = arith.constant 1.000000e-01 : f32
    %22 = vector.broadcast %cst_15 : f32 to vector<4x128xf32>
    %23 = arith.mulf %19, %22 : vector<4x128xf32>
    %24 = arith.select %21, %19, %23 : vector<4x128xi1>, vector<4x128xf32>
    %c1_16 = arith.constant 1 : index
    %c0_17 = arith.constant 0 : index
    %c0_18 = arith.constant 0 : index
    %25 = vector.load %arg4[%c1_16, %c0_17, %c0_18] : memref<2x4x128xf32, #tpu.memory_space<vmem>>, vector<1x4x128xf32>
    %26 = vector.shape_cast %25 : vector<1x4x128xf32> to vector<4x128xf32>
    %27 = vector.shape_cast %24 : vector<4x128xf32> to vector<1x4x128xf32>
    tpu.vector_store %arg4[%c1_16, %c0_17, %c0_18], %27 {strides = array<i32>} : memref<2x4x128xf32, #tpu.memory_space<vmem>>, vector<1x4x128xf32>,
    %28 = arith.subf %11, %24 : vector<4x128xf32>
    %29 = math.absf %28 : vector<4x128xf32>
    %30 = vector.shape_cast %29 : vector<4x128xf32> to vector<1x4x128xf32>
    %cst_19 = arith.constant dense<0.000000e+00> : vector<1xf32>
    %31 = vector.multi_reduction <add>, %30, %cst_19 [1, 2] : vector<1x4x128xf32> to vector<1xf32>
    %32 = vector.shape_cast %31 : vector<1xf32> to vector<1x1x1xf32>
    %33 = vector.extract %32[0, 0, 0] : f32 from vector<1x1x1xf32>
    %34 = tpu.iota {dimensions = array<i32: 1>} : vector<4x128xi32>
    %c128_i32 = arith.constant 128 : i32
    %35 = arith.muli %arg0, %c128_i32 : i32
    %36 = vector.broadcast %35 : i32 to vector<4x128xi32>
    %37 = arith.addi %34, %36 : vector<4x128xi32>
    %c96_i32 = arith.constant 96 : i32
    %38 = vector.broadcast %c96_i32 : i32 to vector<4x128xi32>
    %39 = arith.cmpi slt, %37, %38 : vector<4x128xi32>
    %40 = arith.extui %39 : vector<4x128xi1> to vector<4x128xi32>
    %41 = arith.sitofp %40 : vector<4x128xi32> to vector<4x128xf32>
    %cst_20 = arith.constant 1.000000e+00 : f32
    %42 = vector.broadcast %cst_20 : f32 to vector<4x128xf32>
    %43 = arith.subf %42, %24 : vector<4x128xf32>
    %44 = arith.mulf %43, %43 : vector<4x128xf32>
    %45 = arith.mulf %44, %41 : vector<4x128xf32>
    %46 = vector.shape_cast %45 : vector<4x128xf32> to vector<1x4x128xf32>
    %cst_21 = arith.constant dense<0.000000e+00> : vector<1xf32>
    %47 = vector.multi_reduction <add>, %46, %cst_21 [1, 2] : vector<1x4x128xf32> to vector<1xf32>
    %48 = vector.shape_cast %47 : vector<1xf32> to vector<1x1x1xf32>
    %49 = vector.extract %48[0, 0, 0] : f32 from vector<1x1x1xf32>
    %50 = vector.broadcast %33 : f32 to vector<1x8x128xf32>
    %c0_22 = arith.constant 0 : index
    %c0_23 = arith.constant 0 : index
    %c0_24 = arith.constant 0 : index
    %51 = vector.load %arg5[%c0_22, %c0_23, %c0_24] : memref<1x8x128xf32, #tpu.memory_space<vmem>>, vector<1x8x128xf32>
    tpu.vector_store %arg5[%c0_22, %c0_23, %c0_24], %50 {strides = array<i32>} : memref<1x8x128xf32, #tpu.memory_space<vmem>>, vector<1x8x128xf32>,
    %52 = vector.broadcast %49 : f32 to vector<1x8x128xf32>
    %c0_25 = arith.constant 0 : index
    %c0_26 = arith.constant 0 : index
    %c0_27 = arith.constant 0 : index
    %53 = vector.load %arg6[%c0_25, %c0_26, %c0_27] : memref<1x8x128xf32, #tpu.memory_space<vmem>>, vector<1x8x128xf32>
    tpu.vector_store %arg6[%c0_25, %c0_26, %c0_27], %52 {strides = array<i32>} : memref<1x8x128xf32, #tpu.memory_space<vmem>>, vector<1x8x128xf32>,
    return
  }
  func.func @transform_0(%arg0: i32) -> (i32, i32, i32) {
    %c0_i32 = arith.constant 0 : i32
    %c0_i32_0 = arith.constant 0 : i32
    %c0_i32_1 = arith.constant 0 : i32
    return %c0_i32, %c0_i32_0, %arg0 : i32, i32, i32
  }
  func.func @transform_1(%arg0: i32) -> (i32, i32) {
    %c0_i32 = arith.constant 0 : i32
    %c0_i32_0 = arith.constant 0 : i32
    %c0_i32_1 = arith.constant 0 : i32
    return %c0_i32, %c0_i32_0 : i32, i32
  }
  func.func @transform_2(%arg0: i32) -> (i32, i32) {
    %c0_i32 = arith.constant 0 : i32
    %c0_i32_0 = arith.constant 0 : i32
    %c0_i32_1 = arith.constant 0 : i32
    return %c0_i32, %c0_i32_0 : i32, i32
  }
  func.func @transform_3(%arg0: i32) -> (i32, i32, i32) {
    %c0_i32 = arith.constant 0 : i32
    %c0_i32_0 = arith.constant 0 : i32
    %c0_i32_1 = arith.constant 0 : i32
    return %c0_i32, %c0_i32_0, %arg0 : i32, i32, i32
  }
  func.func @transform_4(%arg0: i32) -> (i32, i32, i32) {
    %c0_i32 = arith.constant 0 : i32
    %c0_i32_0 = arith.constant 0 : i32
    %c0_i32_1 = arith.constant 0 : i32
    return %arg0, %c0_i32, %c0_i32_0 : i32, i32, i32
  }
  func.func @transform_5(%arg0: i32) -> (i32, i32, i32) {
    %c0_i32 = arith.constant 0 : i32
    %c0_i32_0 = arith.constant 0 : i32
    %c0_i32_1 = arith.constant 0 : i32
    return %arg0, %c0_i32, %c0_i32_0 : i32, i32, i32
  }
}

module attributes {stable_mosaic.version = 11 : i64} {
  func.func @_conv_pair_kernel(%arg0: i32, %arg1: memref<2x28x128xbf16, #tpu.memory_space<vmem>>, %arg2: memref<8x28xbf16, #tpu.memory_space<vmem>>, %arg3: memref<8x1xf32, #tpu.memory_space<vmem>>, %arg4: memref<2x8x128xf32, #tpu.memory_space<vmem>>, %arg5: memref<1x8x128xf32, #tpu.memory_space<vmem>>, %arg6: memref<1x8x128xf32, #tpu.memory_space<vmem>>) attributes {dimension_semantics = [#tpu.dimension_semantics<parallel>], iteration_bounds = array<i64: 1>, scalar_prefetch = 0 : i64, scratch_operands = 0 : i64, tpu.core_type = #tpu.core_type<tc>, window_params = [{transform_indices = @transform_0, window_bounds = array<i64: 2, 28, 128>}, {pipeline_mode = #tpu.pipeline_mode<synchronous>, transform_indices = @transform_1, window_bounds = array<i64: 8, 28>}, {pipeline_mode = #tpu.pipeline_mode<synchronous>, transform_indices = @transform_2, window_bounds = array<i64: 8, 1>}, {transform_indices = @transform_3, window_bounds = array<i64: 2, 8, 128>}, {transform_indices = @transform_4, window_bounds = array<i64: 1, 8, 128>}, {transform_indices = @transform_5, window_bounds = array<i64: 1, 8, 128>}]} {
    %c0 = arith.constant 0 : index
    %c0_0 = arith.constant 0 : index
    %0 = vector.load %arg2[%c0, %c0_0] : memref<8x28xbf16, #tpu.memory_space<vmem>>, vector<8x28xbf16>
    %c0_1 = arith.constant 0 : index
    %c0_2 = arith.constant 0 : index
    %1 = vector.load %arg3[%c0_1, %c0_2] : memref<8x1xf32, #tpu.memory_space<vmem>>, vector<8x1xf32>
    %c0_3 = arith.constant 0 : index
    %c0_4 = arith.constant 0 : index
    %c0_5 = arith.constant 0 : index
    %2 = vector.load %arg1[%c0_3, %c0_4, %c0_5] : memref<2x28x128xbf16, #tpu.memory_space<vmem>>, vector<1x28x128xbf16>
    %3 = vector.shape_cast %2 : vector<1x28x128xbf16> to vector<28x128xbf16>
    %cst = arith.constant dense<0.000000e+00> : vector<8x128xf32>
    %4 = tpu.matmul %0, %3, %cst {dimension_numbers = #tpu.dot_dimension_numbers<[1], [0], [0], [1], [0, 0, 1, 1], [], []>} : vector<8x28xbf16>, vector<28x128xbf16>, vector<8x128xf32> -> vector<8x128xf32>
    %5 = vector.broadcast %1 : vector<8x1xf32> to vector<8x128xf32>
    %6 = arith.addf %4, %5 : vector<8x128xf32>
    %cst_6 = arith.constant 0.000000e+00 : f32
    %7 = vector.broadcast %cst_6 : f32 to vector<8x128xf32>
    %8 = arith.cmpf ogt, %6, %7 : vector<8x128xf32>
    %cst_7 = arith.constant 1.000000e-01 : f32
    %9 = vector.broadcast %cst_7 : f32 to vector<8x128xf32>
    %10 = arith.mulf %6, %9 : vector<8x128xf32>
    %11 = arith.select %8, %6, %10 : vector<8x128xi1>, vector<8x128xf32>
    %c0_8 = arith.constant 0 : index
    %c0_9 = arith.constant 0 : index
    %c0_10 = arith.constant 0 : index
    %12 = vector.load %arg4[%c0_8, %c0_9, %c0_10] : memref<2x8x128xf32, #tpu.memory_space<vmem>>, vector<1x8x128xf32>
    %13 = vector.shape_cast %12 : vector<1x8x128xf32> to vector<8x128xf32>
    %14 = vector.shape_cast %11 : vector<8x128xf32> to vector<1x8x128xf32>
    tpu.vector_store %arg4[%c0_8, %c0_9, %c0_10], %14 {strides = array<i32>} : memref<2x8x128xf32, #tpu.memory_space<vmem>>, vector<1x8x128xf32>,
    %c1 = arith.constant 1 : index
    %c0_11 = arith.constant 0 : index
    %c0_12 = arith.constant 0 : index
    %15 = vector.load %arg1[%c1, %c0_11, %c0_12] : memref<2x28x128xbf16, #tpu.memory_space<vmem>>, vector<1x28x128xbf16>
    %16 = vector.shape_cast %15 : vector<1x28x128xbf16> to vector<28x128xbf16>
    %cst_13 = arith.constant dense<0.000000e+00> : vector<8x128xf32>
    %17 = tpu.matmul %0, %16, %cst_13 {dimension_numbers = #tpu.dot_dimension_numbers<[1], [0], [0], [1], [0, 0, 1, 1], [], []>} : vector<8x28xbf16>, vector<28x128xbf16>, vector<8x128xf32> -> vector<8x128xf32>
    %18 = vector.broadcast %1 : vector<8x1xf32> to vector<8x128xf32>
    %19 = arith.addf %17, %18 : vector<8x128xf32>
    %cst_14 = arith.constant 0.000000e+00 : f32
    %20 = vector.broadcast %cst_14 : f32 to vector<8x128xf32>
    %21 = arith.cmpf ogt, %19, %20 : vector<8x128xf32>
    %cst_15 = arith.constant 1.000000e-01 : f32
    %22 = vector.broadcast %cst_15 : f32 to vector<8x128xf32>
    %23 = arith.mulf %19, %22 : vector<8x128xf32>
    %24 = arith.select %21, %19, %23 : vector<8x128xi1>, vector<8x128xf32>
    %c1_16 = arith.constant 1 : index
    %c0_17 = arith.constant 0 : index
    %c0_18 = arith.constant 0 : index
    %25 = vector.load %arg4[%c1_16, %c0_17, %c0_18] : memref<2x8x128xf32, #tpu.memory_space<vmem>>, vector<1x8x128xf32>
    %26 = vector.shape_cast %25 : vector<1x8x128xf32> to vector<8x128xf32>
    %27 = vector.shape_cast %24 : vector<8x128xf32> to vector<1x8x128xf32>
    tpu.vector_store %arg4[%c1_16, %c0_17, %c0_18], %27 {strides = array<i32>} : memref<2x8x128xf32, #tpu.memory_space<vmem>>, vector<1x8x128xf32>,
    %28 = arith.subf %11, %24 : vector<8x128xf32>
    %29 = math.absf %28 : vector<8x128xf32>
    %30 = vector.shape_cast %29 : vector<8x128xf32> to vector<1x8x128xf32>
    %cst_19 = arith.constant dense<0.000000e+00> : vector<1xf32>
    %31 = vector.multi_reduction <add>, %30, %cst_19 [1, 2] : vector<1x8x128xf32> to vector<1xf32>
    %32 = vector.shape_cast %31 : vector<1xf32> to vector<1x1x1xf32>
    %33 = vector.extract %32[0, 0, 0] : f32 from vector<1x1x1xf32>
    %34 = tpu.iota {dimensions = array<i32: 1>} : vector<8x128xi32>
    %c128_i32 = arith.constant 128 : i32
    %35 = arith.muli %arg0, %c128_i32 : i32
    %36 = vector.broadcast %35 : i32 to vector<8x128xi32>
    %37 = arith.addi %34, %36 : vector<8x128xi32>
    %c48_i32 = arith.constant 48 : i32
    %38 = vector.broadcast %c48_i32 : i32 to vector<8x128xi32>
    %39 = arith.cmpi slt, %37, %38 : vector<8x128xi32>
    %40 = arith.extui %39 : vector<8x128xi1> to vector<8x128xi32>
    %41 = arith.sitofp %40 : vector<8x128xi32> to vector<8x128xf32>
    %cst_20 = arith.constant 1.000000e+00 : f32
    %42 = vector.broadcast %cst_20 : f32 to vector<8x128xf32>
    %43 = arith.subf %42, %24 : vector<8x128xf32>
    %44 = arith.mulf %43, %43 : vector<8x128xf32>
    %45 = arith.mulf %44, %41 : vector<8x128xf32>
    %46 = vector.shape_cast %45 : vector<8x128xf32> to vector<1x8x128xf32>
    %cst_21 = arith.constant dense<0.000000e+00> : vector<1xf32>
    %47 = vector.multi_reduction <add>, %46, %cst_21 [1, 2] : vector<1x8x128xf32> to vector<1xf32>
    %48 = vector.shape_cast %47 : vector<1xf32> to vector<1x1x1xf32>
    %49 = vector.extract %48[0, 0, 0] : f32 from vector<1x1x1xf32>
    %50 = vector.broadcast %33 : f32 to vector<1x8x128xf32>
    %c0_22 = arith.constant 0 : index
    %c0_23 = arith.constant 0 : index
    %c0_24 = arith.constant 0 : index
    %51 = vector.load %arg5[%c0_22, %c0_23, %c0_24] : memref<1x8x128xf32, #tpu.memory_space<vmem>>, vector<1x8x128xf32>
    tpu.vector_store %arg5[%c0_22, %c0_23, %c0_24], %50 {strides = array<i32>} : memref<1x8x128xf32, #tpu.memory_space<vmem>>, vector<1x8x128xf32>,
    %52 = vector.broadcast %49 : f32 to vector<1x8x128xf32>
    %c0_25 = arith.constant 0 : index
    %c0_26 = arith.constant 0 : index
    %c0_27 = arith.constant 0 : index
    %53 = vector.load %arg6[%c0_25, %c0_26, %c0_27] : memref<1x8x128xf32, #tpu.memory_space<vmem>>, vector<1x8x128xf32>
    tpu.vector_store %arg6[%c0_25, %c0_26, %c0_27], %52 {strides = array<i32>} : memref<1x8x128xf32, #tpu.memory_space<vmem>>, vector<1x8x128xf32>,
    return
  }
  func.func @transform_0(%arg0: i32) -> (i32, i32, i32) {
    %c0_i32 = arith.constant 0 : i32
    %c0_i32_0 = arith.constant 0 : i32
    %c0_i32_1 = arith.constant 0 : i32
    return %c0_i32, %c0_i32_0, %arg0 : i32, i32, i32
  }
  func.func @transform_1(%arg0: i32) -> (i32, i32) {
    %c0_i32 = arith.constant 0 : i32
    %c0_i32_0 = arith.constant 0 : i32
    %c0_i32_1 = arith.constant 0 : i32
    return %c0_i32, %c0_i32_0 : i32, i32
  }
  func.func @transform_2(%arg0: i32) -> (i32, i32) {
    %c0_i32 = arith.constant 0 : i32
    %c0_i32_0 = arith.constant 0 : i32
    %c0_i32_1 = arith.constant 0 : i32
    return %c0_i32, %c0_i32_0 : i32, i32
  }
  func.func @transform_3(%arg0: i32) -> (i32, i32, i32) {
    %c0_i32 = arith.constant 0 : i32
    %c0_i32_0 = arith.constant 0 : i32
    %c0_i32_1 = arith.constant 0 : i32
    return %c0_i32, %c0_i32_0, %arg0 : i32, i32, i32
  }
  func.func @transform_4(%arg0: i32) -> (i32, i32, i32) {
    %c0_i32 = arith.constant 0 : i32
    %c0_i32_0 = arith.constant 0 : i32
    %c0_i32_1 = arith.constant 0 : i32
    return %arg0, %c0_i32, %c0_i32_0 : i32, i32, i32
  }
  func.func @transform_5(%arg0: i32) -> (i32, i32, i32) {
    %c0_i32 = arith.constant 0 : i32
    %c0_i32_0 = arith.constant 0 : i32
    %c0_i32_1 = arith.constant 0 : i32
    return %arg0, %c0_i32, %c0_i32_0 : i32, i32, i32
  }
}

module attributes {stable_mosaic.version = 11 : i64} {
  func.func @_conv_pair_kernel(%arg0: i32, %arg1: memref<2x24x128xbf16, #tpu.memory_space<vmem>>, %arg2: memref<1x24xbf16, #tpu.memory_space<vmem>>, %arg3: memref<1x1xf32, #tpu.memory_space<vmem>>, %arg4: memref<2x1x128xf32, #tpu.memory_space<vmem>>, %arg5: memref<1x8x128xf32, #tpu.memory_space<vmem>>, %arg6: memref<1x8x128xf32, #tpu.memory_space<vmem>>) attributes {dimension_semantics = [#tpu.dimension_semantics<parallel>], iteration_bounds = array<i64: 1>, scalar_prefetch = 0 : i64, scratch_operands = 0 : i64, tpu.core_type = #tpu.core_type<tc>, window_params = [{transform_indices = @transform_0, window_bounds = array<i64: 2, 24, 128>}, {pipeline_mode = #tpu.pipeline_mode<synchronous>, transform_indices = @transform_1, window_bounds = array<i64: 1, 24>}, {pipeline_mode = #tpu.pipeline_mode<synchronous>, transform_indices = @transform_2, window_bounds = array<i64: 1, 1>}, {transform_indices = @transform_3, window_bounds = array<i64: 2, 1, 128>}, {transform_indices = @transform_4, window_bounds = array<i64: 1, 8, 128>}, {transform_indices = @transform_5, window_bounds = array<i64: 1, 8, 128>}]} {
    %c0 = arith.constant 0 : index
    %c0_0 = arith.constant 0 : index
    %0 = vector.load %arg2[%c0, %c0_0] : memref<1x24xbf16, #tpu.memory_space<vmem>>, vector<1x24xbf16>
    %c0_1 = arith.constant 0 : index
    %c0_2 = arith.constant 0 : index
    %1 = vector.load %arg3[%c0_1, %c0_2] : memref<1x1xf32, #tpu.memory_space<vmem>>, vector<1x1xf32>
    %c0_3 = arith.constant 0 : index
    %c0_4 = arith.constant 0 : index
    %c0_5 = arith.constant 0 : index
    %2 = vector.load %arg1[%c0_3, %c0_4, %c0_5] : memref<2x24x128xbf16, #tpu.memory_space<vmem>>, vector<1x24x128xbf16>
    %3 = vector.shape_cast %2 : vector<1x24x128xbf16> to vector<24x128xbf16>
    %cst = arith.constant dense<0.000000e+00> : vector<1x128xf32>
    %4 = tpu.matmul %0, %3, %cst {dimension_numbers = #tpu.dot_dimension_numbers<[1], [0], [0], [1], [0, 0, 1, 1], [], []>} : vector<1x24xbf16>, vector<24x128xbf16>, vector<1x128xf32> -> vector<1x128xf32>
    %5 = vector.broadcast %1 : vector<1x1xf32> to vector<1x128xf32>
    %6 = arith.addf %4, %5 : vector<1x128xf32>
    %c0_6 = arith.constant 0 : index
    %c0_7 = arith.constant 0 : index
    %c0_8 = arith.constant 0 : index
    %7 = vector.load %arg4[%c0_6, %c0_7, %c0_8] : memref<2x1x128xf32, #tpu.memory_space<vmem>>, vector<1x1x128xf32>
    %8 = vector.shape_cast %7 : vector<1x1x128xf32> to vector<1x128xf32>
    %9 = vector.shape_cast %6 : vector<1x128xf32> to vector<1x1x128xf32>
    tpu.vector_store %arg4[%c0_6, %c0_7, %c0_8], %9 {strides = array<i32>} : memref<2x1x128xf32, #tpu.memory_space<vmem>>, vector<1x1x128xf32>,
    %c1 = arith.constant 1 : index
    %c0_9 = arith.constant 0 : index
    %c0_10 = arith.constant 0 : index
    %10 = vector.load %arg1[%c1, %c0_9, %c0_10] : memref<2x24x128xbf16, #tpu.memory_space<vmem>>, vector<1x24x128xbf16>
    %11 = vector.shape_cast %10 : vector<1x24x128xbf16> to vector<24x128xbf16>
    %cst_11 = arith.constant dense<0.000000e+00> : vector<1x128xf32>
    %12 = tpu.matmul %0, %11, %cst_11 {dimension_numbers = #tpu.dot_dimension_numbers<[1], [0], [0], [1], [0, 0, 1, 1], [], []>} : vector<1x24xbf16>, vector<24x128xbf16>, vector<1x128xf32> -> vector<1x128xf32>
    %13 = vector.broadcast %1 : vector<1x1xf32> to vector<1x128xf32>
    %14 = arith.addf %12, %13 : vector<1x128xf32>
    %c1_12 = arith.constant 1 : index
    %c0_13 = arith.constant 0 : index
    %c0_14 = arith.constant 0 : index
    %15 = vector.load %arg4[%c1_12, %c0_13, %c0_14] : memref<2x1x128xf32, #tpu.memory_space<vmem>>, vector<1x1x128xf32>
    %16 = vector.shape_cast %15 : vector<1x1x128xf32> to vector<1x128xf32>
    %17 = vector.shape_cast %14 : vector<1x128xf32> to vector<1x1x128xf32>
    tpu.vector_store %arg4[%c1_12, %c0_13, %c0_14], %17 {strides = array<i32>} : memref<2x1x128xf32, #tpu.memory_space<vmem>>, vector<1x1x128xf32>,
    %18 = arith.subf %6, %14 : vector<1x128xf32>
    %19 = math.absf %18 : vector<1x128xf32>
    %20 = vector.shape_cast %19 : vector<1x128xf32> to vector<1x1x128xf32>
    %cst_15 = arith.constant dense<0.000000e+00> : vector<1xf32>
    %21 = vector.multi_reduction <add>, %20, %cst_15 [1, 2] : vector<1x1x128xf32> to vector<1xf32>
    %22 = vector.shape_cast %21 : vector<1xf32> to vector<1x1x1xf32>
    %23 = vector.extract %22[0, 0, 0] : f32 from vector<1x1x1xf32>
    %24 = tpu.iota {dimensions = array<i32: 1>} : vector<1x128xi32>
    %c128_i32 = arith.constant 128 : i32
    %25 = arith.muli %arg0, %c128_i32 : i32
    %26 = vector.broadcast %25 : i32 to vector<1x128xi32>
    %27 = arith.addi %24, %26 : vector<1x128xi32>
    %c48_i32 = arith.constant 48 : i32
    %28 = vector.broadcast %c48_i32 : i32 to vector<1x128xi32>
    %29 = arith.cmpi slt, %27, %28 : vector<1x128xi32>
    %30 = arith.extui %29 : vector<1x128xi1> to vector<1x128xi32>
    %31 = arith.sitofp %30 : vector<1x128xi32> to vector<1x128xf32>
    %cst_16 = arith.constant 1.000000e+00 : f32
    %32 = vector.broadcast %cst_16 : f32 to vector<1x128xf32>
    %33 = arith.subf %32, %14 : vector<1x128xf32>
    %34 = arith.mulf %33, %33 : vector<1x128xf32>
    %35 = arith.mulf %34, %31 : vector<1x128xf32>
    %36 = vector.shape_cast %35 : vector<1x128xf32> to vector<1x1x128xf32>
    %cst_17 = arith.constant dense<0.000000e+00> : vector<1xf32>
    %37 = vector.multi_reduction <add>, %36, %cst_17 [1, 2] : vector<1x1x128xf32> to vector<1xf32>
    %38 = vector.shape_cast %37 : vector<1xf32> to vector<1x1x1xf32>
    %39 = vector.extract %38[0, 0, 0] : f32 from vector<1x1x1xf32>
    %40 = vector.broadcast %23 : f32 to vector<1x8x128xf32>
    %c0_18 = arith.constant 0 : index
    %c0_19 = arith.constant 0 : index
    %c0_20 = arith.constant 0 : index
    %41 = vector.load %arg5[%c0_18, %c0_19, %c0_20] : memref<1x8x128xf32, #tpu.memory_space<vmem>>, vector<1x8x128xf32>
    tpu.vector_store %arg5[%c0_18, %c0_19, %c0_20], %40 {strides = array<i32>} : memref<1x8x128xf32, #tpu.memory_space<vmem>>, vector<1x8x128xf32>,
    %42 = vector.broadcast %39 : f32 to vector<1x8x128xf32>
    %c0_21 = arith.constant 0 : index
    %c0_22 = arith.constant 0 : index
    %c0_23 = arith.constant 0 : index
    %43 = vector.load %arg6[%c0_21, %c0_22, %c0_23] : memref<1x8x128xf32, #tpu.memory_space<vmem>>, vector<1x8x128xf32>
    tpu.vector_store %arg6[%c0_21, %c0_22, %c0_23], %42 {strides = array<i32>} : memref<1x8x128xf32, #tpu.memory_space<vmem>>, vector<1x8x128xf32>,
    return
  }
  func.func @transform_0(%arg0: i32) -> (i32, i32, i32) {
    %c0_i32 = arith.constant 0 : i32
    %c0_i32_0 = arith.constant 0 : i32
    %c0_i32_1 = arith.constant 0 : i32
    return %c0_i32, %c0_i32_0, %arg0 : i32, i32, i32
  }
  func.func @transform_1(%arg0: i32) -> (i32, i32) {
    %c0_i32 = arith.constant 0 : i32
    %c0_i32_0 = arith.constant 0 : i32
    %c0_i32_1 = arith.constant 0 : i32
    return %c0_i32, %c0_i32_0 : i32, i32
  }
  func.func @transform_2(%arg0: i32) -> (i32, i32) {
    %c0_i32 = arith.constant 0 : i32
    %c0_i32_0 = arith.constant 0 : i32
    %c0_i32_1 = arith.constant 0 : i32
    return %c0_i32, %c0_i32_0 : i32, i32
  }
  func.func @transform_3(%arg0: i32) -> (i32, i32, i32) {
    %c0_i32 = arith.constant 0 : i32
    %c0_i32_0 = arith.constant 0 : i32
    %c0_i32_1 = arith.constant 0 : i32
    return %c0_i32, %c0_i32_0, %arg0 : i32, i32, i32
  }
  func.func @transform_4(%arg0: i32) -> (i32, i32, i32) {
    %c0_i32 = arith.constant 0 : i32
    %c0_i32_0 = arith.constant 0 : i32
    %c0_i32_1 = arith.constant 0 : i32
    return %arg0, %c0_i32, %c0_i32_0 : i32, i32, i32
  }
  func.func @transform_5(%arg0: i32) -> (i32, i32, i32) {
    %c0_i32 = arith.constant 0 : i32
    %c0_i32_0 = arith.constant 0 : i32
    %c0_i32_1 = arith.constant 0 : i32
    return %arg0, %c0_i32, %c0_i32_0 : i32, i32, i32
  }
}

module attributes {stable_mosaic.version = 11 : i64} {
  func.func @_tprls_kernel(%arg0: i32, %arg1: memref<1x1xf32, #tpu.memory_space<vmem>>, %arg2: memref<8x128xf32, #tpu.memory_space<vmem>>, %arg3: memref<1x8x128xf32, #tpu.memory_space<vmem>>, %arg4: memref<1x8x128xf32, #tpu.memory_space<vmem>>) attributes {dimension_semantics = [#tpu.dimension_semantics<parallel>], iteration_bounds = array<i64: 1>, scalar_prefetch = 0 : i64, scratch_operands = 0 : i64, tpu.core_type = #tpu.core_type<tc>, window_params = [{pipeline_mode = #tpu.pipeline_mode<synchronous>, transform_indices = @transform_0, window_bounds = array<i64: 1, 1>}, {transform_indices = @transform_1, window_bounds = array<i64: 8, 128>}, {transform_indices = @transform_2, window_bounds = array<i64: 1, 8, 128>}, {transform_indices = @transform_3, window_bounds = array<i64: 1, 8, 128>}]} {
    %c0 = arith.constant 0 : index
    %c0_0 = arith.constant 0 : index
    %0 = vector.load %arg2[%c0, %c0_0] : memref<8x128xf32, #tpu.memory_space<vmem>>, vector<8x128xf32>
    %c0_1 = arith.constant 0 : index
    %c0_2 = arith.constant 0 : index
    %1 = vector.load %arg1[%c0_1, %c0_2] : memref<1x1xf32, #tpu.memory_space<vmem>>, vector<1x1xf32>
    %c8_i32 = arith.constant 8 : i32
    %2 = arith.muli %arg0, %c8_i32 : i32
    %c128_i32 = arith.constant 128 : i32
    %3 = arith.muli %2, %c128_i32 : i32
    %4 = tpu.iota {dimensions = array<i32: 0>} : vector<8x128xi32>
    %c128_i32_3 = arith.constant 128 : i32
    %5 = vector.broadcast %c128_i32_3 : i32 to vector<8x128xi32>
    %6 = arith.muli %4, %5 : vector<8x128xi32>
    %7 = vector.broadcast %3 : i32 to vector<8x128xi32>
    %8 = arith.addi %7, %6 : vector<8x128xi32>
    %9 = tpu.iota {dimensions = array<i32: 1>} : vector<8x128xi32>
    %10 = arith.addi %8, %9 : vector<8x128xi32>
    %11 = vector.broadcast %1 : vector<1x1xf32> to vector<8x128xf32>
    %12 = arith.cmpf olt, %0, %11 : vector<8x128xf32>
    %c48_i32 = arith.constant 48 : i32
    %13 = vector.broadcast %c48_i32 : i32 to vector<8x128xi32>
    %14 = arith.cmpi slt, %10, %13 : vector<8x128xi32>
    %15 = arith.andi %12, %14 : vector<8x128xi1>
    %16 = vector.broadcast %1 : vector<1x1xf32> to vector<8x128xf32>
    %17 = arith.subf %0, %16 : vector<8x128xf32>
    %18 = arith.mulf %17, %17 : vector<8x128xf32>
    %cst = arith.constant 0.000000e+00 : f32
    %19 = vector.broadcast %cst : f32 to vector<8x128xf32>
    %20 = arith.select %15, %18, %19 : vector<8x128xi1>, vector<8x128xf32>
    %21 = vector.shape_cast %20 : vector<8x128xf32> to vector<1x8x128xf32>
    %cst_4 = arith.constant dense<0.000000e+00> : vector<1xf32>
    %22 = vector.multi_reduction <add>, %21, %cst_4 [1, 2] : vector<1x8x128xf32> to vector<1xf32>
    %23 = vector.shape_cast %22 : vector<1xf32> to vector<1x1x1xf32>
    %24 = vector.extract %23[0, 0, 0] : f32 from vector<1x1x1xf32>
    %25 = arith.extui %15 : vector<8x128xi1> to vector<8x128xi32>
    %26 = arith.sitofp %25 : vector<8x128xi32> to vector<8x128xf32>
    %27 = vector.shape_cast %26 : vector<8x128xf32> to vector<1x8x128xf32>
    %cst_5 = arith.constant dense<0.000000e+00> : vector<1xf32>
    %28 = vector.multi_reduction <add>, %27, %cst_5 [1, 2] : vector<1x8x128xf32> to vector<1xf32>
    %29 = vector.shape_cast %28 : vector<1xf32> to vector<1x1x1xf32>
    %30 = vector.extract %29[0, 0, 0] : f32 from vector<1x1x1xf32>
    %31 = vector.broadcast %24 : f32 to vector<1x8x128xf32>
    %c0_6 = arith.constant 0 : index
    %c0_7 = arith.constant 0 : index
    %c0_8 = arith.constant 0 : index
    %32 = vector.load %arg3[%c0_6, %c0_7, %c0_8] : memref<1x8x128xf32, #tpu.memory_space<vmem>>, vector<1x8x128xf32>
    tpu.vector_store %arg3[%c0_6, %c0_7, %c0_8], %31 {strides = array<i32>} : memref<1x8x128xf32, #tpu.memory_space<vmem>>, vector<1x8x128xf32>,
    %33 = vector.broadcast %30 : f32 to vector<1x8x128xf32>
    %c0_9 = arith.constant 0 : index
    %c0_10 = arith.constant 0 : index
    %c0_11 = arith.constant 0 : index
    %34 = vector.load %arg4[%c0_9, %c0_10, %c0_11] : memref<1x8x128xf32, #tpu.memory_space<vmem>>, vector<1x8x128xf32>
    tpu.vector_store %arg4[%c0_9, %c0_10, %c0_11], %33 {strides = array<i32>} : memref<1x8x128xf32, #tpu.memory_space<vmem>>, vector<1x8x128xf32>,
    return
  }
  func.func @transform_0(%arg0: i32) -> (i32, i32) {
    %c0_i32 = arith.constant 0 : i32
    %c0_i32_0 = arith.constant 0 : i32
    %c0_i32_1 = arith.constant 0 : i32
    return %c0_i32, %c0_i32_0 : i32, i32
  }
  func.func @transform_1(%arg0: i32) -> (i32, i32) {
    %c0_i32 = arith.constant 0 : i32
    %c0_i32_0 = arith.constant 0 : i32
    return %arg0, %c0_i32 : i32, i32
  }
  func.func @transform_2(%arg0: i32) -> (i32, i32, i32) {
    %c0_i32 = arith.constant 0 : i32
    %c0_i32_0 = arith.constant 0 : i32
    %c0_i32_1 = arith.constant 0 : i32
    return %arg0, %c0_i32, %c0_i32_0 : i32, i32, i32
  }
  func.func @transform_3(%arg0: i32) -> (i32, i32, i32) {
    %c0_i32 = arith.constant 0 : i32
    %c0_i32_0 = arith.constant 0 : i32
    %c0_i32_1 = arith.constant 0 : i32
    return %arg0, %c0_i32, %c0_i32_0 : i32, i32, i32
  }
}

module attributes {stable_mosaic.version = 11 : i64} {
  func.func @_conv_pair_kernel(%arg0: i32, %arg1: memref<2x5x128xbf16, #tpu.memory_space<vmem>>, %arg2: memref<4x5xbf16, #tpu.memory_space<vmem>>, %arg3: memref<4x1xf32, #tpu.memory_space<vmem>>, %arg4: memref<2x4x128xf32, #tpu.memory_space<vmem>>, %arg5: memref<1x8x128xf32, #tpu.memory_space<vmem>>, %arg6: memref<1x8x128xf32, #tpu.memory_space<vmem>>) attributes {dimension_semantics = [#tpu.dimension_semantics<parallel>], iteration_bounds = array<i64: 1>, scalar_prefetch = 0 : i64, scratch_operands = 0 : i64, tpu.core_type = #tpu.core_type<tc>, window_params = [{transform_indices = @transform_0, window_bounds = array<i64: 2, 5, 128>}, {pipeline_mode = #tpu.pipeline_mode<synchronous>, transform_indices = @transform_1, window_bounds = array<i64: 4, 5>}, {pipeline_mode = #tpu.pipeline_mode<synchronous>, transform_indices = @transform_2, window_bounds = array<i64: 4, 1>}, {transform_indices = @transform_3, window_bounds = array<i64: 2, 4, 128>}, {transform_indices = @transform_4, window_bounds = array<i64: 1, 8, 128>}, {transform_indices = @transform_5, window_bounds = array<i64: 1, 8, 128>}]} {
    %c0 = arith.constant 0 : index
    %c0_0 = arith.constant 0 : index
    %0 = vector.load %arg2[%c0, %c0_0] : memref<4x5xbf16, #tpu.memory_space<vmem>>, vector<4x5xbf16>
    %c0_1 = arith.constant 0 : index
    %c0_2 = arith.constant 0 : index
    %1 = vector.load %arg3[%c0_1, %c0_2] : memref<4x1xf32, #tpu.memory_space<vmem>>, vector<4x1xf32>
    %c0_3 = arith.constant 0 : index
    %c0_4 = arith.constant 0 : index
    %c0_5 = arith.constant 0 : index
    %2 = vector.load %arg1[%c0_3, %c0_4, %c0_5] : memref<2x5x128xbf16, #tpu.memory_space<vmem>>, vector<1x5x128xbf16>
    %3 = vector.shape_cast %2 : vector<1x5x128xbf16> to vector<5x128xbf16>
    %cst = arith.constant dense<0.000000e+00> : vector<4x128xf32>
    %4 = tpu.matmul %0, %3, %cst {dimension_numbers = #tpu.dot_dimension_numbers<[1], [0], [0], [1], [0, 0, 1, 1], [], []>} : vector<4x5xbf16>, vector<5x128xbf16>, vector<4x128xf32> -> vector<4x128xf32>
    %5 = vector.broadcast %1 : vector<4x1xf32> to vector<4x128xf32>
    %6 = arith.addf %4, %5 : vector<4x128xf32>
    %cst_6 = arith.constant 0.000000e+00 : f32
    %7 = vector.broadcast %cst_6 : f32 to vector<4x128xf32>
    %8 = arith.cmpf ogt, %6, %7 : vector<4x128xf32>
    %cst_7 = arith.constant 1.000000e-01 : f32
    %9 = vector.broadcast %cst_7 : f32 to vector<4x128xf32>
    %10 = arith.mulf %6, %9 : vector<4x128xf32>
    %11 = arith.select %8, %6, %10 : vector<4x128xi1>, vector<4x128xf32>
    %c0_8 = arith.constant 0 : index
    %c0_9 = arith.constant 0 : index
    %c0_10 = arith.constant 0 : index
    %12 = vector.load %arg4[%c0_8, %c0_9, %c0_10] : memref<2x4x128xf32, #tpu.memory_space<vmem>>, vector<1x4x128xf32>
    %13 = vector.shape_cast %12 : vector<1x4x128xf32> to vector<4x128xf32>
    %14 = vector.shape_cast %11 : vector<4x128xf32> to vector<1x4x128xf32>
    tpu.vector_store %arg4[%c0_8, %c0_9, %c0_10], %14 {strides = array<i32>} : memref<2x4x128xf32, #tpu.memory_space<vmem>>, vector<1x4x128xf32>,
    %c1 = arith.constant 1 : index
    %c0_11 = arith.constant 0 : index
    %c0_12 = arith.constant 0 : index
    %15 = vector.load %arg1[%c1, %c0_11, %c0_12] : memref<2x5x128xbf16, #tpu.memory_space<vmem>>, vector<1x5x128xbf16>
    %16 = vector.shape_cast %15 : vector<1x5x128xbf16> to vector<5x128xbf16>
    %cst_13 = arith.constant dense<0.000000e+00> : vector<4x128xf32>
    %17 = tpu.matmul %0, %16, %cst_13 {dimension_numbers = #tpu.dot_dimension_numbers<[1], [0], [0], [1], [0, 0, 1, 1], [], []>} : vector<4x5xbf16>, vector<5x128xbf16>, vector<4x128xf32> -> vector<4x128xf32>
    %18 = vector.broadcast %1 : vector<4x1xf32> to vector<4x128xf32>
    %19 = arith.addf %17, %18 : vector<4x128xf32>
    %cst_14 = arith.constant 0.000000e+00 : f32
    %20 = vector.broadcast %cst_14 : f32 to vector<4x128xf32>
    %21 = arith.cmpf ogt, %19, %20 : vector<4x128xf32>
    %cst_15 = arith.constant 1.000000e-01 : f32
    %22 = vector.broadcast %cst_15 : f32 to vector<4x128xf32>
    %23 = arith.mulf %19, %22 : vector<4x128xf32>
    %24 = arith.select %21, %19, %23 : vector<4x128xi1>, vector<4x128xf32>
    %c1_16 = arith.constant 1 : index
    %c0_17 = arith.constant 0 : index
    %c0_18 = arith.constant 0 : index
    %25 = vector.load %arg4[%c1_16, %c0_17, %c0_18] : memref<2x4x128xf32, #tpu.memory_space<vmem>>, vector<1x4x128xf32>
    %26 = vector.shape_cast %25 : vector<1x4x128xf32> to vector<4x128xf32>
    %27 = vector.shape_cast %24 : vector<4x128xf32> to vector<1x4x128xf32>
    tpu.vector_store %arg4[%c1_16, %c0_17, %c0_18], %27 {strides = array<i32>} : memref<2x4x128xf32, #tpu.memory_space<vmem>>, vector<1x4x128xf32>,
    %28 = arith.subf %11, %24 : vector<4x128xf32>
    %29 = math.absf %28 : vector<4x128xf32>
    %30 = vector.shape_cast %29 : vector<4x128xf32> to vector<1x4x128xf32>
    %cst_19 = arith.constant dense<0.000000e+00> : vector<1xf32>
    %31 = vector.multi_reduction <add>, %30, %cst_19 [1, 2] : vector<1x4x128xf32> to vector<1xf32>
    %32 = vector.shape_cast %31 : vector<1xf32> to vector<1x1x1xf32>
    %33 = vector.extract %32[0, 0, 0] : f32 from vector<1x1x1xf32>
    %34 = tpu.iota {dimensions = array<i32: 1>} : vector<4x128xi32>
    %c128_i32 = arith.constant 128 : i32
    %35 = arith.muli %arg0, %c128_i32 : i32
    %36 = vector.broadcast %35 : i32 to vector<4x128xi32>
    %37 = arith.addi %34, %36 : vector<4x128xi32>
    %c66_i32 = arith.constant 66 : i32
    %38 = vector.broadcast %c66_i32 : i32 to vector<4x128xi32>
    %39 = arith.cmpi slt, %37, %38 : vector<4x128xi32>
    %40 = arith.extui %39 : vector<4x128xi1> to vector<4x128xi32>
    %41 = arith.sitofp %40 : vector<4x128xi32> to vector<4x128xf32>
    %cst_20 = arith.constant 1.000000e+00 : f32
    %42 = vector.broadcast %cst_20 : f32 to vector<4x128xf32>
    %43 = arith.subf %42, %24 : vector<4x128xf32>
    %44 = arith.mulf %43, %43 : vector<4x128xf32>
    %45 = arith.mulf %44, %41 : vector<4x128xf32>
    %46 = vector.shape_cast %45 : vector<4x128xf32> to vector<1x4x128xf32>
    %cst_21 = arith.constant dense<0.000000e+00> : vector<1xf32>
    %47 = vector.multi_reduction <add>, %46, %cst_21 [1, 2] : vector<1x4x128xf32> to vector<1xf32>
    %48 = vector.shape_cast %47 : vector<1xf32> to vector<1x1x1xf32>
    %49 = vector.extract %48[0, 0, 0] : f32 from vector<1x1x1xf32>
    %50 = vector.broadcast %33 : f32 to vector<1x8x128xf32>
    %c0_22 = arith.constant 0 : index
    %c0_23 = arith.constant 0 : index
    %c0_24 = arith.constant 0 : index
    %51 = vector.load %arg5[%c0_22, %c0_23, %c0_24] : memref<1x8x128xf32, #tpu.memory_space<vmem>>, vector<1x8x128xf32>
    tpu.vector_store %arg5[%c0_22, %c0_23, %c0_24], %50 {strides = array<i32>} : memref<1x8x128xf32, #tpu.memory_space<vmem>>, vector<1x8x128xf32>,
    %52 = vector.broadcast %49 : f32 to vector<1x8x128xf32>
    %c0_25 = arith.constant 0 : index
    %c0_26 = arith.constant 0 : index
    %c0_27 = arith.constant 0 : index
    %53 = vector.load %arg6[%c0_25, %c0_26, %c0_27] : memref<1x8x128xf32, #tpu.memory_space<vmem>>, vector<1x8x128xf32>
    tpu.vector_store %arg6[%c0_25, %c0_26, %c0_27], %52 {strides = array<i32>} : memref<1x8x128xf32, #tpu.memory_space<vmem>>, vector<1x8x128xf32>,
    return
  }
  func.func @transform_0(%arg0: i32) -> (i32, i32, i32) {
    %c0_i32 = arith.constant 0 : i32
    %c0_i32_0 = arith.constant 0 : i32
    %c0_i32_1 = arith.constant 0 : i32
    return %c0_i32, %c0_i32_0, %arg0 : i32, i32, i32
  }
  func.func @transform_1(%arg0: i32) -> (i32, i32) {
    %c0_i32 = arith.constant 0 : i32
    %c0_i32_0 = arith.constant 0 : i32
    %c0_i32_1 = arith.constant 0 : i32
    return %c0_i32, %c0_i32_0 : i32, i32
  }
  func.func @transform_2(%arg0: i32) -> (i32, i32) {
    %c0_i32 = arith.constant 0 : i32
    %c0_i32_0 = arith.constant 0 : i32
    %c0_i32_1 = arith.constant 0 : i32
    return %c0_i32, %c0_i32_0 : i32, i32
  }
  func.func @transform_3(%arg0: i32) -> (i32, i32, i32) {
    %c0_i32 = arith.constant 0 : i32
    %c0_i32_0 = arith.constant 0 : i32
    %c0_i32_1 = arith.constant 0 : i32
    return %c0_i32, %c0_i32_0, %arg0 : i32, i32, i32
  }
  func.func @transform_4(%arg0: i32) -> (i32, i32, i32) {
    %c0_i32 = arith.constant 0 : i32
    %c0_i32_0 = arith.constant 0 : i32
    %c0_i32_1 = arith.constant 0 : i32
    return %arg0, %c0_i32, %c0_i32_0 : i32, i32, i32
  }
  func.func @transform_5(%arg0: i32) -> (i32, i32, i32) {
    %c0_i32 = arith.constant 0 : i32
    %c0_i32_0 = arith.constant 0 : i32
    %c0_i32_1 = arith.constant 0 : i32
    return %arg0, %c0_i32, %c0_i32_0 : i32, i32, i32
  }
}

module attributes {stable_mosaic.version = 11 : i64} {
  func.func @_conv_pair_kernel(%arg0: i32, %arg1: memref<2x20x128xbf16, #tpu.memory_space<vmem>>, %arg2: memref<8x20xbf16, #tpu.memory_space<vmem>>, %arg3: memref<8x1xf32, #tpu.memory_space<vmem>>, %arg4: memref<2x8x128xf32, #tpu.memory_space<vmem>>, %arg5: memref<1x8x128xf32, #tpu.memory_space<vmem>>, %arg6: memref<1x8x128xf32, #tpu.memory_space<vmem>>) attributes {dimension_semantics = [#tpu.dimension_semantics<parallel>], iteration_bounds = array<i64: 1>, scalar_prefetch = 0 : i64, scratch_operands = 0 : i64, tpu.core_type = #tpu.core_type<tc>, window_params = [{transform_indices = @transform_0, window_bounds = array<i64: 2, 20, 128>}, {pipeline_mode = #tpu.pipeline_mode<synchronous>, transform_indices = @transform_1, window_bounds = array<i64: 8, 20>}, {pipeline_mode = #tpu.pipeline_mode<synchronous>, transform_indices = @transform_2, window_bounds = array<i64: 8, 1>}, {transform_indices = @transform_3, window_bounds = array<i64: 2, 8, 128>}, {transform_indices = @transform_4, window_bounds = array<i64: 1, 8, 128>}, {transform_indices = @transform_5, window_bounds = array<i64: 1, 8, 128>}]} {
    %c0 = arith.constant 0 : index
    %c0_0 = arith.constant 0 : index
    %0 = vector.load %arg2[%c0, %c0_0] : memref<8x20xbf16, #tpu.memory_space<vmem>>, vector<8x20xbf16>
    %c0_1 = arith.constant 0 : index
    %c0_2 = arith.constant 0 : index
    %1 = vector.load %arg3[%c0_1, %c0_2] : memref<8x1xf32, #tpu.memory_space<vmem>>, vector<8x1xf32>
    %c0_3 = arith.constant 0 : index
    %c0_4 = arith.constant 0 : index
    %c0_5 = arith.constant 0 : index
    %2 = vector.load %arg1[%c0_3, %c0_4, %c0_5] : memref<2x20x128xbf16, #tpu.memory_space<vmem>>, vector<1x20x128xbf16>
    %3 = vector.shape_cast %2 : vector<1x20x128xbf16> to vector<20x128xbf16>
    %cst = arith.constant dense<0.000000e+00> : vector<8x128xf32>
    %4 = tpu.matmul %0, %3, %cst {dimension_numbers = #tpu.dot_dimension_numbers<[1], [0], [0], [1], [0, 0, 1, 1], [], []>} : vector<8x20xbf16>, vector<20x128xbf16>, vector<8x128xf32> -> vector<8x128xf32>
    %5 = vector.broadcast %1 : vector<8x1xf32> to vector<8x128xf32>
    %6 = arith.addf %4, %5 : vector<8x128xf32>
    %cst_6 = arith.constant 0.000000e+00 : f32
    %7 = vector.broadcast %cst_6 : f32 to vector<8x128xf32>
    %8 = arith.cmpf ogt, %6, %7 : vector<8x128xf32>
    %cst_7 = arith.constant 1.000000e-01 : f32
    %9 = vector.broadcast %cst_7 : f32 to vector<8x128xf32>
    %10 = arith.mulf %6, %9 : vector<8x128xf32>
    %11 = arith.select %8, %6, %10 : vector<8x128xi1>, vector<8x128xf32>
    %c0_8 = arith.constant 0 : index
    %c0_9 = arith.constant 0 : index
    %c0_10 = arith.constant 0 : index
    %12 = vector.load %arg4[%c0_8, %c0_9, %c0_10] : memref<2x8x128xf32, #tpu.memory_space<vmem>>, vector<1x8x128xf32>
    %13 = vector.shape_cast %12 : vector<1x8x128xf32> to vector<8x128xf32>
    %14 = vector.shape_cast %11 : vector<8x128xf32> to vector<1x8x128xf32>
    tpu.vector_store %arg4[%c0_8, %c0_9, %c0_10], %14 {strides = array<i32>} : memref<2x8x128xf32, #tpu.memory_space<vmem>>, vector<1x8x128xf32>,
    %c1 = arith.constant 1 : index
    %c0_11 = arith.constant 0 : index
    %c0_12 = arith.constant 0 : index
    %15 = vector.load %arg1[%c1, %c0_11, %c0_12] : memref<2x20x128xbf16, #tpu.memory_space<vmem>>, vector<1x20x128xbf16>
    %16 = vector.shape_cast %15 : vector<1x20x128xbf16> to vector<20x128xbf16>
    %cst_13 = arith.constant dense<0.000000e+00> : vector<8x128xf32>
    %17 = tpu.matmul %0, %16, %cst_13 {dimension_numbers = #tpu.dot_dimension_numbers<[1], [0], [0], [1], [0, 0, 1, 1], [], []>} : vector<8x20xbf16>, vector<20x128xbf16>, vector<8x128xf32> -> vector<8x128xf32>
    %18 = vector.broadcast %1 : vector<8x1xf32> to vector<8x128xf32>
    %19 = arith.addf %17, %18 : vector<8x128xf32>
    %cst_14 = arith.constant 0.000000e+00 : f32
    %20 = vector.broadcast %cst_14 : f32 to vector<8x128xf32>
    %21 = arith.cmpf ogt, %19, %20 : vector<8x128xf32>
    %cst_15 = arith.constant 1.000000e-01 : f32
    %22 = vector.broadcast %cst_15 : f32 to vector<8x128xf32>
    %23 = arith.mulf %19, %22 : vector<8x128xf32>
    %24 = arith.select %21, %19, %23 : vector<8x128xi1>, vector<8x128xf32>
    %c1_16 = arith.constant 1 : index
    %c0_17 = arith.constant 0 : index
    %c0_18 = arith.constant 0 : index
    %25 = vector.load %arg4[%c1_16, %c0_17, %c0_18] : memref<2x8x128xf32, #tpu.memory_space<vmem>>, vector<1x8x128xf32>
    %26 = vector.shape_cast %25 : vector<1x8x128xf32> to vector<8x128xf32>
    %27 = vector.shape_cast %24 : vector<8x128xf32> to vector<1x8x128xf32>
    tpu.vector_store %arg4[%c1_16, %c0_17, %c0_18], %27 {strides = array<i32>} : memref<2x8x128xf32, #tpu.memory_space<vmem>>, vector<1x8x128xf32>,
    %28 = arith.subf %11, %24 : vector<8x128xf32>
    %29 = math.absf %28 : vector<8x128xf32>
    %30 = vector.shape_cast %29 : vector<8x128xf32> to vector<1x8x128xf32>
    %cst_19 = arith.constant dense<0.000000e+00> : vector<1xf32>
    %31 = vector.multi_reduction <add>, %30, %cst_19 [1, 2] : vector<1x8x128xf32> to vector<1xf32>
    %32 = vector.shape_cast %31 : vector<1xf32> to vector<1x1x1xf32>
    %33 = vector.extract %32[0, 0, 0] : f32 from vector<1x1x1xf32>
    %34 = tpu.iota {dimensions = array<i32: 1>} : vector<8x128xi32>
    %c128_i32 = arith.constant 128 : i32
    %35 = arith.muli %arg0, %c128_i32 : i32
    %36 = vector.broadcast %35 : i32 to vector<8x128xi32>
    %37 = arith.addi %34, %36 : vector<8x128xi32>
    %c24_i32 = arith.constant 24 : i32
    %38 = vector.broadcast %c24_i32 : i32 to vector<8x128xi32>
    %39 = arith.cmpi slt, %37, %38 : vector<8x128xi32>
    %40 = arith.extui %39 : vector<8x128xi1> to vector<8x128xi32>
    %41 = arith.sitofp %40 : vector<8x128xi32> to vector<8x128xf32>
    %cst_20 = arith.constant 1.000000e+00 : f32
    %42 = vector.broadcast %cst_20 : f32 to vector<8x128xf32>
    %43 = arith.subf %42, %24 : vector<8x128xf32>
    %44 = arith.mulf %43, %43 : vector<8x128xf32>
    %45 = arith.mulf %44, %41 : vector<8x128xf32>
    %46 = vector.shape_cast %45 : vector<8x128xf32> to vector<1x8x128xf32>
    %cst_21 = arith.constant dense<0.000000e+00> : vector<1xf32>
    %47 = vector.multi_reduction <add>, %46, %cst_21 [1, 2] : vector<1x8x128xf32> to vector<1xf32>
    %48 = vector.shape_cast %47 : vector<1xf32> to vector<1x1x1xf32>
    %49 = vector.extract %48[0, 0, 0] : f32 from vector<1x1x1xf32>
    %50 = vector.broadcast %33 : f32 to vector<1x8x128xf32>
    %c0_22 = arith.constant 0 : index
    %c0_23 = arith.constant 0 : index
    %c0_24 = arith.constant 0 : index
    %51 = vector.load %arg5[%c0_22, %c0_23, %c0_24] : memref<1x8x128xf32, #tpu.memory_space<vmem>>, vector<1x8x128xf32>
    tpu.vector_store %arg5[%c0_22, %c0_23, %c0_24], %50 {strides = array<i32>} : memref<1x8x128xf32, #tpu.memory_space<vmem>>, vector<1x8x128xf32>,
    %52 = vector.broadcast %49 : f32 to vector<1x8x128xf32>
    %c0_25 = arith.constant 0 : index
    %c0_26 = arith.constant 0 : index
    %c0_27 = arith.constant 0 : index
    %53 = vector.load %arg6[%c0_25, %c0_26, %c0_27] : memref<1x8x128xf32, #tpu.memory_space<vmem>>, vector<1x8x128xf32>
    tpu.vector_store %arg6[%c0_25, %c0_26, %c0_27], %52 {strides = array<i32>} : memref<1x8x128xf32, #tpu.memory_space<vmem>>, vector<1x8x128xf32>,
    return
  }
  func.func @transform_0(%arg0: i32) -> (i32, i32, i32) {
    %c0_i32 = arith.constant 0 : i32
    %c0_i32_0 = arith.constant 0 : i32
    %c0_i32_1 = arith.constant 0 : i32
    return %c0_i32, %c0_i32_0, %arg0 : i32, i32, i32
  }
  func.func @transform_1(%arg0: i32) -> (i32, i32) {
    %c0_i32 = arith.constant 0 : i32
    %c0_i32_0 = arith.constant 0 : i32
    %c0_i32_1 = arith.constant 0 : i32
    return %c0_i32, %c0_i32_0 : i32, i32
  }
  func.func @transform_2(%arg0: i32) -> (i32, i32) {
    %c0_i32 = arith.constant 0 : i32
    %c0_i32_0 = arith.constant 0 : i32
    %c0_i32_1 = arith.constant 0 : i32
    return %c0_i32, %c0_i32_0 : i32, i32
  }
  func.func @transform_3(%arg0: i32) -> (i32, i32, i32) {
    %c0_i32 = arith.constant 0 : i32
    %c0_i32_0 = arith.constant 0 : i32
    %c0_i32_1 = arith.constant 0 : i32
    return %c0_i32, %c0_i32_0, %arg0 : i32, i32, i32
  }
  func.func @transform_4(%arg0: i32) -> (i32, i32, i32) {
    %c0_i32 = arith.constant 0 : i32
    %c0_i32_0 = arith.constant 0 : i32
    %c0_i32_1 = arith.constant 0 : i32
    return %arg0, %c0_i32, %c0_i32_0 : i32, i32, i32
  }
  func.func @transform_5(%arg0: i32) -> (i32, i32, i32) {
    %c0_i32 = arith.constant 0 : i32
    %c0_i32_0 = arith.constant 0 : i32
    %c0_i32_1 = arith.constant 0 : i32
    return %arg0, %c0_i32, %c0_i32_0 : i32, i32, i32
  }
}

module attributes {stable_mosaic.version = 11 : i64} {
  func.func @_conv_pair_kernel(%arg0: i32, %arg1: memref<2x24x128xbf16, #tpu.memory_space<vmem>>, %arg2: memref<1x24xbf16, #tpu.memory_space<vmem>>, %arg3: memref<1x1xf32, #tpu.memory_space<vmem>>, %arg4: memref<2x1x128xf32, #tpu.memory_space<vmem>>, %arg5: memref<1x8x128xf32, #tpu.memory_space<vmem>>, %arg6: memref<1x8x128xf32, #tpu.memory_space<vmem>>) attributes {dimension_semantics = [#tpu.dimension_semantics<parallel>], iteration_bounds = array<i64: 1>, scalar_prefetch = 0 : i64, scratch_operands = 0 : i64, tpu.core_type = #tpu.core_type<tc>, window_params = [{transform_indices = @transform_0, window_bounds = array<i64: 2, 24, 128>}, {pipeline_mode = #tpu.pipeline_mode<synchronous>, transform_indices = @transform_1, window_bounds = array<i64: 1, 24>}, {pipeline_mode = #tpu.pipeline_mode<synchronous>, transform_indices = @transform_2, window_bounds = array<i64: 1, 1>}, {transform_indices = @transform_3, window_bounds = array<i64: 2, 1, 128>}, {transform_indices = @transform_4, window_bounds = array<i64: 1, 8, 128>}, {transform_indices = @transform_5, window_bounds = array<i64: 1, 8, 128>}]} {
    %c0 = arith.constant 0 : index
    %c0_0 = arith.constant 0 : index
    %0 = vector.load %arg2[%c0, %c0_0] : memref<1x24xbf16, #tpu.memory_space<vmem>>, vector<1x24xbf16>
    %c0_1 = arith.constant 0 : index
    %c0_2 = arith.constant 0 : index
    %1 = vector.load %arg3[%c0_1, %c0_2] : memref<1x1xf32, #tpu.memory_space<vmem>>, vector<1x1xf32>
    %c0_3 = arith.constant 0 : index
    %c0_4 = arith.constant 0 : index
    %c0_5 = arith.constant 0 : index
    %2 = vector.load %arg1[%c0_3, %c0_4, %c0_5] : memref<2x24x128xbf16, #tpu.memory_space<vmem>>, vector<1x24x128xbf16>
    %3 = vector.shape_cast %2 : vector<1x24x128xbf16> to vector<24x128xbf16>
    %cst = arith.constant dense<0.000000e+00> : vector<1x128xf32>
    %4 = tpu.matmul %0, %3, %cst {dimension_numbers = #tpu.dot_dimension_numbers<[1], [0], [0], [1], [0, 0, 1, 1], [], []>} : vector<1x24xbf16>, vector<24x128xbf16>, vector<1x128xf32> -> vector<1x128xf32>
    %5 = vector.broadcast %1 : vector<1x1xf32> to vector<1x128xf32>
    %6 = arith.addf %4, %5 : vector<1x128xf32>
    %c0_6 = arith.constant 0 : index
    %c0_7 = arith.constant 0 : index
    %c0_8 = arith.constant 0 : index
    %7 = vector.load %arg4[%c0_6, %c0_7, %c0_8] : memref<2x1x128xf32, #tpu.memory_space<vmem>>, vector<1x1x128xf32>
    %8 = vector.shape_cast %7 : vector<1x1x128xf32> to vector<1x128xf32>
    %9 = vector.shape_cast %6 : vector<1x128xf32> to vector<1x1x128xf32>
    tpu.vector_store %arg4[%c0_6, %c0_7, %c0_8], %9 {strides = array<i32>} : memref<2x1x128xf32, #tpu.memory_space<vmem>>, vector<1x1x128xf32>,
    %c1 = arith.constant 1 : index
    %c0_9 = arith.constant 0 : index
    %c0_10 = arith.constant 0 : index
    %10 = vector.load %arg1[%c1, %c0_9, %c0_10] : memref<2x24x128xbf16, #tpu.memory_space<vmem>>, vector<1x24x128xbf16>
    %11 = vector.shape_cast %10 : vector<1x24x128xbf16> to vector<24x128xbf16>
    %cst_11 = arith.constant dense<0.000000e+00> : vector<1x128xf32>
    %12 = tpu.matmul %0, %11, %cst_11 {dimension_numbers = #tpu.dot_dimension_numbers<[1], [0], [0], [1], [0, 0, 1, 1], [], []>} : vector<1x24xbf16>, vector<24x128xbf16>, vector<1x128xf32> -> vector<1x128xf32>
    %13 = vector.broadcast %1 : vector<1x1xf32> to vector<1x128xf32>
    %14 = arith.addf %12, %13 : vector<1x128xf32>
    %c1_12 = arith.constant 1 : index
    %c0_13 = arith.constant 0 : index
    %c0_14 = arith.constant 0 : index
    %15 = vector.load %arg4[%c1_12, %c0_13, %c0_14] : memref<2x1x128xf32, #tpu.memory_space<vmem>>, vector<1x1x128xf32>
    %16 = vector.shape_cast %15 : vector<1x1x128xf32> to vector<1x128xf32>
    %17 = vector.shape_cast %14 : vector<1x128xf32> to vector<1x1x128xf32>
    tpu.vector_store %arg4[%c1_12, %c0_13, %c0_14], %17 {strides = array<i32>} : memref<2x1x128xf32, #tpu.memory_space<vmem>>, vector<1x1x128xf32>,
    %18 = arith.subf %6, %14 : vector<1x128xf32>
    %19 = math.absf %18 : vector<1x128xf32>
    %20 = vector.shape_cast %19 : vector<1x128xf32> to vector<1x1x128xf32>
    %cst_15 = arith.constant dense<0.000000e+00> : vector<1xf32>
    %21 = vector.multi_reduction <add>, %20, %cst_15 [1, 2] : vector<1x1x128xf32> to vector<1xf32>
    %22 = vector.shape_cast %21 : vector<1xf32> to vector<1x1x1xf32>
    %23 = vector.extract %22[0, 0, 0] : f32 from vector<1x1x1xf32>
    %24 = tpu.iota {dimensions = array<i32: 1>} : vector<1x128xi32>
    %c128_i32 = arith.constant 128 : i32
    %25 = arith.muli %arg0, %c128_i32 : i32
    %26 = vector.broadcast %25 : i32 to vector<1x128xi32>
    %27 = arith.addi %24, %26 : vector<1x128xi32>
    %c24_i32 = arith.constant 24 : i32
    %28 = vector.broadcast %c24_i32 : i32 to vector<1x128xi32>
    %29 = arith.cmpi slt, %27, %28 : vector<1x128xi32>
    %30 = arith.extui %29 : vector<1x128xi1> to vector<1x128xi32>
    %31 = arith.sitofp %30 : vector<1x128xi32> to vector<1x128xf32>
    %cst_16 = arith.constant 1.000000e+00 : f32
    %32 = vector.broadcast %cst_16 : f32 to vector<1x128xf32>
    %33 = arith.subf %32, %14 : vector<1x128xf32>
    %34 = arith.mulf %33, %33 : vector<1x128xf32>
    %35 = arith.mulf %34, %31 : vector<1x128xf32>
    %36 = vector.shape_cast %35 : vector<1x128xf32> to vector<1x1x128xf32>
    %cst_17 = arith.constant dense<0.000000e+00> : vector<1xf32>
    %37 = vector.multi_reduction <add>, %36, %cst_17 [1, 2] : vector<1x1x128xf32> to vector<1xf32>
    %38 = vector.shape_cast %37 : vector<1xf32> to vector<1x1x1xf32>
    %39 = vector.extract %38[0, 0, 0] : f32 from vector<1x1x1xf32>
    %40 = vector.broadcast %23 : f32 to vector<1x8x128xf32>
    %c0_18 = arith.constant 0 : index
    %c0_19 = arith.constant 0 : index
    %c0_20 = arith.constant 0 : index
    %41 = vector.load %arg5[%c0_18, %c0_19, %c0_20] : memref<1x8x128xf32, #tpu.memory_space<vmem>>, vector<1x8x128xf32>
    tpu.vector_store %arg5[%c0_18, %c0_19, %c0_20], %40 {strides = array<i32>} : memref<1x8x128xf32, #tpu.memory_space<vmem>>, vector<1x8x128xf32>,
    %42 = vector.broadcast %39 : f32 to vector<1x8x128xf32>
    %c0_21 = arith.constant 0 : index
    %c0_22 = arith.constant 0 : index
    %c0_23 = arith.constant 0 : index
    %43 = vector.load %arg6[%c0_21, %c0_22, %c0_23] : memref<1x8x128xf32, #tpu.memory_space<vmem>>, vector<1x8x128xf32>
    tpu.vector_store %arg6[%c0_21, %c0_22, %c0_23], %42 {strides = array<i32>} : memref<1x8x128xf32, #tpu.memory_space<vmem>>, vector<1x8x128xf32>,
    return
  }
  func.func @transform_0(%arg0: i32) -> (i32, i32, i32) {
    %c0_i32 = arith.constant 0 : i32
    %c0_i32_0 = arith.constant 0 : i32
    %c0_i32_1 = arith.constant 0 : i32
    return %c0_i32, %c0_i32_0, %arg0 : i32, i32, i32
  }
  func.func @transform_1(%arg0: i32) -> (i32, i32) {
    %c0_i32 = arith.constant 0 : i32
    %c0_i32_0 = arith.constant 0 : i32
    %c0_i32_1 = arith.constant 0 : i32
    return %c0_i32, %c0_i32_0 : i32, i32
  }
  func.func @transform_2(%arg0: i32) -> (i32, i32) {
    %c0_i32 = arith.constant 0 : i32
    %c0_i32_0 = arith.constant 0 : i32
    %c0_i32_1 = arith.constant 0 : i32
    return %c0_i32, %c0_i32_0 : i32, i32
  }
  func.func @transform_3(%arg0: i32) -> (i32, i32, i32) {
    %c0_i32 = arith.constant 0 : i32
    %c0_i32_0 = arith.constant 0 : i32
    %c0_i32_1 = arith.constant 0 : i32
    return %c0_i32, %c0_i32_0, %arg0 : i32, i32, i32
  }
  func.func @transform_4(%arg0: i32) -> (i32, i32, i32) {
    %c0_i32 = arith.constant 0 : i32
    %c0_i32_0 = arith.constant 0 : i32
    %c0_i32_1 = arith.constant 0 : i32
    return %arg0, %c0_i32, %c0_i32_0 : i32, i32, i32
  }
  func.func @transform_5(%arg0: i32) -> (i32, i32, i32) {
    %c0_i32 = arith.constant 0 : i32
    %c0_i32_0 = arith.constant 0 : i32
    %c0_i32_1 = arith.constant 0 : i32
    return %arg0, %c0_i32, %c0_i32_0 : i32, i32, i32
  }
}

module attributes {stable_mosaic.version = 11 : i64} {
  func.func @_conv_pair_kernel(%arg0: i32, %arg1: memref<2x5x128xbf16, #tpu.memory_space<vmem>>, %arg2: memref<4x5xbf16, #tpu.memory_space<vmem>>, %arg3: memref<4x1xf32, #tpu.memory_space<vmem>>, %arg4: memref<2x4x128xf32, #tpu.memory_space<vmem>>, %arg5: memref<1x8x128xf32, #tpu.memory_space<vmem>>, %arg6: memref<1x8x128xf32, #tpu.memory_space<vmem>>) attributes {dimension_semantics = [#tpu.dimension_semantics<parallel>], iteration_bounds = array<i64: 1>, scalar_prefetch = 0 : i64, scratch_operands = 0 : i64, tpu.core_type = #tpu.core_type<tc>, window_params = [{transform_indices = @transform_0, window_bounds = array<i64: 2, 5, 128>}, {pipeline_mode = #tpu.pipeline_mode<synchronous>, transform_indices = @transform_1, window_bounds = array<i64: 4, 5>}, {pipeline_mode = #tpu.pipeline_mode<synchronous>, transform_indices = @transform_2, window_bounds = array<i64: 4, 1>}, {transform_indices = @transform_3, window_bounds = array<i64: 2, 4, 128>}, {transform_indices = @transform_4, window_bounds = array<i64: 1, 8, 128>}, {transform_indices = @transform_5, window_bounds = array<i64: 1, 8, 128>}]} {
    %c0 = arith.constant 0 : index
    %c0_0 = arith.constant 0 : index
    %0 = vector.load %arg2[%c0, %c0_0] : memref<4x5xbf16, #tpu.memory_space<vmem>>, vector<4x5xbf16>
    %c0_1 = arith.constant 0 : index
    %c0_2 = arith.constant 0 : index
    %1 = vector.load %arg3[%c0_1, %c0_2] : memref<4x1xf32, #tpu.memory_space<vmem>>, vector<4x1xf32>
    %c0_3 = arith.constant 0 : index
    %c0_4 = arith.constant 0 : index
    %c0_5 = arith.constant 0 : index
    %2 = vector.load %arg1[%c0_3, %c0_4, %c0_5] : memref<2x5x128xbf16, #tpu.memory_space<vmem>>, vector<1x5x128xbf16>
    %3 = vector.shape_cast %2 : vector<1x5x128xbf16> to vector<5x128xbf16>
    %cst = arith.constant dense<0.000000e+00> : vector<4x128xf32>
    %4 = tpu.matmul %0, %3, %cst {dimension_numbers = #tpu.dot_dimension_numbers<[1], [0], [0], [1], [0, 0, 1, 1], [], []>} : vector<4x5xbf16>, vector<5x128xbf16>, vector<4x128xf32> -> vector<4x128xf32>
    %5 = vector.broadcast %1 : vector<4x1xf32> to vector<4x128xf32>
    %6 = arith.addf %4, %5 : vector<4x128xf32>
    %cst_6 = arith.constant 0.000000e+00 : f32
    %7 = vector.broadcast %cst_6 : f32 to vector<4x128xf32>
    %8 = arith.cmpf ogt, %6, %7 : vector<4x128xf32>
    %cst_7 = arith.constant 1.000000e-01 : f32
    %9 = vector.broadcast %cst_7 : f32 to vector<4x128xf32>
    %10 = arith.mulf %6, %9 : vector<4x128xf32>
    %11 = arith.select %8, %6, %10 : vector<4x128xi1>, vector<4x128xf32>
    %c0_8 = arith.constant 0 : index
    %c0_9 = arith.constant 0 : index
    %c0_10 = arith.constant 0 : index
    %12 = vector.load %arg4[%c0_8, %c0_9, %c0_10] : memref<2x4x128xf32, #tpu.memory_space<vmem>>, vector<1x4x128xf32>
    %13 = vector.shape_cast %12 : vector<1x4x128xf32> to vector<4x128xf32>
    %14 = vector.shape_cast %11 : vector<4x128xf32> to vector<1x4x128xf32>
    tpu.vector_store %arg4[%c0_8, %c0_9, %c0_10], %14 {strides = array<i32>} : memref<2x4x128xf32, #tpu.memory_space<vmem>>, vector<1x4x128xf32>,
    %c1 = arith.constant 1 : index
    %c0_11 = arith.constant 0 : index
    %c0_12 = arith.constant 0 : index
    %15 = vector.load %arg1[%c1, %c0_11, %c0_12] : memref<2x5x128xbf16, #tpu.memory_space<vmem>>, vector<1x5x128xbf16>
    %16 = vector.shape_cast %15 : vector<1x5x128xbf16> to vector<5x128xbf16>
    %cst_13 = arith.constant dense<0.000000e+00> : vector<4x128xf32>
    %17 = tpu.matmul %0, %16, %cst_13 {dimension_numbers = #tpu.dot_dimension_numbers<[1], [0], [0], [1], [0, 0, 1, 1], [], []>} : vector<4x5xbf16>, vector<5x128xbf16>, vector<4x128xf32> -> vector<4x128xf32>
    %18 = vector.broadcast %1 : vector<4x1xf32> to vector<4x128xf32>
    %19 = arith.addf %17, %18 : vector<4x128xf32>
    %cst_14 = arith.constant 0.000000e+00 : f32
    %20 = vector.broadcast %cst_14 : f32 to vector<4x128xf32>
    %21 = arith.cmpf ogt, %19, %20 : vector<4x128xf32>
    %cst_15 = arith.constant 1.000000e-01 : f32
    %22 = vector.broadcast %cst_15 : f32 to vector<4x128xf32>
    %23 = arith.mulf %19, %22 : vector<4x128xf32>
    %24 = arith.select %21, %19, %23 : vector<4x128xi1>, vector<4x128xf32>
    %c1_16 = arith.constant 1 : index
    %c0_17 = arith.constant 0 : index
    %c0_18 = arith.constant 0 : index
    %25 = vector.load %arg4[%c1_16, %c0_17, %c0_18] : memref<2x4x128xf32, #tpu.memory_space<vmem>>, vector<1x4x128xf32>
    %26 = vector.shape_cast %25 : vector<1x4x128xf32> to vector<4x128xf32>
    %27 = vector.shape_cast %24 : vector<4x128xf32> to vector<1x4x128xf32>
    tpu.vector_store %arg4[%c1_16, %c0_17, %c0_18], %27 {strides = array<i32>} : memref<2x4x128xf32, #tpu.memory_space<vmem>>, vector<1x4x128xf32>,
    %28 = arith.subf %11, %24 : vector<4x128xf32>
    %29 = math.absf %28 : vector<4x128xf32>
    %30 = vector.shape_cast %29 : vector<4x128xf32> to vector<1x4x128xf32>
    %cst_19 = arith.constant dense<0.000000e+00> : vector<1xf32>
    %31 = vector.multi_reduction <add>, %30, %cst_19 [1, 2] : vector<1x4x128xf32> to vector<1xf32>
    %32 = vector.shape_cast %31 : vector<1xf32> to vector<1x1x1xf32>
    %33 = vector.extract %32[0, 0, 0] : f32 from vector<1x1x1xf32>
    %34 = tpu.iota {dimensions = array<i32: 1>} : vector<4x128xi32>
    %c128_i32 = arith.constant 128 : i32
    %35 = arith.muli %arg0, %c128_i32 : i32
    %36 = vector.broadcast %35 : i32 to vector<4x128xi32>
    %37 = arith.addi %34, %36 : vector<4x128xi32>
    %c64_i32 = arith.constant 64 : i32
    %38 = vector.broadcast %c64_i32 : i32 to vector<4x128xi32>
    %39 = arith.cmpi slt, %37, %38 : vector<4x128xi32>
    %40 = arith.extui %39 : vector<4x128xi1> to vector<4x128xi32>
    %41 = arith.sitofp %40 : vector<4x128xi32> to vector<4x128xf32>
    %cst_20 = arith.constant 1.000000e+00 : f32
    %42 = vector.broadcast %cst_20 : f32 to vector<4x128xf32>
    %43 = arith.subf %42, %24 : vector<4x128xf32>
    %44 = arith.mulf %43, %43 : vector<4x128xf32>
    %45 = arith.mulf %44, %41 : vector<4x128xf32>
    %46 = vector.shape_cast %45 : vector<4x128xf32> to vector<1x4x128xf32>
    %cst_21 = arith.constant dense<0.000000e+00> : vector<1xf32>
    %47 = vector.multi_reduction <add>, %46, %cst_21 [1, 2] : vector<1x4x128xf32> to vector<1xf32>
    %48 = vector.shape_cast %47 : vector<1xf32> to vector<1x1x1xf32>
    %49 = vector.extract %48[0, 0, 0] : f32 from vector<1x1x1xf32>
    %50 = vector.broadcast %33 : f32 to vector<1x8x128xf32>
    %c0_22 = arith.constant 0 : index
    %c0_23 = arith.constant 0 : index
    %c0_24 = arith.constant 0 : index
    %51 = vector.load %arg5[%c0_22, %c0_23, %c0_24] : memref<1x8x128xf32, #tpu.memory_space<vmem>>, vector<1x8x128xf32>
    tpu.vector_store %arg5[%c0_22, %c0_23, %c0_24], %50 {strides = array<i32>} : memref<1x8x128xf32, #tpu.memory_space<vmem>>, vector<1x8x128xf32>,
    %52 = vector.broadcast %49 : f32 to vector<1x8x128xf32>
    %c0_25 = arith.constant 0 : index
    %c0_26 = arith.constant 0 : index
    %c0_27 = arith.constant 0 : index
    %53 = vector.load %arg6[%c0_25, %c0_26, %c0_27] : memref<1x8x128xf32, #tpu.memory_space<vmem>>, vector<1x8x128xf32>
    tpu.vector_store %arg6[%c0_25, %c0_26, %c0_27], %52 {strides = array<i32>} : memref<1x8x128xf32, #tpu.memory_space<vmem>>, vector<1x8x128xf32>,
    return
  }
  func.func @transform_0(%arg0: i32) -> (i32, i32, i32) {
    %c0_i32 = arith.constant 0 : i32
    %c0_i32_0 = arith.constant 0 : i32
    %c0_i32_1 = arith.constant 0 : i32
    return %c0_i32, %c0_i32_0, %arg0 : i32, i32, i32
  }
  func.func @transform_1(%arg0: i32) -> (i32, i32) {
    %c0_i32 = arith.constant 0 : i32
    %c0_i32_0 = arith.constant 0 : i32
    %c0_i32_1 = arith.constant 0 : i32
    return %c0_i32, %c0_i32_0 : i32, i32
  }
  func.func @transform_2(%arg0: i32) -> (i32, i32) {
    %c0_i32 = arith.constant 0 : i32
    %c0_i32_0 = arith.constant 0 : i32
    %c0_i32_1 = arith.constant 0 : i32
    return %c0_i32, %c0_i32_0 : i32, i32
  }
  func.func @transform_3(%arg0: i32) -> (i32, i32, i32) {
    %c0_i32 = arith.constant 0 : i32
    %c0_i32_0 = arith.constant 0 : i32
    %c0_i32_1 = arith.constant 0 : i32
    return %c0_i32, %c0_i32_0, %arg0 : i32, i32, i32
  }
  func.func @transform_4(%arg0: i32) -> (i32, i32, i32) {
    %c0_i32 = arith.constant 0 : i32
    %c0_i32_0 = arith.constant 0 : i32
    %c0_i32_1 = arith.constant 0 : i32
    return %arg0, %c0_i32, %c0_i32_0 : i32, i32, i32
  }
  func.func @transform_5(%arg0: i32) -> (i32, i32, i32) {
    %c0_i32 = arith.constant 0 : i32
    %c0_i32_0 = arith.constant 0 : i32
    %c0_i32_1 = arith.constant 0 : i32
    return %arg0, %c0_i32, %c0_i32_0 : i32, i32, i32
  }
}

module attributes {stable_mosaic.version = 11 : i64} {
  func.func @_tprls_kernel(%arg0: i32, %arg1: memref<1x1xf32, #tpu.memory_space<vmem>>, %arg2: memref<8x128xf32, #tpu.memory_space<vmem>>, %arg3: memref<1x8x128xf32, #tpu.memory_space<vmem>>, %arg4: memref<1x8x128xf32, #tpu.memory_space<vmem>>) attributes {dimension_semantics = [#tpu.dimension_semantics<parallel>], iteration_bounds = array<i64: 1>, scalar_prefetch = 0 : i64, scratch_operands = 0 : i64, tpu.core_type = #tpu.core_type<tc>, window_params = [{pipeline_mode = #tpu.pipeline_mode<synchronous>, transform_indices = @transform_0, window_bounds = array<i64: 1, 1>}, {transform_indices = @transform_1, window_bounds = array<i64: 8, 128>}, {transform_indices = @transform_2, window_bounds = array<i64: 1, 8, 128>}, {transform_indices = @transform_3, window_bounds = array<i64: 1, 8, 128>}]} {
    %c0 = arith.constant 0 : index
    %c0_0 = arith.constant 0 : index
    %0 = vector.load %arg2[%c0, %c0_0] : memref<8x128xf32, #tpu.memory_space<vmem>>, vector<8x128xf32>
    %c0_1 = arith.constant 0 : index
    %c0_2 = arith.constant 0 : index
    %1 = vector.load %arg1[%c0_1, %c0_2] : memref<1x1xf32, #tpu.memory_space<vmem>>, vector<1x1xf32>
    %c8_i32 = arith.constant 8 : i32
    %2 = arith.muli %arg0, %c8_i32 : i32
    %c128_i32 = arith.constant 128 : i32
    %3 = arith.muli %2, %c128_i32 : i32
    %4 = tpu.iota {dimensions = array<i32: 0>} : vector<8x128xi32>
    %c128_i32_3 = arith.constant 128 : i32
    %5 = vector.broadcast %c128_i32_3 : i32 to vector<8x128xi32>
    %6 = arith.muli %4, %5 : vector<8x128xi32>
    %7 = vector.broadcast %3 : i32 to vector<8x128xi32>
    %8 = arith.addi %7, %6 : vector<8x128xi32>
    %9 = tpu.iota {dimensions = array<i32: 1>} : vector<8x128xi32>
    %10 = arith.addi %8, %9 : vector<8x128xi32>
    %11 = vector.broadcast %1 : vector<1x1xf32> to vector<8x128xf32>
    %12 = arith.cmpf olt, %0, %11 : vector<8x128xf32>
    %c24_i32 = arith.constant 24 : i32
    %13 = vector.broadcast %c24_i32 : i32 to vector<8x128xi32>
    %14 = arith.cmpi slt, %10, %13 : vector<8x128xi32>
    %15 = arith.andi %12, %14 : vector<8x128xi1>
    %16 = vector.broadcast %1 : vector<1x1xf32> to vector<8x128xf32>
    %17 = arith.subf %0, %16 : vector<8x128xf32>
    %18 = arith.mulf %17, %17 : vector<8x128xf32>
    %cst = arith.constant 0.000000e+00 : f32
    %19 = vector.broadcast %cst : f32 to vector<8x128xf32>
    %20 = arith.select %15, %18, %19 : vector<8x128xi1>, vector<8x128xf32>
    %21 = vector.shape_cast %20 : vector<8x128xf32> to vector<1x8x128xf32>
    %cst_4 = arith.constant dense<0.000000e+00> : vector<1xf32>
    %22 = vector.multi_reduction <add>, %21, %cst_4 [1, 2] : vector<1x8x128xf32> to vector<1xf32>
    %23 = vector.shape_cast %22 : vector<1xf32> to vector<1x1x1xf32>
    %24 = vector.extract %23[0, 0, 0] : f32 from vector<1x1x1xf32>
    %25 = arith.extui %15 : vector<8x128xi1> to vector<8x128xi32>
    %26 = arith.sitofp %25 : vector<8x128xi32> to vector<8x128xf32>
    %27 = vector.shape_cast %26 : vector<8x128xf32> to vector<1x8x128xf32>
    %cst_5 = arith.constant dense<0.000000e+00> : vector<1xf32>
    %28 = vector.multi_reduction <add>, %27, %cst_5 [1, 2] : vector<1x8x128xf32> to vector<1xf32>
    %29 = vector.shape_cast %28 : vector<1xf32> to vector<1x1x1xf32>
    %30 = vector.extract %29[0, 0, 0] : f32 from vector<1x1x1xf32>
    %31 = vector.broadcast %24 : f32 to vector<1x8x128xf32>
    %c0_6 = arith.constant 0 : index
    %c0_7 = arith.constant 0 : index
    %c0_8 = arith.constant 0 : index
    %32 = vector.load %arg3[%c0_6, %c0_7, %c0_8] : memref<1x8x128xf32, #tpu.memory_space<vmem>>, vector<1x8x128xf32>
    tpu.vector_store %arg3[%c0_6, %c0_7, %c0_8], %31 {strides = array<i32>} : memref<1x8x128xf32, #tpu.memory_space<vmem>>, vector<1x8x128xf32>,
    %33 = vector.broadcast %30 : f32 to vector<1x8x128xf32>
    %c0_9 = arith.constant 0 : index
    %c0_10 = arith.constant 0 : index
    %c0_11 = arith.constant 0 : index
    %34 = vector.load %arg4[%c0_9, %c0_10, %c0_11] : memref<1x8x128xf32, #tpu.memory_space<vmem>>, vector<1x8x128xf32>
    tpu.vector_store %arg4[%c0_9, %c0_10, %c0_11], %33 {strides = array<i32>} : memref<1x8x128xf32, #tpu.memory_space<vmem>>, vector<1x8x128xf32>,
    return
  }
  func.func @transform_0(%arg0: i32) -> (i32, i32) {
    %c0_i32 = arith.constant 0 : i32
    %c0_i32_0 = arith.constant 0 : i32
    %c0_i32_1 = arith.constant 0 : i32
    return %c0_i32, %c0_i32_0 : i32, i32
  }
  func.func @transform_1(%arg0: i32) -> (i32, i32) {
    %c0_i32 = arith.constant 0 : i32
    %c0_i32_0 = arith.constant 0 : i32
    return %arg0, %c0_i32 : i32, i32
  }
  func.func @transform_2(%arg0: i32) -> (i32, i32, i32) {
    %c0_i32 = arith.constant 0 : i32
    %c0_i32_0 = arith.constant 0 : i32
    %c0_i32_1 = arith.constant 0 : i32
    return %arg0, %c0_i32, %c0_i32_0 : i32, i32, i32
  }
  func.func @transform_3(%arg0: i32) -> (i32, i32, i32) {
    %c0_i32 = arith.constant 0 : i32
    %c0_i32_0 = arith.constant 0 : i32
    %c0_i32_1 = arith.constant 0 : i32
    return %arg0, %c0_i32, %c0_i32_0 : i32, i32, i32
  }
}

</mosaic_0001>

<llo_original>
// kernel: squeeze.92
$region0: #{squeeze.92}
  %s0 = inlined_call_operand.vmem [shape: bf16[1,4,50], index: 0, kind: input, shape index: {}]
  %s1 = inlined_call_operand.vmem [shape: bf16[4,2,25], index: 1, kind: output, shape index: {}]
  $region1: #{squeeze.92} parent=0
    #allocation0 [shape = 'u8[16384]{0}', space=vmem, size = 0x4000, scoped, tag = 'scoped mem for output reshape']
    #allocation1 [shape = 'u8[4096]{0}', space=vmem, size = 0x1000, scoped, tag = 'scoped mem for input reshape']
    %s3 = smul.u32 2, 2
    %s4 = sshll.u32 1, %s3
    %s5 = ssub.s32 %s4, 1
    %s6 = sshrl.u32 %s5, 1
    %s7 = sor.u32 %s5, %s6
    %s8 = sand.u32 %s7, 85
    %s9 = sshrl.u32 %s8, 1
    %s10 = sor.u32 %s8, %s9
    %s11 = sand.u32 51, %s10
    %s12 = sshrl.u32 %s11, 2
    %s13 = sor.u32 %s11, %s12
    %s14 = sand.u32 15, %s13
    %v15 = vld [vmem:[%s0] sm:%s14]
    %v16 = vunpack.c.l.bf16 %v15
    %v17 = vunpack.c.h.bf16 %v15
    %18 = vst [vmem:[#allocation1] sm:%s5] %v16
    %v19 = vld [vmem:[#allocation1] sm:$0xf]
    %vm20 = vcmask 203776
    %21 = vst.msk [vmem:[#allocation0] ss:$8 sm:$0xf] %vm20, %v19
    %v22 = vld [vmem:[#allocation1] sm:$0xf]
    %23 = vrot.lane.b32.xlu0 %v22, 103
    %v24 = vpop.permute.xlu0 %23
    %vm25 = vcmask 203776
    %s26 = scalar_lea.vmem [#allocation0], 1
    %27 = vst.msk [vmem:[%s26] ss:$8 sm:$0xf] %vm25, %v24
    %s29 = smul.u32 1, 2
    %s30 = sshll.u32 1, %s29
    %s31 = ssub.s32 %s30, 1
    %s32 = sshrl.u32 %s29, 1
    %v33 = vld [vmem:[#allocation0] sm:%s31]
    %v34 = vpack.c.bf16 0.0, %v33
    %s35 = sshll.u32 1, %s32
    %s36 = ssub.s32 %s35, 1
    %37 = vst [vmem:[%s1] sm:%s36] %v34
    %s38 = scalar_lea.vmem [#allocation0], 8
    %v39 = vld [vmem:[%s38] sm:%s31]
    %v40 = vpack.c.bf16 0.0, %v39
    %s41 = sshll.u32 1, %s32
    %s42 = ssub.s32 %s41, 1
    %s43 = scalar_lea.vmem %s1, 1
    %44 = vst [vmem:[%s43] sm:%s42] %v40
    %s45 = scalar_lea.vmem [#allocation0], 16
    %v46 = vld [vmem:[%s45] sm:%s31]
    %v47 = vpack.c.bf16 0.0, %v46
    %s48 = sshll.u32 1, %s32
    %s49 = ssub.s32 %s48, 1
    %s50 = smul.addr 1, 2
    %s51 = scalar_lea.vmem %s1, %s50
    %52 = vst [vmem:[%s51] sm:%s49] %v47
    %s53 = scalar_lea.vmem [#allocation0], 24
    %v54 = vld [vmem:[%s53] sm:%s31]
    %v55 = vpack.c.bf16 0.0, %v54
    %s56 = sshll.u32 1, %s32
    %s57 = ssub.s32 %s56, 1
    %s58 = smul.addr 1, 3
    %s59 = scalar_lea.vmem %s1, %s58
    %60 = vst [vmem:[%s59] sm:%s57] %v55

// kernel: squeeze.95
$region0: #{squeeze.95}
  %s0 = inlined_call_operand.vmem [shape: bf16[1,8,26], index: 0, kind: input, shape index: {}]
  %s1 = inlined_call_operand.vmem [shape: bf16[8,2,13], index: 1, kind: output, shape index: {}]
  $region1: #{squeeze.95} parent=0
    #allocation0 [shape = 'u8[32768]{0}', space=vmem, size = 0x8000, scoped, tag = 'scoped mem for output reshape']
    #allocation1 [shape = 'u8[4096]{0}', space=vmem, size = 0x1000, scoped, tag = 'scoped mem for input reshape']
    %s3 = smul.u32 4, 2
    %s4 = sshll.u32 1, %s3
    %s5 = ssub.s32 %s4, 1
    %s6 = sshrl.u32 %s5, 1
    %s7 = sor.u32 %s5, %s6
    %s8 = sand.u32 %s7, 85
    %s9 = sshrl.u32 %s8, 1
    %s10 = sor.u32 %s8, %s9
    %s11 = sand.u32 51, %s10
    %s12 = sshrl.u32 %s11, 2
    %s13 = sor.u32 %s11, %s12
    %s14 = sand.u32 15, %s13
    %v15 = vld [vmem:[%s0] sm:%s14]
    %v16 = vunpack.c.l.bf16 %v15
    %v17 = vunpack.c.h.bf16 %v15
    %18 = vst [vmem:[#allocation1] sm:%s5] %v16
    %v19 = vld [vmem:[#allocation1] sm:$0xff]
    %vm20 = vcmask 105472
    %21 = vst.msk [vmem:[#allocation0] ss:$8 sm:$0xf] %vm20, %v19
    %22 = vst.msk [vmem:[#allocation0] ss:$8 sm:$0xf0] %vm20, %v19
    %v23 = vld [vmem:[#allocation1] sm:$0xff]
    %24 = vrot.lane.b32.xlu0 %v23, 115
    %v25 = vpop.permute.xlu0 %24
    %vm26 = vcmask 105472
    %s27 = scalar_lea.vmem [#allocation0], 1
    %28 = vst.msk [vmem:[%s27] ss:$8 sm:$0xf] %vm26, %v25
    %s29 = scalar_lea.vmem [#allocation0], 1
    %30 = vst.msk [vmem:[%s29] ss:$8 sm:$0xf0] %vm26, %v25
    %s32 = smul.u32 1, 2
    %s33 = sshll.u32 1, %s32
    %s34 = ssub.s32 %s33, 1
    %s35 = sshrl.u32 %s32, 1
    %v36 = vld [vmem:[#allocation0] sm:%s34]
    %v37 = vpack.c.bf16 0.0, %v36
    %s38 = sshll.u32 1, %s35
    %s39 = ssub.s32 %s38, 1
    %40 = vst [vmem:[%s1] sm:%s39] %v37
    %s41 = scalar_lea.vmem [#allocation0], 8
    %v42 = vld [vmem:[%s41] sm:%s34]
    %v43 = vpack.c.bf16 0.0, %v42
    %s44 = sshll.u32 1, %s35
    %s45 = ssub.s32 %s44, 1
    %s46 = scalar_lea.vmem %s1, 1
    %47 = vst [vmem:[%s46] sm:%s45] %v43
    %s48 = scalar_lea.vmem [#allocation0], 16
    %v49 = vld [vmem:[%s48] sm:%s34]
    %v50 = vpack.c.bf16 0.0, %v49
    %s51 = sshll.u32 1, %s35
    %s52 = ssub.s32 %s51, 1
    %s53 = smul.addr 1, 2
    %s54 = scalar_lea.vmem %s1, %s53
    %55 = vst [vmem:[%s54] sm:%s52] %v50
    %s56 = scalar_lea.vmem [#allocation0], 24
    %v57 = vld [vmem:[%s56] sm:%s34]
    %v58 = vpack.c.bf16 0.0, %v57
    %s59 = sshll.u32 1, %s35
    %s60 = ssub.s32 %s59, 1
    %s61 = smul.addr 1, 3
    %s62 = scalar_lea.vmem %s1, %s61
    %63 = vst [vmem:[%s62] sm:%s60] %v58
    %s64 = scalar_lea.vmem [#allocation0], 32
    %v65 = vld [vmem:[%s64] sm:%s34]
    %v66 = vpack.c.bf16 0.0, %v65
    %s67 = sshll.u32 1, %s35
    %s68 = ssub.s32 %s67, 1
    %s69 = smul.addr 1, 4
    %s70 = scalar_lea.vmem %s1, %s69
    %71 = vst [vmem:[%s70] sm:%s68] %v66
    %s72 = scalar_lea.vmem [#allocation0], 40
    %v73 = vld [vmem:[%s72] sm:%s34]
    %v74 = vpack.c.bf16 0.0, %v73
    %s75 = sshll.u32 1, %s35
    %s76 = ssub.s32 %s75, 1
    %s77 = smul.addr 1, 5
    %s78 = scalar_lea.vmem %s1, %s77
    %79 = vst [vmem:[%s78] sm:%s76] %v74
    %s80 = scalar_lea.vmem [#allocation0], 48
    %v81 = vld [vmem:[%s80] sm:%s34]
    %v82 = vpack.c.bf16 0.0, %v81
    %s83 = sshll.u32 1, %s35
    %s84 = ssub.s32 %s83, 1
    %s85 = smul.addr 1, 6
    %s86 = scalar_lea.vmem %s1, %s85
    %87 = vst [vmem:[%s86] sm:%s84] %v82
    %s88 = scalar_lea.vmem [#allocation0], 56
    %v89 = vld [vmem:[%s88] sm:%s34]
    %v90 = vpack.c.bf16 0.0, %v89
    %s91 = sshll.u32 1, %s35
    %s92 = ssub.s32 %s91, 1
    %s93 = smul.addr 1, 7
    %s94 = scalar_lea.vmem %s1, %s93
    %95 = vst [vmem:[%s94] sm:%s92] %v90

// kernel: generator_total_loss.28
$region0: #{generator_total_loss.28}
  #allocation0 [shape = 'u32[]', space=smem, size = 0x4, offset = 0x4, fixed_abs, tag = 'smem constant byte address 0x4 - core index']
  #allocation1 [shape = 'u32[144,128]{1,0:T(1,128)}', space=vmem, size = 0x12000, scoped, tag = 'internal scratch']
  %s0 = inlined_call_operand.vmem [shape: bf16[2,7,128], index: 0, kind: input, shape index: {}]
  %s1 = inlined_call_operand.vmem [shape: bf16[4,7], index: 1, kind: input, shape index: {}]
  %s2 = inlined_call_operand.vmem [shape: f32[4,1], index: 2, kind: input, shape index: {}]
  %s3 = inlined_call_operand.vmem [shape: f32[2,4,128], index: 3, kind: output, shape index: {0}]
  %s4 = inlined_call_operand.vmem [shape: f32[1,8,128], index: 4, kind: output, shape index: {1}]
  %s5 = inlined_call_operand.hbm [shape: f32[1,8,128], index: 5, kind: output, shape index: {2}]
  %6 = xla_tuple %s3, %s4, %s5
  %s7 = sld [smem:[#allocation0]]
  $region38: #{generator_total_loss.28} parent=0
    _
  %s9 = ssub.s32 1, %s7
  %s10 = scalar_select 0, %s9, %s7
  $region1: #{generator_total_loss.28} parent=0
    #allocation2 [shape = 'u8[4096]{0}', space=vmem, size = 0x1000, scoped, tag = 'output window, operand 2, single buffered']
    #allocation3 [shape = 's32[1]{0}', space=sflag, size = 0x4, scoped, tag = 'scoped memory for generator_total_loss.28']
    %11 = vsyncpa [#allocation3], 0
    // Predicated region
    $region2: #{generator_total_loss.28} parent=1 // pred_check
      _
    $region3: #{generator_total_loss.28} parent=1 // pred_check_branch
      %13 = sbr.rel (0) target = $region5
    $region4: #{generator_total_loss.28} parent=1 // pred_region
      _
    $region5: #{generator_total_loss.28} parent=1 // pred_fallthru
      _
    // Predicated region
    $region6: #{generator_total_loss.28} parent=1 // pred_check
      _
    $region7: #{generator_total_loss.28} parent=1 // pred_check_branch
      %15 = sbr.rel (0) target = $region9
    $region8: #{generator_total_loss.28} parent=1 // pred_region
      _
    $region9: #{generator_total_loss.28} parent=1 // pred_fallthru
      _
    // Predicated region
    $region10: #{generator_total_loss.28} parent=1 // pred_check
      _
    $region11: #{generator_total_loss.28} parent=1 // pred_check_branch
      %17 = sbr.rel (0) target = $region13
    $region12: #{generator_total_loss.28} parent=1 // pred_region
      _
    $region13: #{generator_total_loss.28} parent=1 // pred_fallthru
      _
    %v19 = vld [vmem:[%s1] sm:$0x3]
    %v20 = vld [vmem:[%s2] sm:$0xf]
    %v21 = vld [vmem:[%s0] sm:$0xf]
    %23 = vset.pattern.permute.xlu0 0
    %24 = vperm.xlu0 %23, %v20
    %v25 = vpop.permute.xlu0 %24
    %vm27 = vcmask 56320
    %v29 = vsel %vm27, %v19, 0
    %vm31 = vcmask 1042432
    %vm32 = vcmask 1043456
    %v33 = vsel %vm31, 4294967295, 65535
    %v34 = vsel %vm32, %v33, 0
    %v36 = vand.u32 %v21, %v34
    %38 = vmatprep.subr.bf16.mxu0 0
    %39 = vmatpush1.bf16.msra.mxu0 0
    %40 = vmatprep.subr.bf16.mxu0 0
    %41 = vmatpush1.bf16.msra.mxu0 0
    %42 = vmatprep.subr.bf16.mxu0 0
    %43 = vmatpush1.bf16.msra.mxu0 0
    %44 = vmatprep.subr.bf16.mxu0 0
    %45 = vmatpush1.bf16.msra.mxu0 0
    %46 = vmatprep.subr.bf16.mxu0 0
    %47 = vmatpush1.bf16.msra.mxu0 0
    %48 = vmatprep.subr.bf16.mxu0 0
    %49 = vmatpush1.bf16.msra.mxu0 0
    %50 = vmatprep.subr.bf16.mxu0 0
    %51 = vmatpush1.bf16.msra.mxu0 0
    %52 = vmatprep.subr.bf16.mxu0 0
    %53 = vmatpush1.bf16.msra.mxu0 %v36
    %54 = vmatprep.subr.bf16.mxu0 0
    %55 = vmatpush2.bf16.msra.mxu0 0
    %56 = vmatprep.subr.bf16.mxu0 0
    %57 = vmatpush2.bf16.msra.mxu0 0
    %58 = vmatprep.subr.bf16.mxu0 0
    %59 = vmatpush2.bf16.msra.mxu0 0
    %60 = vmatprep.subr.bf16.mxu0 0
    %61 = vmatpush2.bf16.msra.mxu0 0
    %62 = vmatprep.subr.bf16.mxu0 0
    %63 = vmatpush2.bf16.msra.mxu0 0
    %64 = vmatprep.subr.bf16.mxu0 0
    %65 = vmatpush2.bf16.msra.mxu0 0
    %66 = vmatprep.subr.bf16.mxu0 0
    %67 = vmatpush2.bf16.msra.mxu0 0
    %68 = vmatprep.subr.bf16.mxu0 0
    %69 = vmatpush2.bf16.msra.mxu0 0
    %70 = vmatprep.mubr.bf16.mxu0 0
    %71 = vmatmul.mubr.bf16.gmra.mxu0 %v29
    %v72 = vpop.f32.mrf.mxu0
    %v73 = vadd.f32 %v25, %v72
    %v74 = vpop.f32.mrf.mxu0
    %v75 = vpop.f32.mrf.mxu0
    %v76 = vpop.f32.mrf.mxu0
    %77 = vdwg.mxu0
    %vm78 = vcmp.gt.f32.partialorder %v73, 0.0
    %v79 = vmul.f32 %v73, 0.1
    %v80 = vsel %vm78, %v73, %v79
    %81 = vst [vmem:[%s3] sm:$0xf] %v80
    %s82 = scalar_lea.vmem %s0, 4
    %v83 = vld [vmem:[%s82] sm:$0xf]
    %v85 = vand.u32 %v83, %v34
    %87 = vmatprep.subr.bf16.mxu0 0
    %88 = vmatpush1.bf16.msra.mxu0 0
    %89 = vmatprep.subr.bf16.mxu0 0
    %90 = vmatpush1.bf16.msra.mxu0 0
    %91 = vmatprep.subr.bf16.mxu0 0
    %92 = vmatpush1.bf16.msra.mxu0 0
    %93 = vmatprep.subr.bf16.mxu0 0
    %94 = vmatpush1.bf16.msra.mxu0 0
    %95 = vmatprep.subr.bf16.mxu0 0
    %96 = vmatpush1.bf16.msra.mxu0 0
    %97 = vmatprep.subr.bf16.mxu0 0
    %98 = vmatpush1.bf16.msra.mxu0 0
    %99 = vmatprep.subr.bf16.mxu0 0
    %100 = vmatpush1.bf16.msra.mxu0 0
    %101 = vmatprep.subr.bf16.mxu0 0
    %102 = vmatpush1.bf16.msra.mxu0 %v85
    %103 = vmatprep.subr.bf16.mxu0 0
    %104 = vmatpush2.bf16.msra.mxu0 0
    %105 = vmatprep.subr.bf16.mxu0 0
    %106 = vmatpush2.bf16.msra.mxu0 0
    %107 = vmatprep.subr.bf16.mxu0 0
    %108 = vmatpush2.bf16.msra.mxu0 0
    %109 = vmatprep.subr.bf16.mxu0 0
    %110 = vmatpush2.bf16.msra.mxu0 0
    %111 = vmatprep.subr.bf16.mxu0 0
    %112 = vmatpush2.bf16.msra.mxu0 0
    %113 = vmatprep.subr.bf16.mxu0 0
    %114 = vmatpush2.bf16.msra.mxu0 0
    %115 = vmatprep.subr.bf16.mxu0 0
    %116 = vmatpush2.bf16.msra.mxu0 0
    %117 = vmatprep.subr.bf16.mxu0 0
    %118 = vmatpush2.bf16.msra.mxu0 0
    %119 = vmatprep.mubr.bf16.mxu0 0
    %120 = vmatmul.mubr.bf16.gmra.mxu0 %v29
    %v121 = vpop.f32.mrf.mxu0
    %v122 = vadd.f32 %v25, %v121
    %v123 = vpop.f32.mrf.mxu0
    %v124 = vpop.f32.mrf.mxu0
    %v125 = vpop.f32.mrf.mxu0
    %126 = vdwg.mxu0
    %vm127 = vcmp.gt.f32.partialorder %v122, 0.0
    %v128 = vmul.f32 %v122, 0.1
    %v129 = vsel %vm127, %v122, %v128
    %s130 = scalar_lea.vmem %s3, 4
    %131 = vst [vmem:[%s130] sm:$0xf] %v129
    %v132 = vsub.f32 %v80, %v129
    %v133 = vand.u32 2147483647, %v132
    %v134 = vsel %vm32, %v133, 0.0
    %135 = vadd.xlane.f32.xlu0 %v134
    %v136 = vpop.xlane.xlu0 %135
    %v137 = vrot.slane %v136, 4
    %v138 = vadd.f32 %v136, %v137
    %v139 = vrot.slane %v138, 2
    %v140 = vadd.f32 %v138, %v139
    %v141 = vrot.slane %v140, 1
    %v142 = vadd.f32 %v140, %v141
    %s143 = vtos %v142
    %v144 = vlaneseq
    %v145 = vand.u32 %v144, 127
    %s146 = smul.u32 0, 128
    %v147 = vstv %s146
    %v148 = vadd.s32 %v145, %v147
    %vm149 = vcmp.lt.s32.totalorder %v148, 50
    %v150 = vsel %vm149, 1, 0
    %v151 = vcvt.s32.f32 %v150
    %v152 = vsub.f32 1.0, %v129
    %v153 = vmul.f32 %v152, %v152
    %v154 = vmul.f32 %v153, %v151
    %v155 = vsel %vm32, %v154, 0.0
    %156 = vadd.xlane.f32.xlu0 %v155
    %v157 = vpop.xlane.xlu0 %156
    %v158 = vrot.slane %v157, 4
    %v159 = vadd.f32 %v157, %v158
    %v160 = vrot.slane %v159, 2
    %v161 = vadd.f32 %v159, %v160
    %v162 = vrot.slane %v161, 1
    %v163 = vadd.f32 %v161, %v162
    %s164 = vtos %v163
    %v165 = vstv %s143
    %166 = vst [vmem:[%s4] sm:$0xff] %v165
    %v167 = vstv %s164
    %168 = vst [vmem:[#allocation2] sm:$0xff] %v167
    // Predicated region
    $region14: #{generator_total_loss.28} parent=1 // pred_check
      _
    $region15: #{generator_total_loss.28} parent=1 // pred_check_branch
      %170 = sbr.rel (0) target = $region17
    $region16: #{generator_total_loss.28} parent=1 // pred_region
      _
    $region17: #{generator_total_loss.28} parent=1 // pred_fallthru
      _
    // Predicated region
    $region18: #{generator_total_loss.28} parent=1 // pred_check
      _
    $region19: #{generator_total_loss.28} parent=1 // pred_check_branch
      %172 = sbr.rel (0) target = $region21
    $region20: #{generator_total_loss.28} parent=1 // pred_region
      _
    $region21: #{generator_total_loss.28} parent=1 // pred_fallthru
      _
    // Predicated region
    $region22: #{generator_total_loss.28} parent=1 // pred_check
      _
    $region23: #{generator_total_loss.28} parent=1 // pred_check_branch
      %174 = sbr.rel (0) target = $region25
    $region24: #{generator_total_loss.28} parent=1 // pred_region
      %s176 = ssub.s32 128, 128
      %177 = vsyncadd [#allocation3], %s176
      %s179 = sshll.u32 [#allocation2], 4
      %s180 = int_to_ptr.vmem [resolvable:$true] %s179
      %182 = dma.vmem_to_hbm [thread:$0]  %s180, 128, %s5, [#allocation3]
    $region25: #{generator_total_loss.28} parent=1 // pred_fallthru
      _
    // Predicated region
    $region26: #{generator_total_loss.28} parent=1 // pred_check
      _
    $region27: #{generator_total_loss.28} parent=1 // pred_check_branch
      %184 = sbr.rel (0) target = $region29
    $region28: #{generator_total_loss.28} parent=1 // pred_region
      _
    $region29: #{generator_total_loss.28} parent=1 // pred_fallthru
      _
    // Predicated region
    $region30: #{generator_total_loss.28} parent=1 // pred_check
      _
    $region31: #{generator_total_loss.28} parent=1 // pred_check_branch
      %186 = sbr.rel (0) target = $region33
    $region32: #{generator_total_loss.28} parent=1 // pred_region
      _
    $region33: #{generator_total_loss.28} parent=1 // pred_fallthru
      _
    // Predicated region
    $region34: #{generator_total_loss.28} parent=1 // pred_check
      _
    $region35: #{generator_total_loss.28} parent=1 // pred_check_branch
      %188 = sbr.rel (0) target = $region37
    $region36: #{generator_total_loss.28} parent=1 // pred_region
      %189 = dma.done [#allocation3], 128
    $region37: #{generator_total_loss.28} parent=1 // pred_fallthru
      _
    %190 = vsyncpa [#allocation3], 1

// kernel: squeeze.100
$region0: #{squeeze.100}
  %s0 = inlined_call_operand.vmem [shape: f32[1,1,2,13], index: 0, kind: input, shape index: {}]
  %s1 = inlined_call_operand.vmem [shape: f32[26], index: 1, kind: output, shape index: {}]
  $region1: #{squeeze.100} parent=0
    #allocation0 [shape = 'u8[4096]{0}', space=vmem, size = 0x1000, scoped, tag = 'scoped mem for output reshape']
    #allocation1 [shape = 'u8[4096]{0}', space=vmem, size = 0x1000, scoped, tag = 'scoped mem for input reshape']
    %s3 = sshll.u32 1, 2
    %s4 = ssub.s32 %s3, 1
    %v5 = vld [vmem:[%s0] sm:%s4]
    %6 = vst [vmem:[#allocation1] sm:%s4] %v5
    %v7 = vld [vmem:[#allocation1] sm:$0x1]
    %vm8 = vcmask 105472
    %9 = vst.msk [vmem:[#allocation0] sm:$0x1] %vm8, %v7
    %s10 = scalar_lea.vmem [#allocation1], 1
    %v11 = vld [vmem:[%s10] sm:$0x1]
    %12 = vrot.lane.b32.xlu0 %v11, 13
    %v13 = vpop.permute.xlu0 %12
    %vm14 = vcmask 212072
    %15 = vst.msk [vmem:[#allocation0] sm:$0x1] %vm14, %v13
    %s17 = sshll.u32 1, 1
    %s18 = ssub.s32 %s17, 1
    %v20 = vld [vmem:[#allocation0] sm:%s18]
    %s21 = sshll.u32 1, 1
    %s22 = ssub.s32 %s21, 1
    %23 = vst [vmem:[%s1] sm:%s22] %v20

// kernel: generator_total_loss.29
$region0: #{generator_total_loss.29}
  #allocation0 [shape = 'u32[]', space=smem, size = 0x4, offset = 0x4, fixed_abs, tag = 'smem constant byte address 0x4 - core index']
  #allocation1 [shape = 'u32[144,128]{1,0:T(1,128)}', space=vmem, size = 0x12000, scoped, tag = 'internal scratch']
  %s0 = inlined_call_operand.vmem [shape: bf16[2,28,128], index: 0, kind: input, shape index: {}]
  %s1 = inlined_call_operand.vmem [shape: bf16[8,28], index: 1, kind: input, shape index: {}]
  %s2 = inlined_call_operand.vmem [shape: f32[8,1], index: 2, kind: input, shape index: {}]
  %s3 = inlined_call_operand.vmem [shape: f32[2,8,128], index: 3, kind: output, shape index: {0}]
  %s4 = inlined_call_operand.vmem [shape: f32[1,8,128], index: 4, kind: output, shape index: {1}]
  %s5 = inlined_call_operand.hbm [shape: f32[1,8,128], index: 5, kind: output, shape index: {2}]
  %6 = xla_tuple %s3, %s4, %s5
  %s7 = sld [smem:[#allocation0]]
  $region38: #{generator_total_loss.29} parent=0
    _
  %s9 = ssub.s32 1, %s7
  %s10 = scalar_select 0, %s9, %s7
  $region1: #{generator_total_loss.29} parent=0
    #allocation2 [shape = 'u8[4096]{0}', space=vmem, size = 0x1000, scoped, tag = 'output window, operand 2, single buffered']
    #allocation3 [shape = 's32[1]{0}', space=sflag, size = 0x4, scoped, tag = 'scoped memory for generator_total_loss.29']
    %11 = vsyncpa [#allocation3], 0
    // Predicated region
    $region2: #{generator_total_loss.29} parent=1 // pred_check
      _
    $region3: #{generator_total_loss.29} parent=1 // pred_check_branch
      %13 = sbr.rel (0) target = $region5
    $region4: #{generator_total_loss.29} parent=1 // pred_region
      _
    $region5: #{generator_total_loss.29} parent=1 // pred_fallthru
      _
    // Predicated region
    $region6: #{generator_total_loss.29} parent=1 // pred_check
      _
    $region7: #{generator_total_loss.29} parent=1 // pred_check_branch
      %15 = sbr.rel (0) target = $region9
    $region8: #{generator_total_loss.29} parent=1 // pred_region
      _
    $region9: #{generator_total_loss.29} parent=1 // pred_fallthru
      _
    // Predicated region
    $region10: #{generator_total_loss.29} parent=1 // pred_check
      _
    $region11: #{generator_total_loss.29} parent=1 // pred_check_branch
      %17 = sbr.rel (0) target = $region13
    $region12: #{generator_total_loss.29} parent=1 // pred_region
      _
    $region13: #{generator_total_loss.29} parent=1 // pred_fallthru
      _
    %v19 = vld [vmem:[%s1] sm:$0xf]
    %v20 = vld [vmem:[%s2] sm:$0xff]
    %v21 = vld [vmem:[%s0] sm:$0xf]
    %v22 = vld [vmem:[%s0 + $0x4] sm:$0xf]
    %v23 = vld [vmem:[%s0 + $0x8] sm:$0xf]
    %v24 = vld [vmem:[%s0 + $0xc] sm:$0x3]
    %26 = vset.pattern.permute.xlu0 0
    %27 = vperm.xlu0 %26, %v20
    %v28 = vpop.permute.xlu0 %27
    %v34 = vunpack.c.l.b16 %v21
    %v35 = vunpack.c.l.b16 %v22
    %v36 = vunpack.c.l.b16 %v23
    %v37 = vunpack.c.l.b16 %v24
    %v38 = vpack.c.b16 %v35, %v34
    %v39 = vpack.c.b16 %v37, %v36
    %vm41 = vcmask 228352
    %v43 = vsel %vm41, %v19, 0
    %vm45 = vcmask 1045504
    %v47 = vsel %vm45, %v39, 0
    %49 = vmatprep.subr.bf16.mxu0 0
    %50 = vmatpush1.bf16.msra.mxu0 0
    %51 = vmatprep.subr.bf16.mxu0 0
    %52 = vmatpush1.bf16.msra.mxu0 0
    %53 = vmatprep.subr.bf16.mxu0 0
    %54 = vmatpush1.bf16.msra.mxu0 0
    %55 = vmatprep.subr.bf16.mxu0 0
    %56 = vmatpush1.bf16.msra.mxu0 0
    %57 = vmatprep.subr.bf16.mxu0 0
    %58 = vmatpush1.bf16.msra.mxu0 0
    %59 = vmatprep.subr.bf16.mxu0 0
    %60 = vmatpush1.bf16.msra.mxu0 0
    %61 = vmatprep.subr.bf16.mxu0 0
    %62 = vmatpush1.bf16.msra.mxu0 %v47
    %63 = vmatprep.subr.bf16.mxu0 0
    %64 = vmatpush1.bf16.msra.mxu0 %v38
    %65 = vmatprep.subr.bf16.mxu0 0
    %66 = vmatpush2.bf16.msra.mxu0 0
    %67 = vmatprep.subr.bf16.mxu0 0
    %68 = vmatpush2.bf16.msra.mxu0 0
    %69 = vmatprep.subr.bf16.mxu0 0
    %70 = vmatpush2.bf16.msra.mxu0 0
    %71 = vmatprep.subr.bf16.mxu0 0
    %72 = vmatpush2.bf16.msra.mxu0 0
    %73 = vmatprep.subr.bf16.mxu0 0
    %74 = vmatpush2.bf16.msra.mxu0 0
    %75 = vmatprep.subr.bf16.mxu0 0
    %76 = vmatpush2.bf16.msra.mxu0 0
    %77 = vmatprep.subr.bf16.mxu0 0
    %78 = vmatpush2.bf16.msra.mxu0 0
    %79 = vmatprep.subr.bf16.mxu0 0
    %80 = vmatpush2.bf16.msra.mxu0 0
    %81 = vmatprep.mubr.bf16.mxu0 0
    %82 = vmatmul.mubr.bf16.gmra.mxu0 %v43
    %v83 = vpop.f32.mrf.mxu0
    %v84 = vadd.f32 %v28, %v83
    %v85 = vpop.f32.mrf.mxu0
    %v86 = vpop.f32.mrf.mxu0
    %v87 = vpop.f32.mrf.mxu0
    %88 = vdwg.mxu0
    %vm89 = vcmp.gt.f32.partialorder %v84, 0.0
    %v90 = vmul.f32 %v84, 0.1
    %v91 = vsel %vm89, %v84, %v90
    %92 = vst [vmem:[%s3] sm:$0xff] %v91
    %s93 = scalar_lea.vmem %s0, 16
    %v94 = vld [vmem:[%s93] sm:$0xf]
    %v95 = vld [vmem:[%s93 + $0x4] sm:$0xf]
    %v96 = vld [vmem:[%s93 + $0x8] sm:$0xf]
    %v97 = vld [vmem:[%s93 + $0xc] sm:$0x3]
    %v102 = vunpack.c.l.b16 %v94
    %v103 = vunpack.c.l.b16 %v95
    %v104 = vunpack.c.l.b16 %v96
    %v105 = vunpack.c.l.b16 %v97
    %v106 = vpack.c.b16 %v103, %v102
    %v107 = vpack.c.b16 %v105, %v104
    %v110 = vsel %vm45, %v107, 0
    %112 = vmatprep.subr.bf16.mxu0 0
    %113 = vmatpush1.bf16.msra.mxu0 0
    %114 = vmatprep.subr.bf16.mxu0 0
    %115 = vmatpush1.bf16.msra.mxu0 0
    %116 = vmatprep.subr.bf16.mxu0 0
    %117 = vmatpush1.bf16.msra.mxu0 0
    %118 = vmatprep.subr.bf16.mxu0 0
    %119 = vmatpush1.bf16.msra.mxu0 0
    %120 = vmatprep.subr.bf16.mxu0 0
    %121 = vmatpush1.bf16.msra.mxu0 0
    %122 = vmatprep.subr.bf16.mxu0 0
    %123 = vmatpush1.bf16.msra.mxu0 0
    %124 = vmatprep.subr.bf16.mxu0 0
    %125 = vmatpush1.bf16.msra.mxu0 %v110
    %126 = vmatprep.subr.bf16.mxu0 0
    %127 = vmatpush1.bf16.msra.mxu0 %v106
    %128 = vmatprep.subr.bf16.mxu0 0
    %129 = vmatpush2.bf16.msra.mxu0 0
    %130 = vmatprep.subr.bf16.mxu0 0
    %131 = vmatpush2.bf16.msra.mxu0 0
    %132 = vmatprep.subr.bf16.mxu0 0
    %133 = vmatpush2.bf16.msra.mxu0 0
    %134 = vmatprep.subr.bf16.mxu0 0
    %135 = vmatpush2.bf16.msra.mxu0 0
    %136 = vmatprep.subr.bf16.mxu0 0
    %137 = vmatpush2.bf16.msra.mxu0 0
    %138 = vmatprep.subr.bf16.mxu0 0
    %139 = vmatpush2.bf16.msra.mxu0 0
    %140 = vmatprep.subr.bf16.mxu0 0
    %141 = vmatpush2.bf16.msra.mxu0 0
    %142 = vmatprep.subr.bf16.mxu0 0
    %143 = vmatpush2.bf16.msra.mxu0 0
    %144 = vmatprep.mubr.bf16.mxu0 0
    %145 = vmatmul.mubr.bf16.gmra.mxu0 %v43
    %v146 = vpop.f32.mrf.mxu0
    %v147 = vadd.f32 %v28, %v146
    %v148 = vpop.f32.mrf.mxu0
    %v149 = vpop.f32.mrf.mxu0
    %v150 = vpop.f32.mrf.mxu0
    %151 = vdwg.mxu0
    %vm152 = vcmp.gt.f32.partialorder %v147, 0.0
    %v153 = vmul.f32 %v147, 0.1
    %v154 = vsel %vm152, %v147, %v153
    %s155 = scalar_lea.vmem %s3, 8
    %156 = vst [vmem:[%s155] sm:$0xff] %v154
    %v157 = vsub.f32 %v91, %v154
    %v158 = vand.u32 2147483647, %v157
    %159 = vadd.xlane.f32.xlu0 %v158
    %v160 = vpop.xlane.xlu0 %159
    %v161 = vrot.slane %v160, 4
    %v162 = vadd.f32 %v160, %v161
    %v163 = vrot.slane %v162, 2
    %v164 = vadd.f32 %v162, %v163
    %v165 = vrot.slane %v164, 1
    %v166 = vadd.f32 %v164, %v165
    %s167 = vtos %v166
    %v168 = vlaneseq
    %v169 = vand.u32 %v168, 127
    %s170 = smul.u32 0, 128
    %v171 = vstv %s170
    %v172 = vadd.s32 %v169, %v171
    %vm173 = vcmp.lt.s32.totalorder %v172, 26
    %v174 = vsel %vm173, 1, 0
    %v175 = vcvt.s32.f32 %v174
    %v176 = vsub.f32 1.0, %v154
    %v177 = vmul.f32 %v176, %v176
    %v178 = vmul.f32 %v177, %v175
    %179 = vadd.xlane.f32.xlu0 %v178
    %v180 = vpop.xlane.xlu0 %179
    %v181 = vrot.slane %v180, 4
    %v182 = vadd.f32 %v180, %v181
    %v183 = vrot.slane %v182, 2
    %v184 = vadd.f32 %v182, %v183
    %v185 = vrot.slane %v184, 1
    %v186 = vadd.f32 %v184, %v185
    %s187 = vtos %v186
    %v188 = vstv %s167
    %189 = vst [vmem:[%s4] sm:$0xff] %v188
    %v190 = vstv %s187
    %191 = vst [vmem:[#allocation2] sm:$0xff] %v190
    // Predicated region
    $region14: #{generator_total_loss.29} parent=1 // pred_check
      _
    $region15: #{generator_total_loss.29} parent=1 // pred_check_branch
      %193 = sbr.rel (0) target = $region17
    $region16: #{generator_total_loss.29} parent=1 // pred_region
      _
    $region17: #{generator_total_loss.29} parent=1 // pred_fallthru
      _
    // Predicated region
    $region18: #{generator_total_loss.29} parent=1 // pred_check
      _
    $region19: #{generator_total_loss.29} parent=1 // pred_check_branch
      %195 = sbr.rel (0) target = $region21
    $region20: #{generator_total_loss.29} parent=1 // pred_region
      _
    $region21: #{generator_total_loss.29} parent=1 // pred_fallthru
      _
    // Predicated region
    $region22: #{generator_total_loss.29} parent=1 // pred_check
      _
    $region23: #{generator_total_loss.29} parent=1 // pred_check_branch
      %197 = sbr.rel (0) target = $region25
    $region24: #{generator_total_loss.29} parent=1 // pred_region
      %s199 = ssub.s32 128, 128
      %200 = vsyncadd [#allocation3], %s199
      %s202 = sshll.u32 [#allocation2], 4
      %s203 = int_to_ptr.vmem [resolvable:$true] %s202
      %205 = dma.vmem_to_hbm [thread:$0]  %s203, 128, %s5, [#allocation3]
    $region25: #{generator_total_loss.29} parent=1 // pred_fallthru
      _
    // Predicated region
    $region26: #{generator_total_loss.29} parent=1 // pred_check
      _
    $region27: #{generator_total_loss.29} parent=1 // pred_check_branch
      %207 = sbr.rel (0) target = $region29
    $region28: #{generator_total_loss.29} parent=1 // pred_region
      _
    $region29: #{generator_total_loss.29} parent=1 // pred_fallthru
      _
    // Predicated region
    $region30: #{generator_total_loss.29} parent=1 // pred_check
      _
    $region31: #{generator_total_loss.29} parent=1 // pred_check_branch
      %209 = sbr.rel (0) target = $region33
    $region32: #{generator_total_loss.29} parent=1 // pred_region
      _
    $region33: #{generator_total_loss.29} parent=1 // pred_fallthru
      _
    // Predicated region
    $region34: #{generator_total_loss.29} parent=1 // pred_check
      _
    $region35: #{generator_total_loss.29} parent=1 // pred_check_branch
      %211 = sbr.rel (0) target = $region37
    $region36: #{generator_total_loss.29} parent=1 // pred_region
      %212 = dma.done [#allocation3], 128
    $region37: #{generator_total_loss.29} parent=1 // pred_fallthru
      _
    %213 = vsyncpa [#allocation3], 1

// kernel: generator_total_loss.30
$region0: #{generator_total_loss.30}
  #allocation0 [shape = 'u32[]', space=smem, size = 0x4, offset = 0x4, fixed_abs, tag = 'smem constant byte address 0x4 - core index']
  #allocation1 [shape = 'u32[144,128]{1,0:T(1,128)}', space=vmem, size = 0x12000, scoped, tag = 'internal scratch']
  #allocation2 [shape = 'f32[1,1]{1,0:T(1,128)S(1)}', space=vmem, size = 0x200, scoped, tag = 'scoped memory for generator_total_loss.30']
  %s0 = inlined_call_operand.vmem [shape: bf16[2,24,128], index: 0, kind: input, shape index: {}]
  %s1 = inlined_call_operand.vmem [shape: bf16[1,24], index: 1, kind: input, shape index: {}]
  %s2 = inlined_call_operand.<no memory space> [shape: f32[1,1], index: 2, kind: input, shape index: {}]
  %s3 = inlined_call_operand.vmem [shape: f32[2,1,128], index: 3, kind: output, shape index: {0}]
  %s4 = inlined_call_operand.vmem [shape: f32[1,8,128], index: 4, kind: output, shape index: {1}]
  %s5 = inlined_call_operand.vmem [shape: f32[1,8,128], index: 5, kind: output, shape index: {2}]
  %6 = xla_tuple %s3, %s4, %s5
  %s7 = sld [smem:[#allocation0]]
  $region38: #{generator_total_loss.30} parent=0
    _
  %s9 = ssub.s32 1, %s7
  %s10 = scalar_select 0, %s9, %s7
  %v11 = vstv %s2
  %12 = vst [vmem:[#allocation2] sm:$0x1] %v11
  // Predicated region
  $region2: #{generator_total_loss.30} parent=0 // pred_check
    _
  $region3: #{generator_total_loss.30} parent=0 // pred_check_branch
    %14 = sbr.rel (0) target = $region5
  $region4: #{generator_total_loss.30} parent=0 // pred_region
    _
  $region5: #{generator_total_loss.30} parent=0 // pred_fallthru
    _
  // Predicated region
  $region6: #{generator_total_loss.30} parent=0 // pred_check
    _
  $region7: #{generator_total_loss.30} parent=0 // pred_check_branch
    %16 = sbr.rel (0) target = $region9
  $region8: #{generator_total_loss.30} parent=0 // pred_region
    _
  $region9: #{generator_total_loss.30} parent=0 // pred_fallthru
    _
  // Predicated region
  $region10: #{generator_total_loss.30} parent=0 // pred_check
    _
  $region11: #{generator_total_loss.30} parent=0 // pred_check_branch
    %18 = sbr.rel (0) target = $region13
  $region12: #{generator_total_loss.30} parent=0 // pred_region
    _
  $region13: #{generator_total_loss.30} parent=0 // pred_fallthru
    _
  %v20 = vld [vmem:[%s1] sm:$0x1]
  %v21 = vld [vmem:[#allocation2] sm:$0x1]
  %v22 = vld [vmem:[%s0] sm:$0xf]
  %v23 = vld [vmem:[%s0 + $0x4] sm:$0xf]
  %v24 = vld [vmem:[%s0 + $0x8] sm:$0xf]
  %26 = vset.pattern.permute.xlu0 0
  %27 = vperm.xlu0 %26, %v21
  %v28 = vpop.permute.xlu0 %27
  %v30 = vlaneseq
  %v31 = vshrl.u32 %v30, 7
  %v32 = vsub.s32 0, %v31
  %v33 = vrot.slane %v28, %v32
  %v37 = vunpack.c.l.b16 %v22
  %v38 = vunpack.c.l.b16 %v23
  %v39 = vunpack.c.l.b16 %v24
  %v40 = vpack.c.b16 %v38, %v37
  %v41 = vpack.c.b16 %v39, %v39
  %vm43 = vcmask 195584
  %v45 = vsel %vm43, %v20, 0
  %vm47 = vcmask 1043456
  %v49 = vsel %vm47, %v41, 0
  %51 = vmatprep.subr.bf16.mxu0 0
  %52 = vmatpush1.bf16.msra.mxu0 0
  %53 = vmatprep.subr.bf16.mxu0 0
  %54 = vmatpush1.bf16.msra.mxu0 0
  %55 = vmatprep.subr.bf16.mxu0 0
  %56 = vmatpush1.bf16.msra.mxu0 0
  %57 = vmatprep.subr.bf16.mxu0 0
  %58 = vmatpush1.bf16.msra.mxu0 0
  %59 = vmatprep.subr.bf16.mxu0 0
  %60 = vmatpush1.bf16.msra.mxu0 0
  %61 = vmatprep.subr.bf16.mxu0 0
  %62 = vmatpush1.bf16.msra.mxu0 0
  %63 = vmatprep.subr.bf16.mxu0 0
  %64 = vmatpush1.bf16.msra.mxu0 %v49
  %65 = vmatprep.subr.bf16.mxu0 0
  %66 = vmatpush1.bf16.msra.mxu0 %v40
  %67 = vmatprep.subr.bf16.mxu0 0
  %68 = vmatpush2.bf16.msra.mxu0 0
  %69 = vmatprep.subr.bf16.mxu0 0
  %70 = vmatpush2.bf16.msra.mxu0 0
  %71 = vmatprep.subr.bf16.mxu0 0
  %72 = vmatpush2.bf16.msra.mxu0 0
  %73 = vmatprep.subr.bf16.mxu0 0
  %74 = vmatpush2.bf16.msra.mxu0 0
  %75 = vmatprep.subr.bf16.mxu0 0
  %76 = vmatpush2.bf16.msra.mxu0 0
  %77 = vmatprep.subr.bf16.mxu0 0
  %78 = vmatpush2.bf16.msra.mxu0 0
  %79 = vmatprep.subr.bf16.mxu0 0
  %80 = vmatpush2.bf16.msra.mxu0 0
  %81 = vmatprep.subr.bf16.mxu0 0
  %82 = vmatpush2.bf16.msra.mxu0 0
  %83 = vmatprep.mubr.bf16.mxu0 0
  %84 = vmatmul.mubr.bf16.gmra.mxu0 %v45
  %v85 = vpop.f32.mrf.mxu0
  %v86 = vadd.f32 %v33, %v85
  %v87 = vpop.f32.mrf.mxu0
  %v88 = vpop.f32.mrf.mxu0
  %v89 = vpop.f32.mrf.mxu0
  %90 = vdwg.mxu0
  %91 = vst [vmem:[%s3] sm:$0x1] %v86
  %s92 = scalar_lea.vmem %s0, 12
  %v93 = vld [vmem:[%s92] sm:$0xf]
  %v94 = vld [vmem:[%s92 + $0x4] sm:$0xf]
  %v95 = vld [vmem:[%s92 + $0x8] sm:$0xf]
  %v99 = vunpack.c.l.b16 %v93
  %v100 = vunpack.c.l.b16 %v94
  %v101 = vunpack.c.l.b16 %v95
  %v102 = vpack.c.b16 %v100, %v99
  %v103 = vpack.c.b16 %v101, %v101
  %v106 = vsel %vm47, %v103, 0
  %108 = vmatprep.subr.bf16.mxu0 0
  %109 = vmatpush1.bf16.msra.mxu0 0
  %110 = vmatprep.subr.bf16.mxu0 0
  %111 = vmatpush1.bf16.msra.mxu0 0
  %112 = vmatprep.subr.bf16.mxu0 0
  %113 = vmatpush1.bf16.msra.mxu0 0
  %114 = vmatprep.subr.bf16.mxu0 0
  %115 = vmatpush1.bf16.msra.mxu0 0
  %116 = vmatprep.subr.bf16.mxu0 0
  %117 = vmatpush1.bf16.msra.mxu0 0
  %118 = vmatprep.subr.bf16.mxu0 0
  %119 = vmatpush1.bf16.msra.mxu0 0
  %120 = vmatprep.subr.bf16.mxu0 0
  %121 = vmatpush1.bf16.msra.mxu0 %v106
  %122 = vmatprep.subr.bf16.mxu0 0
  %123 = vmatpush1.bf16.msra.mxu0 %v102
  %124 = vmatprep.subr.bf16.mxu0 0
  %125 = vmatpush2.bf16.msra.mxu0 0
  %126 = vmatprep.subr.bf16.mxu0 0
  %127 = vmatpush2.bf16.msra.mxu0 0
  %128 = vmatprep.subr.bf16.mxu0 0
  %129 = vmatpush2.bf16.msra.mxu0 0
  %130 = vmatprep.subr.bf16.mxu0 0
  %131 = vmatpush2.bf16.msra.mxu0 0
  %132 = vmatprep.subr.bf16.mxu0 0
  %133 = vmatpush2.bf16.msra.mxu0 0
  %134 = vmatprep.subr.bf16.mxu0 0
  %135 = vmatpush2.bf16.msra.mxu0 0
  %136 = vmatprep.subr.bf16.mxu0 0
  %137 = vmatpush2.bf16.msra.mxu0 0
  %138 = vmatprep.subr.bf16.mxu0 0
  %139 = vmatpush2.bf16.msra.mxu0 0
  %140 = vmatprep.mubr.bf16.mxu0 0
  %141 = vmatmul.mubr.bf16.gmra.mxu0 %v45
  %v142 = vpop.f32.mrf.mxu0
  %v143 = vadd.f32 %v33, %v142
  %v144 = vpop.f32.mrf.mxu0
  %v145 = vpop.f32.mrf.mxu0
  %v146 = vpop.f32.mrf.mxu0
  %147 = vdwg.mxu0
  %s148 = scalar_lea.vmem %s3, 1
  %149 = vst [vmem:[%s148] sm:$0x1] %v143
  %v150 = vsub.f32 %v86, %v143
  %v151 = vand.u32 2147483647, %v150
  %vm152 = vcmask 1040384
  %v153 = vsel %vm152, %v151, 0.0
  %154 = vadd.xlane.f32.xlu0 %v153
  %v155 = vpop.xlane.xlu0 %154
  %v156 = vrot.slane %v155, 4
  %v157 = vadd.f32 %v155, %v156
  %v158 = vrot.slane %v157, 2
  %v159 = vadd.f32 %v157, %v158
  %v160 = vrot.slane %v159, 1
  %v161 = vadd.f32 %v159, %v160
  %s162 = vtos %v161
  %v163 = vlaneseq
  %v164 = vand.u32 %v163, 127
  %s165 = smul.u32 0, 128
  %v166 = vstv %s165
  %v167 = vadd.s32 %v164, %v166
  %vm168 = vcmp.lt.s32.totalorder %v167, 26
  %v169 = vsel %vm168, 1, 0
  %v170 = vcvt.s32.f32 %v169
  %v171 = vsub.f32 1.0, %v143
  %v172 = vmul.f32 %v171, %v171
  %v173 = vmul.f32 %v172, %v170
  %v174 = vsel %vm152, %v173, 0.0
  %175 = vadd.xlane.f32.xlu0 %v174
  %v176 = vpop.xlane.xlu0 %175
  %v177 = vrot.slane %v176, 4
  %v178 = vadd.f32 %v176, %v177
  %v179 = vrot.slane %v178, 2
  %v180 = vadd.f32 %v178, %v179
  %v181 = vrot.slane %v180, 1
  %v182 = vadd.f32 %v180, %v181
  %s183 = vtos %v182
  %v184 = vstv %s162
  %185 = vst [vmem:[%s4] sm:$0xff] %v184
  %v186 = vstv %s183
  %187 = vst [vmem:[%s5] sm:$0xff] %v186
  // Predicated region
  $region14: #{generator_total_loss.30} parent=0 // pred_check
    _
  $region15: #{generator_total_loss.30} parent=0 // pred_check_branch
    %189 = sbr.rel (0) target = $region17
  $region16: #{generator_total_loss.30} parent=0 // pred_region
    _
  $region17: #{generator_total_loss.30} parent=0 // pred_fallthru
    _
  // Predicated region
  $region18: #{generator_total_loss.30} parent=0 // pred_check
    _
  $region19: #{generator_total_loss.30} parent=0 // pred_check_branch
    %191 = sbr.rel (0) target = $region21
  $region20: #{generator_total_loss.30} parent=0 // pred_region
    _
  $region21: #{generator_total_loss.30} parent=0 // pred_fallthru
    _
  // Predicated region
  $region22: #{generator_total_loss.30} parent=0 // pred_check
    _
  $region23: #{generator_total_loss.30} parent=0 // pred_check_branch
    %193 = sbr.rel (0) target = $region25
  $region24: #{generator_total_loss.30} parent=0 // pred_region
    _
  $region25: #{generator_total_loss.30} parent=0 // pred_fallthru
    _
  // Predicated region
  $region26: #{generator_total_loss.30} parent=0 // pred_check
    _
  $region27: #{generator_total_loss.30} parent=0 // pred_check_branch
    %195 = sbr.rel (0) target = $region29
  $region28: #{generator_total_loss.30} parent=0 // pred_region
    _
  $region29: #{generator_total_loss.30} parent=0 // pred_fallthru
    _
  // Predicated region
  $region30: #{generator_total_loss.30} parent=0 // pred_check
    _
  $region31: #{generator_total_loss.30} parent=0 // pred_check_branch
    %197 = sbr.rel (0) target = $region33
  $region32: #{generator_total_loss.30} parent=0 // pred_region
    _
  $region33: #{generator_total_loss.30} parent=0 // pred_fallthru
    _
  // Predicated region
  $region34: #{generator_total_loss.30} parent=0 // pred_check
    _
  $region35: #{generator_total_loss.30} parent=0 // pred_check_branch
    %199 = sbr.rel (0) target = $region37
  $region36: #{generator_total_loss.30} parent=0 // pred_region
    _
  $region37: #{generator_total_loss.30} parent=0 // pred_fallthru
    _

// kernel: generator_total_loss.31
$region0: #{generator_total_loss.31}
  #allocation0 [shape = 'u32[]', space=smem, size = 0x4, offset = 0x4, fixed_abs, tag = 'smem constant byte address 0x4 - core index']
  #allocation1 [shape = 'u32[144,128]{1,0:T(1,128)}', space=vmem, size = 0x12000, scoped, tag = 'internal scratch']
  #allocation2 [shape = 'f32[1,1]{1,0:T(1,128)S(1)}', space=vmem, size = 0x200, scoped, tag = 'scoped memory for generator_total_loss.31']
  %s0 = inlined_call_operand.<no memory space> [shape: f32[1,1], index: 0, kind: input, shape index: {}]
  %s1 = inlined_call_operand.vmem [shape: f32[8,128], index: 1, kind: input, shape index: {}]
  %s2 = inlined_call_operand.vmem [shape: f32[1,8,128], index: 2, kind: output, shape index: {0}]
  %s3 = inlined_call_operand.vmem [shape: f32[1,8,128], index: 3, kind: output, shape index: {1}]
  %4 = xla_tuple %s2, %s3
  %s5 = sld [smem:[#allocation0]]
  $region26: #{generator_total_loss.31} parent=0
    _
  %s7 = ssub.s32 1, %s5
  %s8 = scalar_select 0, %s7, %s5
  %v9 = vstv %s0
  %10 = vst [vmem:[#allocation2] sm:$0x1] %v9
  // Predicated region
  $region2: #{generator_total_loss.31} parent=0 // pred_check
    _
  $region3: #{generator_total_loss.31} parent=0 // pred_check_branch
    %12 = sbr.rel (0) target = $region5
  $region4: #{generator_total_loss.31} parent=0 // pred_region
    _
  $region5: #{generator_total_loss.31} parent=0 // pred_fallthru
    _
  // Predicated region
  $region6: #{generator_total_loss.31} parent=0 // pred_check
    _
  $region7: #{generator_total_loss.31} parent=0 // pred_check_branch
    %14 = sbr.rel (0) target = $region9
  $region8: #{generator_total_loss.31} parent=0 // pred_region
    _
  $region9: #{generator_total_loss.31} parent=0 // pred_fallthru
    _
  %v15 = vld [vmem:[%s1] sm:$0xff]
  %v16 = vld [vmem:[#allocation2] sm:$0x1]
  %s17 = smul.u32 0, 1024
  %v18 = vlaneseq
  %v19 = vshrl.u32 %v18, 7
  %v20 = vmul.u32 %v19, 128
  %v21 = vstv %s17
  %v22 = vadd.s32 %v21, %v20
  %v23 = vlaneseq
  %v24 = vand.u32 %v23, 127
  %v25 = vadd.s32 %v22, %v24
  %v27 = vlaneseq
  %v28 = vshrl.u32 %v27, 7
  %v29 = vsub.s32 0, %v28
  %v30 = vrot.slane %v16, %v29
  %31 = vset.pattern.permute.xlu0 0
  %32 = vperm.xlu0 %31, %v30
  %v33 = vpop.permute.xlu0 %32
  %vm35 = vcmp.lt.f32.partialorder %v15, %v33
  %vm36 = vcmp.lt.s32.totalorder %v25, 26
  %vm37 = vmand %vm35, %vm36
  %v38 = vsub.f32 %v15, %v33
  %v39 = vmul.f32 %v38, %v38
  %v40 = vsel %vm37, %v39, 0.0
  %41 = vadd.xlane.f32.xlu0 %v40
  %v42 = vpop.xlane.xlu0 %41
  %v43 = vrot.slane %v42, 4
  %v44 = vadd.f32 %v42, %v43
  %v45 = vrot.slane %v44, 2
  %v46 = vadd.f32 %v44, %v45
  %v47 = vrot.slane %v46, 1
  %v48 = vadd.f32 %v46, %v47
  %s49 = vtos %v48
  %v50 = vsel %vm37, 1, 0
  %v51 = vcvt.s32.f32 %v50
  %52 = vadd.xlane.f32.xlu0 %v51
  %v53 = vpop.xlane.xlu0 %52
  %v54 = vrot.slane %v53, 4
  %v55 = vadd.f32 %v53, %v54
  %v56 = vrot.slane %v55, 2
  %v57 = vadd.f32 %v55, %v56
  %v58 = vrot.slane %v57, 1
  %v59 = vadd.f32 %v57, %v58
  %s60 = vtos %v59
  %v61 = vstv %s49
  %62 = vst [vmem:[%s2] sm:$0xff] %v61
  %v63 = vstv %s60
  %64 = vst [vmem:[%s3] sm:$0xff] %v63
  // Predicated region
  $region10: #{generator_total_loss.31} parent=0 // pred_check
    _
  $region11: #{generator_total_loss.31} parent=0 // pred_check_branch
    %66 = sbr.rel (0) target = $region13
  $region12: #{generator_total_loss.31} parent=0 // pred_region
    _
  $region13: #{generator_total_loss.31} parent=0 // pred_fallthru
    _
  // Predicated region
  $region14: #{generator_total_loss.31} parent=0 // pred_check
    _
  $region15: #{generator_total_loss.31} parent=0 // pred_check_branch
    %68 = sbr.rel (0) target = $region17
  $region16: #{generator_total_loss.31} parent=0 // pred_region
    _
  $region17: #{generator_total_loss.31} parent=0 // pred_fallthru
    _
  // Predicated region
  $region18: #{generator_total_loss.31} parent=0 // pred_check
    _
  $region19: #{generator_total_loss.31} parent=0 // pred_check_branch
    %70 = sbr.rel (0) target = $region21
  $region20: #{generator_total_loss.31} parent=0 // pred_region
    _
  $region21: #{generator_total_loss.31} parent=0 // pred_fallthru
    _
  // Predicated region
  $region22: #{generator_total_loss.31} parent=0 // pred_check
    _
  $region23: #{generator_total_loss.31} parent=0 // pred_check_branch
    %72 = sbr.rel (0) target = $region25
  $region24: #{generator_total_loss.31} parent=0 // pred_region
    _
  $region25: #{generator_total_loss.31} parent=0 // pred_fallthru
    _

// kernel: squeeze.79
$region0: #{squeeze.79}
  %s0 = inlined_call_operand.vmem [shape: bf16[1,4,96], index: 0, kind: input, shape index: {}]
  %s1 = inlined_call_operand.vmem [shape: bf16[4,2,48], index: 1, kind: output, shape index: {}]
  $region1: #{squeeze.79} parent=0
    #allocation0 [shape = 'u8[16384]{0}', space=vmem, size = 0x4000, scoped, tag = 'scoped mem for output reshape']
    #allocation1 [shape = 'u8[4096]{0}', space=vmem, size = 0x1000, scoped, tag = 'scoped mem for input reshape']
    %s3 = smul.u32 2, 2
    %s4 = sshll.u32 1, %s3
    %s5 = ssub.s32 %s4, 1
    %s6 = sshrl.u32 %s5, 1
    %s7 = sor.u32 %s5, %s6
    %s8 = sand.u32 %s7, 85
    %s9 = sshrl.u32 %s8, 1
    %s10 = sor.u32 %s8, %s9
    %s11 = sand.u32 51, %s10
    %s12 = sshrl.u32 %s11, 2
    %s13 = sor.u32 %s11, %s12
    %s14 = sand.u32 15, %s13
    %v15 = vld [vmem:[%s0] sm:%s14]
    %v16 = vunpack.c.l.bf16 %v15
    %v17 = vunpack.c.h.bf16 %v15
    %18 = vst [vmem:[#allocation1] sm:%s5] %v16
    %v19 = vld [vmem:[#allocation1] sm:$0xf]
    %vm20 = vcmask 392192
    %21 = vst.msk [vmem:[#allocation0] ss:$8 sm:$0xf] %vm20, %v19
    %v22 = vld [vmem:[#allocation1] sm:$0xf]
    %23 = vrot.lane.b32.xlu0 %v22, 80
    %v24 = vpop.permute.xlu0 %23
    %vm25 = vcmask 392192
    %s26 = scalar_lea.vmem [#allocation0], 1
    %27 = vst.msk [vmem:[%s26] ss:$8 sm:$0xf] %vm25, %v24
    %s29 = smul.u32 1, 2
    %s30 = sshll.u32 1, %s29
    %s31 = ssub.s32 %s30, 1
    %s32 = sshrl.u32 %s29, 1
    %v33 = vld [vmem:[#allocation0] sm:%s31]
    %v34 = vpack.c.bf16 0.0, %v33
    %s35 = sshll.u32 1, %s32
    %s36 = ssub.s32 %s35, 1
    %37 = vst [vmem:[%s1] sm:%s36] %v34
    %s38 = scalar_lea.vmem [#allocation0], 8
    %v39 = vld [vmem:[%s38] sm:%s31]
    %v40 = vpack.c.bf16 0.0, %v39
    %s41 = sshll.u32 1, %s32
    %s42 = ssub.s32 %s41, 1
    %s43 = scalar_lea.vmem %s1, 1
    %44 = vst [vmem:[%s43] sm:%s42] %v40
    %s45 = scalar_lea.vmem [#allocation0], 16
    %v46 = vld [vmem:[%s45] sm:%s31]
    %v47 = vpack.c.bf16 0.0, %v46
    %s48 = sshll.u32 1, %s32
    %s49 = ssub.s32 %s48, 1
    %s50 = smul.addr 1, 2
    %s51 = scalar_lea.vmem %s1, %s50
    %52 = vst [vmem:[%s51] sm:%s49] %v47
    %s53 = scalar_lea.vmem [#allocation0], 24
    %v54 = vld [vmem:[%s53] sm:%s31]
    %v55 = vpack.c.bf16 0.0, %v54
    %s56 = sshll.u32 1, %s32
    %s57 = ssub.s32 %s56, 1
    %s58 = smul.addr 1, 3
    %s59 = scalar_lea.vmem %s1, %s58
    %60 = vst [vmem:[%s59] sm:%s57] %v55

// kernel: generator_total_loss.24
$region0: #{generator_total_loss.24}
  #allocation0 [shape = 'u32[]', space=smem, size = 0x4, offset = 0x4, fixed_abs, tag = 'smem constant byte address 0x4 - core index']
  #allocation1 [shape = 'u32[144,128]{1,0:T(1,128)}', space=vmem, size = 0x12000, scoped, tag = 'internal scratch']
  %s0 = inlined_call_operand.vmem [shape: bf16[2,7,128], index: 0, kind: input, shape index: {}]
  %s1 = inlined_call_operand.vmem [shape: bf16[4,7], index: 1, kind: input, shape index: {}]
  %s2 = inlined_call_operand.vmem [shape: f32[4,1], index: 2, kind: input, shape index: {}]
  %s3 = inlined_call_operand.vmem [shape: f32[2,4,128], index: 3, kind: output, shape index: {0}]
  %s4 = inlined_call_operand.vmem [shape: f32[1,8,128], index: 4, kind: output, shape index: {1}]
  %s5 = inlined_call_operand.hbm [shape: f32[1,8,128], index: 5, kind: output, shape index: {2}]
  %6 = xla_tuple %s3, %s4, %s5
  %s7 = sld [smem:[#allocation0]]
  $region38: #{generator_total_loss.24} parent=0
    _
  %s9 = ssub.s32 1, %s7
  %s10 = scalar_select 0, %s9, %s7
  $region1: #{generator_total_loss.24} parent=0
    #allocation2 [shape = 'u8[4096]{0}', space=vmem, size = 0x1000, scoped, tag = 'output window, operand 2, single buffered']
    #allocation3 [shape = 's32[1]{0}', space=sflag, size = 0x4, scoped, tag = 'scoped memory for generator_total_loss.24']
    %11 = vsyncpa [#allocation3], 0
    // Predicated region
    $region2: #{generator_total_loss.24} parent=1 // pred_check
      _
    $region3: #{generator_total_loss.24} parent=1 // pred_check_branch
      %13 = sbr.rel (0) target = $region5
    $region4: #{generator_total_loss.24} parent=1 // pred_region
      _
    $region5: #{generator_total_loss.24} parent=1 // pred_fallthru
      _
    // Predicated region
    $region6: #{generator_total_loss.24} parent=1 // pred_check
      _
    $region7: #{generator_total_loss.24} parent=1 // pred_check_branch
      %15 = sbr.rel (0) target = $region9
    $region8: #{generator_total_loss.24} parent=1 // pred_region
      _
    $region9: #{generator_total_loss.24} parent=1 // pred_fallthru
      _
    // Predicated region
    $region10: #{generator_total_loss.24} parent=1 // pred_check
      _
    $region11: #{generator_total_loss.24} parent=1 // pred_check_branch
      %17 = sbr.rel (0) target = $region13
    $region12: #{generator_total_loss.24} parent=1 // pred_region
      _
    $region13: #{generator_total_loss.24} parent=1 // pred_fallthru
      _
    %v19 = vld [vmem:[%s1] sm:$0x3]
    %v20 = vld [vmem:[%s2] sm:$0xf]
    %v21 = vld [vmem:[%s0] sm:$0xf]
    %23 = vset.pattern.permute.xlu0 0
    %24 = vperm.xlu0 %23, %v20
    %v25 = vpop.permute.xlu0 %24
    %vm27 = vcmask 56320
    %v29 = vsel %vm27, %v19, 0
    %vm31 = vcmask 1042432
    %vm32 = vcmask 1043456
    %v33 = vsel %vm31, 4294967295, 65535
    %v34 = vsel %vm32, %v33, 0
    %v36 = vand.u32 %v21, %v34
    %38 = vmatprep.subr.bf16.mxu0 0
    %39 = vmatpush1.bf16.msra.mxu0 0
    %40 = vmatprep.subr.bf16.mxu0 0
    %41 = vmatpush1.bf16.msra.mxu0 0
    %42 = vmatprep.subr.bf16.mxu0 0
    %43 = vmatpush1.bf16.msra.mxu0 0
    %44 = vmatprep.subr.bf16.mxu0 0
    %45 = vmatpush1.bf16.msra.mxu0 0
    %46 = vmatprep.subr.bf16.mxu0 0
    %47 = vmatpush1.bf16.msra.mxu0 0
    %48 = vmatprep.subr.bf16.mxu0 0
    %49 = vmatpush1.bf16.msra.mxu0 0
    %50 = vmatprep.subr.bf16.mxu0 0
    %51 = vmatpush1.bf16.msra.mxu0 0
    %52 = vmatprep.subr.bf16.mxu0 0
    %53 = vmatpush1.bf16.msra.mxu0 %v36
    %54 = vmatprep.subr.bf16.mxu0 0
    %55 = vmatpush2.bf16.msra.mxu0 0
    %56 = vmatprep.subr.bf16.mxu0 0
    %57 = vmatpush2.bf16.msra.mxu0 0
    %58 = vmatprep.subr.bf16.mxu0 0
    %59 = vmatpush2.bf16.msra.mxu0 0
    %60 = vmatprep.subr.bf16.mxu0 0
    %61 = vmatpush2.bf16.msra.mxu0 0
    %62 = vmatprep.subr.bf16.mxu0 0
    %63 = vmatpush2.bf16.msra.mxu0 0
    %64 = vmatprep.subr.bf16.mxu0 0
    %65 = vmatpush2.bf16.msra.mxu0 0
    %66 = vmatprep.subr.bf16.mxu0 0
    %67 = vmatpush2.bf16.msra.mxu0 0
    %68 = vmatprep.subr.bf16.mxu0 0
    %69 = vmatpush2.bf16.msra.mxu0 0
    %70 = vmatprep.mubr.bf16.mxu0 0
    %71 = vmatmul.mubr.bf16.gmra.mxu0 %v29
    %v72 = vpop.f32.mrf.mxu0
    %v73 = vadd.f32 %v25, %v72
    %v74 = vpop.f32.mrf.mxu0
    %v75 = vpop.f32.mrf.mxu0
    %v76 = vpop.f32.mrf.mxu0
    %77 = vdwg.mxu0
    %vm78 = vcmp.gt.f32.partialorder %v73, 0.0
    %v79 = vmul.f32 %v73, 0.1
    %v80 = vsel %vm78, %v73, %v79
    %81 = vst [vmem:[%s3] sm:$0xf] %v80
    %s82 = scalar_lea.vmem %s0, 4
    %v83 = vld [vmem:[%s82] sm:$0xf]
    %v85 = vand.u32 %v83, %v34
    %87 = vmatprep.subr.bf16.mxu0 0
    %88 = vmatpush1.bf16.msra.mxu0 0
    %89 = vmatprep.subr.bf16.mxu0 0
    %90 = vmatpush1.bf16.msra.mxu0 0
    %91 = vmatprep.subr.bf16.mxu0 0
    %92 = vmatpush1.bf16.msra.mxu0 0
    %93 = vmatprep.subr.bf16.mxu0 0
    %94 = vmatpush1.bf16.msra.mxu0 0
    %95 = vmatprep.subr.bf16.mxu0 0
    %96 = vmatpush1.bf16.msra.mxu0 0
    %97 = vmatprep.subr.bf16.mxu0 0
    %98 = vmatpush1.bf16.msra.mxu0 0
    %99 = vmatprep.subr.bf16.mxu0 0
    %100 = vmatpush1.bf16.msra.mxu0 0
    %101 = vmatprep.subr.bf16.mxu0 0
    %102 = vmatpush1.bf16.msra.mxu0 %v85
    %103 = vmatprep.subr.bf16.mxu0 0
    %104 = vmatpush2.bf16.msra.mxu0 0
    %105 = vmatprep.subr.bf16.mxu0 0
    %106 = vmatpush2.bf16.msra.mxu0 0
    %107 = vmatprep.subr.bf16.mxu0 0
    %108 = vmatpush2.bf16.msra.mxu0 0
    %109 = vmatprep.subr.bf16.mxu0 0
    %110 = vmatpush2.bf16.msra.mxu0 0
    %111 = vmatprep.subr.bf16.mxu0 0
    %112 = vmatpush2.bf16.msra.mxu0 0
    %113 = vmatprep.subr.bf16.mxu0 0
    %114 = vmatpush2.bf16.msra.mxu0 0
    %115 = vmatprep.subr.bf16.mxu0 0
    %116 = vmatpush2.bf16.msra.mxu0 0
    %117 = vmatprep.subr.bf16.mxu0 0
    %118 = vmatpush2.bf16.msra.mxu0 0
    %119 = vmatprep.mubr.bf16.mxu0 0
    %120 = vmatmul.mubr.bf16.gmra.mxu0 %v29
    %v121 = vpop.f32.mrf.mxu0
    %v122 = vadd.f32 %v25, %v121
    %v123 = vpop.f32.mrf.mxu0
    %v124 = vpop.f32.mrf.mxu0
    %v125 = vpop.f32.mrf.mxu0
    %126 = vdwg.mxu0
    %vm127 = vcmp.gt.f32.partialorder %v122, 0.0
    %v128 = vmul.f32 %v122, 0.1
    %v129 = vsel %vm127, %v122, %v128
    %s130 = scalar_lea.vmem %s3, 4
    %131 = vst [vmem:[%s130] sm:$0xf] %v129
    %v132 = vsub.f32 %v80, %v129
    %v133 = vand.u32 2147483647, %v132
    %v134 = vsel %vm32, %v133, 0.0
    %135 = vadd.xlane.f32.xlu0 %v134
    %v136 = vpop.xlane.xlu0 %135
    %v137 = vrot.slane %v136, 4
    %v138 = vadd.f32 %v136, %v137
    %v139 = vrot.slane %v138, 2
    %v140 = vadd.f32 %v138, %v139
    %v141 = vrot.slane %v140, 1
    %v142 = vadd.f32 %v140, %v141
    %s143 = vtos %v142
    %v144 = vlaneseq
    %v145 = vand.u32 %v144, 127
    %s146 = smul.u32 0, 128
    %v147 = vstv %s146
    %v148 = vadd.s32 %v145, %v147
    %vm149 = vcmp.lt.s32.totalorder %v148, 96
    %v150 = vsel %vm149, 1, 0
    %v151 = vcvt.s32.f32 %v150
    %v152 = vsub.f32 1.0, %v129
    %v153 = vmul.f32 %v152, %v152
    %v154 = vmul.f32 %v153, %v151
    %v155 = vsel %vm32, %v154, 0.0
    %156 = vadd.xlane.f32.xlu0 %v155
    %v157 = vpop.xlane.xlu0 %156
    %v158 = vrot.slane %v157, 4
    %v159 = vadd.f32 %v157, %v158
    %v160 = vrot.slane %v159, 2
    %v161 = vadd.f32 %v159, %v160
    %v162 = vrot.slane %v161, 1
    %v163 = vadd.f32 %v161, %v162
    %s164 = vtos %v163
    %v165 = vstv %s143
    %166 = vst [vmem:[%s4] sm:$0xff] %v165
    %v167 = vstv %s164
    %168 = vst [vmem:[#allocation2] sm:$0xff] %v167
    // Predicated region
    $region14: #{generator_total_loss.24} parent=1 // pred_check
      _
    $region15: #{generator_total_loss.24} parent=1 // pred_check_branch
      %170 = sbr.rel (0) target = $region17
    $region16: #{generator_total_loss.24} parent=1 // pred_region
      _
    $region17: #{generator_total_loss.24} parent=1 // pred_fallthru
      _
    // Predicated region
    $region18: #{generator_total_loss.24} parent=1 // pred_check
      _
    $region19: #{generator_total_loss.24} parent=1 // pred_check_branch
      %172 = sbr.rel (0) target = $region21
    $region20: #{generator_total_loss.24} parent=1 // pred_region
      _
    $region21: #{generator_total_loss.24} parent=1 // pred_fallthru
      _
    // Predicated region
    $region22: #{generator_total_loss.24} parent=1 // pred_check
      _
    $region23: #{generator_total_loss.24} parent=1 // pred_check_branch
      %174 = sbr.rel (0) target = $region25
    $region24: #{generator_total_loss.24} parent=1 // pred_region
      %s176 = ssub.s32 128, 128
      %177 = vsyncadd [#allocation3], %s176
      %s179 = sshll.u32 [#allocation2], 4
      %s180 = int_to_ptr.vmem [resolvable:$true] %s179
      %182 = dma.vmem_to_hbm [thread:$0]  %s180, 128, %s5, [#allocation3]
    $region25: #{generator_total_loss.24} parent=1 // pred_fallthru
      _
    // Predicated region
    $region26: #{generator_total_loss.24} parent=1 // pred_check
      _
    $region27: #{generator_total_loss.24} parent=1 // pred_check_branch
      %184 = sbr.rel (0) target = $region29
    $region28: #{generator_total_loss.24} parent=1 // pred_region
      _
    $region29: #{generator_total_loss.24} parent=1 // pred_fallthru
      _
    // Predicated region
    $region30: #{generator_total_loss.24} parent=1 // pred_check
      _
    $region31: #{generator_total_loss.24} parent=1 // pred_check_branch
      %186 = sbr.rel (0) target = $region33
    $region32: #{generator_total_loss.24} parent=1 // pred_region
      _
    $region33: #{generator_total_loss.24} parent=1 // pred_fallthru
      _
    // Predicated region
    $region34: #{generator_total_loss.24} parent=1 // pred_check
      _
    $region35: #{generator_total_loss.24} parent=1 // pred_check_branch
      %188 = sbr.rel (0) target = $region37
    $region36: #{generator_total_loss.24} parent=1 // pred_region
      %189 = dma.done [#allocation3], 128
    $region37: #{generator_total_loss.24} parent=1 // pred_fallthru
      _
    %190 = vsyncpa [#allocation3], 1

// kernel: squeeze.82
$region0: #{squeeze.82}
  %s0 = inlined_call_operand.vmem [shape: bf16[1,8,48], index: 0, kind: input, shape index: {}]
  %s1 = inlined_call_operand.vmem [shape: bf16[8,2,24], index: 1, kind: output, shape index: {}]
  $region1: #{squeeze.82} parent=0
    #allocation0 [shape = 'u8[32768]{0}', space=vmem, size = 0x8000, scoped, tag = 'scoped mem for output reshape']
    #allocation1 [shape = 'u8[4096]{0}', space=vmem, size = 0x1000, scoped, tag = 'scoped mem for input reshape']
    %s3 = smul.u32 4, 2
    %s4 = sshll.u32 1, %s3
    %s5 = ssub.s32 %s4, 1
    %s6 = sshrl.u32 %s5, 1
    %s7 = sor.u32 %s5, %s6
    %s8 = sand.u32 %s7, 85
    %s9 = sshrl.u32 %s8, 1
    %s10 = sor.u32 %s8, %s9
    %s11 = sand.u32 51, %s10
    %s12 = sshrl.u32 %s11, 2
    %s13 = sor.u32 %s11, %s12
    %s14 = sand.u32 15, %s13
    %v15 = vld [vmem:[%s0] sm:%s14]
    %v16 = vunpack.c.l.bf16 %v15
    %v17 = vunpack.c.h.bf16 %v15
    %18 = vst [vmem:[#allocation1] sm:%s5] %v16
    %v19 = vld [vmem:[#allocation1] sm:$0xff]
    %vm20 = vcmask 195584
    %21 = vst.msk [vmem:[#allocation0] ss:$8 sm:$0xf] %vm20, %v19
    %22 = vst.msk [vmem:[#allocation0] ss:$8 sm:$0xf0] %vm20, %v19
    %v23 = vld [vmem:[#allocation1] sm:$0xff]
    %24 = vrot.lane.b32.xlu0 %v23, 104
    %v25 = vpop.permute.xlu0 %24
    %vm26 = vcmask 195584
    %s27 = scalar_lea.vmem [#allocation0], 1
    %28 = vst.msk [vmem:[%s27] ss:$8 sm:$0xf] %vm26, %v25
    %s29 = scalar_lea.vmem [#allocation0], 1
    %30 = vst.msk [vmem:[%s29] ss:$8 sm:$0xf0] %vm26, %v25
    %s32 = smul.u32 1, 2
    %s33 = sshll.u32 1, %s32
    %s34 = ssub.s32 %s33, 1
    %s35 = sshrl.u32 %s32, 1
    %v36 = vld [vmem:[#allocation0] sm:%s34]
    %v37 = vpack.c.bf16 0.0, %v36
    %s38 = sshll.u32 1, %s35
    %s39 = ssub.s32 %s38, 1
    %40 = vst [vmem:[%s1] sm:%s39] %v37
    %s41 = scalar_lea.vmem [#allocation0], 8
    %v42 = vld [vmem:[%s41] sm:%s34]
    %v43 = vpack.c.bf16 0.0, %v42
    %s44 = sshll.u32 1, %s35
    %s45 = ssub.s32 %s44, 1
    %s46 = scalar_lea.vmem %s1, 1
    %47 = vst [vmem:[%s46] sm:%s45] %v43
    %s48 = scalar_lea.vmem [#allocation0], 16
    %v49 = vld [vmem:[%s48] sm:%s34]
    %v50 = vpack.c.bf16 0.0, %v49
    %s51 = sshll.u32 1, %s35
    %s52 = ssub.s32 %s51, 1
    %s53 = smul.addr 1, 2
    %s54 = scalar_lea.vmem %s1, %s53
    %55 = vst [vmem:[%s54] sm:%s52] %v50
    %s56 = scalar_lea.vmem [#allocation0], 24
    %v57 = vld [vmem:[%s56] sm:%s34]
    %v58 = vpack.c.bf16 0.0, %v57
    %s59 = sshll.u32 1, %s35
    %s60 = ssub.s32 %s59, 1
    %s61 = smul.addr 1, 3
    %s62 = scalar_lea.vmem %s1, %s61
    %63 = vst [vmem:[%s62] sm:%s60] %v58
    %s64 = scalar_lea.vmem [#allocation0], 32
    %v65 = vld [vmem:[%s64] sm:%s34]
    %v66 = vpack.c.bf16 0.0, %v65
    %s67 = sshll.u32 1, %s35
    %s68 = ssub.s32 %s67, 1
    %s69 = smul.addr 1, 4
    %s70 = scalar_lea.vmem %s1, %s69
    %71 = vst [vmem:[%s70] sm:%s68] %v66
    %s72 = scalar_lea.vmem [#allocation0], 40
    %v73 = vld [vmem:[%s72] sm:%s34]
    %v74 = vpack.c.bf16 0.0, %v73
    %s75 = sshll.u32 1, %s35
    %s76 = ssub.s32 %s75, 1
    %s77 = smul.addr 1, 5
    %s78 = scalar_lea.vmem %s1, %s77
    %79 = vst [vmem:[%s78] sm:%s76] %v74
    %s80 = scalar_lea.vmem [#allocation0], 48
    %v81 = vld [vmem:[%s80] sm:%s34]
    %v82 = vpack.c.bf16 0.0, %v81
    %s83 = sshll.u32 1, %s35
    %s84 = ssub.s32 %s83, 1
    %s85 = smul.addr 1, 6
    %s86 = scalar_lea.vmem %s1, %s85
    %87 = vst [vmem:[%s86] sm:%s84] %v82
    %s88 = scalar_lea.vmem [#allocation0], 56
    %v89 = vld [vmem:[%s88] sm:%s34]
    %v90 = vpack.c.bf16 0.0, %v89
    %s91 = sshll.u32 1, %s35
    %s92 = ssub.s32 %s91, 1
    %s93 = smul.addr 1, 7
    %s94 = scalar_lea.vmem %s1, %s93
    %95 = vst [vmem:[%s94] sm:%s92] %v90

// kernel: squeeze.87
$region0: #{squeeze.87}
  %s0 = inlined_call_operand.vmem [shape: f32[1,1,2,24], index: 0, kind: input, shape index: {}]
  %s1 = inlined_call_operand.vmem [shape: f32[48], index: 1, kind: output, shape index: {}]
  $region1: #{squeeze.87} parent=0
    #allocation0 [shape = 'u8[4096]{0}', space=vmem, size = 0x1000, scoped, tag = 'scoped mem for output reshape']
    #allocation1 [shape = 'u8[4096]{0}', space=vmem, size = 0x1000, scoped, tag = 'scoped mem for input reshape']
    %s3 = sshll.u32 1, 2
    %s4 = ssub.s32 %s3, 1
    %v5 = vld [vmem:[%s0] sm:%s4]
    %6 = vst [vmem:[#allocation1] sm:%s4] %v5
    %v7 = vld [vmem:[#allocation1] sm:$0x1]
    %vm8 = vcmask 195584
    %9 = vst.msk [vmem:[#allocation0] sm:$0x1] %vm8, %v7
    %s10 = scalar_lea.vmem [#allocation1], 1
    %v11 = vld [vmem:[%s10] sm:$0x1]
    %12 = vrot.lane.b32.xlu0 %v11, 24
    %v13 = vpop.permute.xlu0 %12
    %vm14 = vcmask 392384
    %15 = vst.msk [vmem:[#allocation0] sm:$0x1] %vm14, %v13
    %s17 = sshll.u32 1, 1
    %s18 = ssub.s32 %s17, 1
    %v20 = vld [vmem:[#allocation0] sm:%s18]
    %s21 = sshll.u32 1, 1
    %s22 = ssub.s32 %s21, 1
    %23 = vst [vmem:[%s1] sm:%s22] %v20

// kernel: generator_total_loss.25
$region0: #{generator_total_loss.25}
  #allocation0 [shape = 'u32[]', space=smem, size = 0x4, offset = 0x4, fixed_abs, tag = 'smem constant byte address 0x4 - core index']
  #allocation1 [shape = 'u32[144,128]{1,0:T(1,128)}', space=vmem, size = 0x12000, scoped, tag = 'internal scratch']
  %s0 = inlined_call_operand.vmem [shape: bf16[2,28,128], index: 0, kind: input, shape index: {}]
  %s1 = inlined_call_operand.vmem [shape: bf16[8,28], index: 1, kind: input, shape index: {}]
  %s2 = inlined_call_operand.vmem [shape: f32[8,1], index: 2, kind: input, shape index: {}]
  %s3 = inlined_call_operand.vmem [shape: f32[2,8,128], index: 3, kind: output, shape index: {0}]
  %s4 = inlined_call_operand.vmem [shape: f32[1,8,128], index: 4, kind: output, shape index: {1}]
  %s5 = inlined_call_operand.hbm [shape: f32[1,8,128], index: 5, kind: output, shape index: {2}]
  %6 = xla_tuple %s3, %s4, %s5
  %s7 = sld [smem:[#allocation0]]
  $region38: #{generator_total_loss.25} parent=0
    _
  %s9 = ssub.s32 1, %s7
  %s10 = scalar_select 0, %s9, %s7
  $region1: #{generator_total_loss.25} parent=0
    #allocation2 [shape = 'u8[4096]{0}', space=vmem, size = 0x1000, scoped, tag = 'output window, operand 2, single buffered']
    #allocation3 [shape = 's32[1]{0}', space=sflag, size = 0x4, scoped, tag = 'scoped memory for generator_total_loss.25']
    %11 = vsyncpa [#allocation3], 0
    // Predicated region
    $region2: #{generator_total_loss.25} parent=1 // pred_check
      _
    $region3: #{generator_total_loss.25} parent=1 // pred_check_branch
      %13 = sbr.rel (0) target = $region5
    $region4: #{generator_total_loss.25} parent=1 // pred_region
      _
    $region5: #{generator_total_loss.25} parent=1 // pred_fallthru
      _
    // Predicated region
    $region6: #{generator_total_loss.25} parent=1 // pred_check
      _
    $region7: #{generator_total_loss.25} parent=1 // pred_check_branch
      %15 = sbr.rel (0) target = $region9
    $region8: #{generator_total_loss.25} parent=1 // pred_region
      _
    $region9: #{generator_total_loss.25} parent=1 // pred_fallthru
      _
    // Predicated region
    $region10: #{generator_total_loss.25} parent=1 // pred_check
      _
    $region11: #{generator_total_loss.25} parent=1 // pred_check_branch
      %17 = sbr.rel (0) target = $region13
    $region12: #{generator_total_loss.25} parent=1 // pred_region
      _
    $region13: #{generator_total_loss.25} parent=1 // pred_fallthru
      _
    %v19 = vld [vmem:[%s1] sm:$0xf]
    %v20 = vld [vmem:[%s2] sm:$0xff]
    %v21 = vld [vmem:[%s0] sm:$0xf]
    %v22 = vld [vmem:[%s0 + $0x4] sm:$0xf]
    %v23 = vld [vmem:[%s0 + $0x8] sm:$0xf]
    %v24 = vld [vmem:[%s0 + $0xc] sm:$0x3]
    %26 = vset.pattern.permute.xlu0 0
    %27 = vperm.xlu0 %26, %v20
    %v28 = vpop.permute.xlu0 %27
    %v34 = vunpack.c.l.b16 %v21
    %v35 = vunpack.c.l.b16 %v22
    %v36 = vunpack.c.l.b16 %v23
    %v37 = vunpack.c.l.b16 %v24
    %v38 = vpack.c.b16 %v35, %v34
    %v39 = vpack.c.b16 %v37, %v36
    %vm41 = vcmask 228352
    %v43 = vsel %vm41, %v19, 0
    %vm45 = vcmask 1045504
    %v47 = vsel %vm45, %v39, 0
    %49 = vmatprep.subr.bf16.mxu0 0
    %50 = vmatpush1.bf16.msra.mxu0 0
    %51 = vmatprep.subr.bf16.mxu0 0
    %52 = vmatpush1.bf16.msra.mxu0 0
    %53 = vmatprep.subr.bf16.mxu0 0
    %54 = vmatpush1.bf16.msra.mxu0 0
    %55 = vmatprep.subr.bf16.mxu0 0
    %56 = vmatpush1.bf16.msra.mxu0 0
    %57 = vmatprep.subr.bf16.mxu0 0
    %58 = vmatpush1.bf16.msra.mxu0 0
    %59 = vmatprep.subr.bf16.mxu0 0
    %60 = vmatpush1.bf16.msra.mxu0 0
    %61 = vmatprep.subr.bf16.mxu0 0
    %62 = vmatpush1.bf16.msra.mxu0 %v47
    %63 = vmatprep.subr.bf16.mxu0 0
    %64 = vmatpush1.bf16.msra.mxu0 %v38
    %65 = vmatprep.subr.bf16.mxu0 0
    %66 = vmatpush2.bf16.msra.mxu0 0
    %67 = vmatprep.subr.bf16.mxu0 0
    %68 = vmatpush2.bf16.msra.mxu0 0
    %69 = vmatprep.subr.bf16.mxu0 0
    %70 = vmatpush2.bf16.msra.mxu0 0
    %71 = vmatprep.subr.bf16.mxu0 0
    %72 = vmatpush2.bf16.msra.mxu0 0
    %73 = vmatprep.subr.bf16.mxu0 0
    %74 = vmatpush2.bf16.msra.mxu0 0
    %75 = vmatprep.subr.bf16.mxu0 0
    %76 = vmatpush2.bf16.msra.mxu0 0
    %77 = vmatprep.subr.bf16.mxu0 0
    %78 = vmatpush2.bf16.msra.mxu0 0
    %79 = vmatprep.subr.bf16.mxu0 0
    %80 = vmatpush2.bf16.msra.mxu0 0
    %81 = vmatprep.mubr.bf16.mxu0 0
    %82 = vmatmul.mubr.bf16.gmra.mxu0 %v43
    %v83 = vpop.f32.mrf.mxu0
    %v84 = vadd.f32 %v28, %v83
    %v85 = vpop.f32.mrf.mxu0
    %v86 = vpop.f32.mrf.mxu0
    %v87 = vpop.f32.mrf.mxu0
    %88 = vdwg.mxu0
    %vm89 = vcmp.gt.f32.partialorder %v84, 0.0
    %v90 = vmul.f32 %v84, 0.1
    %v91 = vsel %vm89, %v84, %v90
    %92 = vst [vmem:[%s3] sm:$0xff] %v91
    %s93 = scalar_lea.vmem %s0, 16
    %v94 = vld [vmem:[%s93] sm:$0xf]
    %v95 = vld [vmem:[%s93 + $0x4] sm:$0xf]
    %v96 = vld [vmem:[%s93 + $0x8] sm:$0xf]
    %v97 = vld [vmem:[%s93 + $0xc] sm:$0x3]
    %v102 = vunpack.c.l.b16 %v94
    %v103 = vunpack.c.l.b16 %v95
    %v104 = vunpack.c.l.b16 %v96
    %v105 = vunpack.c.l.b16 %v97
    %v106 = vpack.c.b16 %v103, %v102
    %v107 = vpack.c.b16 %v105, %v104
    %v110 = vsel %vm45, %v107, 0
    %112 = vmatprep.subr.bf16.mxu0 0
    %113 = vmatpush1.bf16.msra.mxu0 0
    %114 = vmatprep.subr.bf16.mxu0 0
    %115 = vmatpush1.bf16.msra.mxu0 0
    %116 = vmatprep.subr.bf16.mxu0 0
    %117 = vmatpush1.bf16.msra.mxu0 0
    %118 = vmatprep.subr.bf16.mxu0 0
    %119 = vmatpush1.bf16.msra.mxu0 0
    %120 = vmatprep.subr.bf16.mxu0 0
    %121 = vmatpush1.bf16.msra.mxu0 0
    %122 = vmatprep.subr.bf16.mxu0 0
    %123 = vmatpush1.bf16.msra.mxu0 0
    %124 = vmatprep.subr.bf16.mxu0 0
    %125 = vmatpush1.bf16.msra.mxu0 %v110
    %126 = vmatprep.subr.bf16.mxu0 0
    %127 = vmatpush1.bf16.msra.mxu0 %v106
    %128 = vmatprep.subr.bf16.mxu0 0
    %129 = vmatpush2.bf16.msra.mxu0 0
    %130 = vmatprep.subr.bf16.mxu0 0
    %131 = vmatpush2.bf16.msra.mxu0 0
    %132 = vmatprep.subr.bf16.mxu0 0
    %133 = vmatpush2.bf16.msra.mxu0 0
    %134 = vmatprep.subr.bf16.mxu0 0
    %135 = vmatpush2.bf16.msra.mxu0 0
    %136 = vmatprep.subr.bf16.mxu0 0
    %137 = vmatpush2.bf16.msra.mxu0 0
    %138 = vmatprep.subr.bf16.mxu0 0
    %139 = vmatpush2.bf16.msra.mxu0 0
    %140 = vmatprep.subr.bf16.mxu0 0
    %141 = vmatpush2.bf16.msra.mxu0 0
    %142 = vmatprep.subr.bf16.mxu0 0
    %143 = vmatpush2.bf16.msra.mxu0 0
    %144 = vmatprep.mubr.bf16.mxu0 0
    %145 = vmatmul.mubr.bf16.gmra.mxu0 %v43
    %v146 = vpop.f32.mrf.mxu0
    %v147 = vadd.f32 %v28, %v146
    %v148 = vpop.f32.mrf.mxu0
    %v149 = vpop.f32.mrf.mxu0
    %v150 = vpop.f32.mrf.mxu0
    %151 = vdwg.mxu0
    %vm152 = vcmp.gt.f32.partialorder %v147, 0.0
    %v153 = vmul.f32 %v147, 0.1
    %v154 = vsel %vm152, %v147, %v153
    %s155 = scalar_lea.vmem %s3, 8
    %156 = vst [vmem:[%s155] sm:$0xff] %v154
    %v157 = vsub.f32 %v91, %v154
    %v158 = vand.u32 2147483647, %v157
    %159 = vadd.xlane.f32.xlu0 %v158
    %v160 = vpop.xlane.xlu0 %159
    %v161 = vrot.slane %v160, 4
    %v162 = vadd.f32 %v160, %v161
    %v163 = vrot.slane %v162, 2
    %v164 = vadd.f32 %v162, %v163
    %v165 = vrot.slane %v164, 1
    %v166 = vadd.f32 %v164, %v165
    %s167 = vtos %v166
    %v168 = vlaneseq
    %v169 = vand.u32 %v168, 127
    %s170 = smul.u32 0, 128
    %v171 = vstv %s170
    %v172 = vadd.s32 %v169, %v171
    %vm173 = vcmp.lt.s32.totalorder %v172, 48
    %v174 = vsel %vm173, 1, 0
    %v175 = vcvt.s32.f32 %v174
    %v176 = vsub.f32 1.0, %v154
    %v177 = vmul.f32 %v176, %v176
    %v178 = vmul.f32 %v177, %v175
    %179 = vadd.xlane.f32.xlu0 %v178
    %v180 = vpop.xlane.xlu0 %179
    %v181 = vrot.slane %v180, 4
    %v182 = vadd.f32 %v180, %v181
    %v183 = vrot.slane %v182, 2
    %v184 = vadd.f32 %v182, %v183
    %v185 = vrot.slane %v184, 1
    %v186 = vadd.f32 %v184, %v185
    %s187 = vtos %v186
    %v188 = vstv %s167
    %189 = vst [vmem:[%s4] sm:$0xff] %v188
    %v190 = vstv %s187
    %191 = vst [vmem:[#allocation2] sm:$0xff] %v190
    // Predicated region
    $region14: #{generator_total_loss.25} parent=1 // pred_check
      _
    $region15: #{generator_total_loss.25} parent=1 // pred_check_branch
      %193 = sbr.rel (0) target = $region17
    $region16: #{generator_total_loss.25} parent=1 // pred_region
      _
    $region17: #{generator_total_loss.25} parent=1 // pred_fallthru
      _
    // Predicated region
    $region18: #{generator_total_loss.25} parent=1 // pred_check
      _
    $region19: #{generator_total_loss.25} parent=1 // pred_check_branch
      %195 = sbr.rel (0) target = $region21
    $region20: #{generator_total_loss.25} parent=1 // pred_region
      _
    $region21: #{generator_total_loss.25} parent=1 // pred_fallthru
      _
    // Predicated region
    $region22: #{generator_total_loss.25} parent=1 // pred_check
      _
    $region23: #{generator_total_loss.25} parent=1 // pred_check_branch
      %197 = sbr.rel (0) target = $region25
    $region24: #{generator_total_loss.25} parent=1 // pred_region
      %s199 = ssub.s32 128, 128
      %200 = vsyncadd [#allocation3], %s199
      %s202 = sshll.u32 [#allocation2], 4
      %s203 = int_to_ptr.vmem [resolvable:$true] %s202
      %205 = dma.vmem_to_hbm [thread:$0]  %s203, 128, %s5, [#allocation3]
    $region25: #{generator_total_loss.25} parent=1 // pred_fallthru
      _
    // Predicated region
    $region26: #{generator_total_loss.25} parent=1 // pred_check
      _
    $region27: #{generator_total_loss.25} parent=1 // pred_check_branch
      %207 = sbr.rel (0) target = $region29
    $region28: #{generator_total_loss.25} parent=1 // pred_region
      _
    $region29: #{generator_total_loss.25} parent=1 // pred_fallthru
      _
    // Predicated region
    $region30: #{generator_total_loss.25} parent=1 // pred_check
      _
    $region31: #{generator_total_loss.25} parent=1 // pred_check_branch
      %209 = sbr.rel (0) target = $region33
    $region32: #{generator_total_loss.25} parent=1 // pred_region
      _
    $region33: #{generator_total_loss.25} parent=1 // pred_fallthru
      _
    // Predicated region
    $region34: #{generator_total_loss.25} parent=1 // pred_check
      _
    $region35: #{generator_total_loss.25} parent=1 // pred_check_branch
      %211 = sbr.rel (0) target = $region37
    $region36: #{generator_total_loss.25} parent=1 // pred_region
      %212 = dma.done [#allocation3], 128
    $region37: #{generator_total_loss.25} parent=1 // pred_fallthru
      _
    %213 = vsyncpa [#allocation3], 1

// kernel: generator_total_loss.26
$region0: #{generator_total_loss.26}
  #allocation0 [shape = 'u32[]', space=smem, size = 0x4, offset = 0x4, fixed_abs, tag = 'smem constant byte address 0x4 - core index']
  #allocation1 [shape = 'u32[144,128]{1,0:T(1,128)}', space=vmem, size = 0x12000, scoped, tag = 'internal scratch']
  #allocation2 [shape = 'f32[1,1]{1,0:T(1,128)S(1)}', space=vmem, size = 0x200, scoped, tag = 'scoped memory for generator_total_loss.26']
  %s0 = inlined_call_operand.vmem [shape: bf16[2,24,128], index: 0, kind: input, shape index: {}]
  %s1 = inlined_call_operand.vmem [shape: bf16[1,24], index: 1, kind: input, shape index: {}]
  %s2 = inlined_call_operand.<no memory space> [shape: f32[1,1], index: 2, kind: input, shape index: {}]
  %s3 = inlined_call_operand.vmem [shape: f32[2,1,128], index: 3, kind: output, shape index: {0}]
  %s4 = inlined_call_operand.vmem [shape: f32[1,8,128], index: 4, kind: output, shape index: {1}]
  %s5 = inlined_call_operand.vmem [shape: f32[1,8,128], index: 5, kind: output, shape index: {2}]
  %6 = xla_tuple %s3, %s4, %s5
  %s7 = sld [smem:[#allocation0]]
  $region38: #{generator_total_loss.26} parent=0
    _
  %s9 = ssub.s32 1, %s7
  %s10 = scalar_select 0, %s9, %s7
  %v11 = vstv %s2
  %12 = vst [vmem:[#allocation2] sm:$0x1] %v11
  // Predicated region
  $region2: #{generator_total_loss.26} parent=0 // pred_check
    _
  $region3: #{generator_total_loss.26} parent=0 // pred_check_branch
    %14 = sbr.rel (0) target = $region5
  $region4: #{generator_total_loss.26} parent=0 // pred_region
    _
  $region5: #{generator_total_loss.26} parent=0 // pred_fallthru
    _
  // Predicated region
  $region6: #{generator_total_loss.26} parent=0 // pred_check
    _
  $region7: #{generator_total_loss.26} parent=0 // pred_check_branch
    %16 = sbr.rel (0) target = $region9
  $region8: #{generator_total_loss.26} parent=0 // pred_region
    _
  $region9: #{generator_total_loss.26} parent=0 // pred_fallthru
    _
  // Predicated region
  $region10: #{generator_total_loss.26} parent=0 // pred_check
    _
  $region11: #{generator_total_loss.26} parent=0 // pred_check_branch
    %18 = sbr.rel (0) target = $region13
  $region12: #{generator_total_loss.26} parent=0 // pred_region
    _
  $region13: #{generator_total_loss.26} parent=0 // pred_fallthru
    _
  %v20 = vld [vmem:[%s1] sm:$0x1]
  %v21 = vld [vmem:[#allocation2] sm:$0x1]
  %v22 = vld [vmem:[%s0] sm:$0xf]
  %v23 = vld [vmem:[%s0 + $0x4] sm:$0xf]
  %v24 = vld [vmem:[%s0 + $0x8] sm:$0xf]
  %26 = vset.pattern.permute.xlu0 0
  %27 = vperm.xlu0 %26, %v21
  %v28 = vpop.permute.xlu0 %27
  %v30 = vlaneseq
  %v31 = vshrl.u32 %v30, 7
  %v32 = vsub.s32 0, %v31
  %v33 = vrot.slane %v28, %v32
  %v37 = vunpack.c.l.b16 %v22
  %v38 = vunpack.c.l.b16 %v23
  %v39 = vunpack.c.l.b16 %v24
  %v40 = vpack.c.b16 %v38, %v37
  %v41 = vpack.c.b16 %v39, %v39
  %vm43 = vcmask 195584
  %v45 = vsel %vm43, %v20, 0
  %vm47 = vcmask 1043456
  %v49 = vsel %vm47, %v41, 0
  %51 = vmatprep.subr.bf16.mxu0 0
  %52 = vmatpush1.bf16.msra.mxu0 0
  %53 = vmatprep.subr.bf16.mxu0 0
  %54 = vmatpush1.bf16.msra.mxu0 0
  %55 = vmatprep.subr.bf16.mxu0 0
  %56 = vmatpush1.bf16.msra.mxu0 0
  %57 = vmatprep.subr.bf16.mxu0 0
  %58 = vmatpush1.bf16.msra.mxu0 0
  %59 = vmatprep.subr.bf16.mxu0 0
  %60 = vmatpush1.bf16.msra.mxu0 0
  %61 = vmatprep.subr.bf16.mxu0 0
  %62 = vmatpush1.bf16.msra.mxu0 0
  %63 = vmatprep.subr.bf16.mxu0 0
  %64 = vmatpush1.bf16.msra.mxu0 %v49
  %65 = vmatprep.subr.bf16.mxu0 0
  %66 = vmatpush1.bf16.msra.mxu0 %v40
  %67 = vmatprep.subr.bf16.mxu0 0
  %68 = vmatpush2.bf16.msra.mxu0 0
  %69 = vmatprep.subr.bf16.mxu0 0
  %70 = vmatpush2.bf16.msra.mxu0 0
  %71 = vmatprep.subr.bf16.mxu0 0
  %72 = vmatpush2.bf16.msra.mxu0 0
  %73 = vmatprep.subr.bf16.mxu0 0
  %74 = vmatpush2.bf16.msra.mxu0 0
  %75 = vmatprep.subr.bf16.mxu0 0
  %76 = vmatpush2.bf16.msra.mxu0 0
  %77 = vmatprep.subr.bf16.mxu0 0
  %78 = vmatpush2.bf16.msra.mxu0 0
  %79 = vmatprep.subr.bf16.mxu0 0
  %80 = vmatpush2.bf16.msra.mxu0 0
  %81 = vmatprep.subr.bf16.mxu0 0
  %82 = vmatpush2.bf16.msra.mxu0 0
  %83 = vmatprep.mubr.bf16.mxu0 0
  %84 = vmatmul.mubr.bf16.gmra.mxu0 %v45
  %v85 = vpop.f32.mrf.mxu0
  %v86 = vadd.f32 %v33, %v85
  %v87 = vpop.f32.mrf.mxu0
  %v88 = vpop.f32.mrf.mxu0
  %v89 = vpop.f32.mrf.mxu0
  %90 = vdwg.mxu0
  %91 = vst [vmem:[%s3] sm:$0x1] %v86
  %s92 = scalar_lea.vmem %s0, 12
  %v93 = vld [vmem:[%s92] sm:$0xf]
  %v94 = vld [vmem:[%s92 + $0x4] sm:$0xf]
  %v95 = vld [vmem:[%s92 + $0x8] sm:$0xf]
  %v99 = vunpack.c.l.b16 %v93
  %v100 = vunpack.c.l.b16 %v94
  %v101 = vunpack.c.l.b16 %v95
  %v102 = vpack.c.b16 %v100, %v99
  %v103 = vpack.c.b16 %v101, %v101
  %v106 = vsel %vm47, %v103, 0
  %108 = vmatprep.subr.bf16.mxu0 0
  %109 = vmatpush1.bf16.msra.mxu0 0
  %110 = vmatprep.subr.bf16.mxu0 0
  %111 = vmatpush1.bf16.msra.mxu0 0
  %112 = vmatprep.subr.bf16.mxu0 0
  %113 = vmatpush1.bf16.msra.mxu0 0
  %114 = vmatprep.subr.bf16.mxu0 0
  %115 = vmatpush1.bf16.msra.mxu0 0
  %116 = vmatprep.subr.bf16.mxu0 0
  %117 = vmatpush1.bf16.msra.mxu0 0
  %118 = vmatprep.subr.bf16.mxu0 0
  %119 = vmatpush1.bf16.msra.mxu0 0
  %120 = vmatprep.subr.bf16.mxu0 0
  %121 = vmatpush1.bf16.msra.mxu0 %v106
  %122 = vmatprep.subr.bf16.mxu0 0
  %123 = vmatpush1.bf16.msra.mxu0 %v102
  %124 = vmatprep.subr.bf16.mxu0 0
  %125 = vmatpush2.bf16.msra.mxu0 0
  %126 = vmatprep.subr.bf16.mxu0 0
  %127 = vmatpush2.bf16.msra.mxu0 0
  %128 = vmatprep.subr.bf16.mxu0 0
  %129 = vmatpush2.bf16.msra.mxu0 0
  %130 = vmatprep.subr.bf16.mxu0 0
  %131 = vmatpush2.bf16.msra.mxu0 0
  %132 = vmatprep.subr.bf16.mxu0 0
  %133 = vmatpush2.bf16.msra.mxu0 0
  %134 = vmatprep.subr.bf16.mxu0 0
  %135 = vmatpush2.bf16.msra.mxu0 0
  %136 = vmatprep.subr.bf16.mxu0 0
  %137 = vmatpush2.bf16.msra.mxu0 0
  %138 = vmatprep.subr.bf16.mxu0 0
  %139 = vmatpush2.bf16.msra.mxu0 0
  %140 = vmatprep.mubr.bf16.mxu0 0
  %141 = vmatmul.mubr.bf16.gmra.mxu0 %v45
  %v142 = vpop.f32.mrf.mxu0
  %v143 = vadd.f32 %v33, %v142
  %v144 = vpop.f32.mrf.mxu0
  %v145 = vpop.f32.mrf.mxu0
  %v146 = vpop.f32.mrf.mxu0
  %147 = vdwg.mxu0
  %s148 = scalar_lea.vmem %s3, 1
  %149 = vst [vmem:[%s148] sm:$0x1] %v143
  %v150 = vsub.f32 %v86, %v143
  %v151 = vand.u32 2147483647, %v150
  %vm152 = vcmask 1040384
  %v153 = vsel %vm152, %v151, 0.0
  %154 = vadd.xlane.f32.xlu0 %v153
  %v155 = vpop.xlane.xlu0 %154
  %v156 = vrot.slane %v155, 4
  %v157 = vadd.f32 %v155, %v156
  %v158 = vrot.slane %v157, 2
  %v159 = vadd.f32 %v157, %v158
  %v160 = vrot.slane %v159, 1
  %v161 = vadd.f32 %v159, %v160
  %s162 = vtos %v161
  %v163 = vlaneseq
  %v164 = vand.u32 %v163, 127
  %s165 = smul.u32 0, 128
  %v166 = vstv %s165
  %v167 = vadd.s32 %v164, %v166
  %vm168 = vcmp.lt.s32.totalorder %v167, 48
  %v169 = vsel %vm168, 1, 0
  %v170 = vcvt.s32.f32 %v169
  %v171 = vsub.f32 1.0, %v143
  %v172 = vmul.f32 %v171, %v171
  %v173 = vmul.f32 %v172, %v170
  %v174 = vsel %vm152, %v173, 0.0
  %175 = vadd.xlane.f32.xlu0 %v174
  %v176 = vpop.xlane.xlu0 %175
  %v177 = vrot.slane %v176, 4
  %v178 = vadd.f32 %v176, %v177
  %v179 = vrot.slane %v178, 2
  %v180 = vadd.f32 %v178, %v179
  %v181 = vrot.slane %v180, 1
  %v182 = vadd.f32 %v180, %v181
  %s183 = vtos %v182
  %v184 = vstv %s162
  %185 = vst [vmem:[%s4] sm:$0xff] %v184
  %v186 = vstv %s183
  %187 = vst [vmem:[%s5] sm:$0xff] %v186
  // Predicated region
  $region14: #{generator_total_loss.26} parent=0 // pred_check
    _
  $region15: #{generator_total_loss.26} parent=0 // pred_check_branch
    %189 = sbr.rel (0) target = $region17
  $region16: #{generator_total_loss.26} parent=0 // pred_region
    _
  $region17: #{generator_total_loss.26} parent=0 // pred_fallthru
    _
  // Predicated region
  $region18: #{generator_total_loss.26} parent=0 // pred_check
    _
  $region19: #{generator_total_loss.26} parent=0 // pred_check_branch
    %191 = sbr.rel (0) target = $region21
  $region20: #{generator_total_loss.26} parent=0 // pred_region
    _
  $region21: #{generator_total_loss.26} parent=0 // pred_fallthru
    _
  // Predicated region
  $region22: #{generator_total_loss.26} parent=0 // pred_check
    _
  $region23: #{generator_total_loss.26} parent=0 // pred_check_branch
    %193 = sbr.rel (0) target = $region25
  $region24: #{generator_total_loss.26} parent=0 // pred_region
    _
  $region25: #{generator_total_loss.26} parent=0 // pred_fallthru
    _
  // Predicated region
  $region26: #{generator_total_loss.26} parent=0 // pred_check
    _
  $region27: #{generator_total_loss.26} parent=0 // pred_check_branch
    %195 = sbr.rel (0) target = $region29
  $region28: #{generator_total_loss.26} parent=0 // pred_region
    _
  $region29: #{generator_total_loss.26} parent=0 // pred_fallthru
    _
  // Predicated region
  $region30: #{generator_total_loss.26} parent=0 // pred_check
    _
  $region31: #{generator_total_loss.26} parent=0 // pred_check_branch
    %197 = sbr.rel (0) target = $region33
  $region32: #{generator_total_loss.26} parent=0 // pred_region
    _
  $region33: #{generator_total_loss.26} parent=0 // pred_fallthru
    _
  // Predicated region
  $region34: #{generator_total_loss.26} parent=0 // pred_check
    _
  $region35: #{generator_total_loss.26} parent=0 // pred_check_branch
    %199 = sbr.rel (0) target = $region37
  $region36: #{generator_total_loss.26} parent=0 // pred_region
    _
  $region37: #{generator_total_loss.26} parent=0 // pred_fallthru
    _

// kernel: generator_total_loss.27
$region0: #{generator_total_loss.27}
  #allocation0 [shape = 'u32[]', space=smem, size = 0x4, offset = 0x4, fixed_abs, tag = 'smem constant byte address 0x4 - core index']
  #allocation1 [shape = 'u32[144,128]{1,0:T(1,128)}', space=vmem, size = 0x12000, scoped, tag = 'internal scratch']
  #allocation2 [shape = 'f32[1,1]{1,0:T(1,128)S(1)}', space=vmem, size = 0x200, scoped, tag = 'scoped memory for generator_total_loss.27']
  %s0 = inlined_call_operand.<no memory space> [shape: f32[1,1], index: 0, kind: input, shape index: {}]
  %s1 = inlined_call_operand.vmem [shape: f32[8,128], index: 1, kind: input, shape index: {}]
  %s2 = inlined_call_operand.vmem [shape: f32[1,8,128], index: 2, kind: output, shape index: {0}]
  %s3 = inlined_call_operand.vmem [shape: f32[1,8,128], index: 3, kind: output, shape index: {1}]
  %4 = xla_tuple %s2, %s3
  %s5 = sld [smem:[#allocation0]]
  $region26: #{generator_total_loss.27} parent=0
    _
  %s7 = ssub.s32 1, %s5
  %s8 = scalar_select 0, %s7, %s5
  %v9 = vstv %s0
  %10 = vst [vmem:[#allocation2] sm:$0x1] %v9
  // Predicated region
  $region2: #{generator_total_loss.27} parent=0 // pred_check
    _
  $region3: #{generator_total_loss.27} parent=0 // pred_check_branch
    %12 = sbr.rel (0) target = $region5
  $region4: #{generator_total_loss.27} parent=0 // pred_region
    _
  $region5: #{generator_total_loss.27} parent=0 // pred_fallthru
    _
  // Predicated region
  $region6: #{generator_total_loss.27} parent=0 // pred_check
    _
  $region7: #{generator_total_loss.27} parent=0 // pred_check_branch
    %14 = sbr.rel (0) target = $region9
  $region8: #{generator_total_loss.27} parent=0 // pred_region
    _
  $region9: #{generator_total_loss.27} parent=0 // pred_fallthru
    _
  %v15 = vld [vmem:[%s1] sm:$0xff]
  %v16 = vld [vmem:[#allocation2] sm:$0x1]
  %s17 = smul.u32 0, 1024
  %v18 = vlaneseq
  %v19 = vshrl.u32 %v18, 7
  %v20 = vmul.u32 %v19, 128
  %v21 = vstv %s17
  %v22 = vadd.s32 %v21, %v20
  %v23 = vlaneseq
  %v24 = vand.u32 %v23, 127
  %v25 = vadd.s32 %v22, %v24
  %v27 = vlaneseq
  %v28 = vshrl.u32 %v27, 7
  %v29 = vsub.s32 0, %v28
  %v30 = vrot.slane %v16, %v29
  %31 = vset.pattern.permute.xlu0 0
  %32 = vperm.xlu0 %31, %v30
  %v33 = vpop.permute.xlu0 %32
  %vm35 = vcmp.lt.f32.partialorder %v15, %v33
  %vm36 = vcmp.lt.s32.totalorder %v25, 48
  %vm37 = vmand %vm35, %vm36
  %v38 = vsub.f32 %v15, %v33
  %v39 = vmul.f32 %v38, %v38
  %v40 = vsel %vm37, %v39, 0.0
  %41 = vadd.xlane.f32.xlu0 %v40
  %v42 = vpop.xlane.xlu0 %41
  %v43 = vrot.slane %v42, 4
  %v44 = vadd.f32 %v42, %v43
  %v45 = vrot.slane %v44, 2
  %v46 = vadd.f32 %v44, %v45
  %v47 = vrot.slane %v46, 1
  %v48 = vadd.f32 %v46, %v47
  %s49 = vtos %v48
  %v50 = vsel %vm37, 1, 0
  %v51 = vcvt.s32.f32 %v50
  %52 = vadd.xlane.f32.xlu0 %v51
  %v53 = vpop.xlane.xlu0 %52
  %v54 = vrot.slane %v53, 4
  %v55 = vadd.f32 %v53, %v54
  %v56 = vrot.slane %v55, 2
  %v57 = vadd.f32 %v55, %v56
  %v58 = vrot.slane %v57, 1
  %v59 = vadd.f32 %v57, %v58
  %s60 = vtos %v59
  %v61 = vstv %s49
  %62 = vst [vmem:[%s2] sm:$0xff] %v61
  %v63 = vstv %s60
  %64 = vst [vmem:[%s3] sm:$0xff] %v63
  // Predicated region
  $region10: #{generator_total_loss.27} parent=0 // pred_check
    _
  $region11: #{generator_total_loss.27} parent=0 // pred_check_branch
    %66 = sbr.rel (0) target = $region13
  $region12: #{generator_total_loss.27} parent=0 // pred_region
    _
  $region13: #{generator_total_loss.27} parent=0 // pred_fallthru
    _
  // Predicated region
  $region14: #{generator_total_loss.27} parent=0 // pred_check
    _
  $region15: #{generator_total_loss.27} parent=0 // pred_check_branch
    %68 = sbr.rel (0) target = $region17
  $region16: #{generator_total_loss.27} parent=0 // pred_region
    _
  $region17: #{generator_total_loss.27} parent=0 // pred_fallthru
    _
  // Predicated region
  $region18: #{generator_total_loss.27} parent=0 // pred_check
    _
  $region19: #{generator_total_loss.27} parent=0 // pred_check_branch
    %70 = sbr.rel (0) target = $region21
  $region20: #{generator_total_loss.27} parent=0 // pred_region
    _
  $region21: #{generator_total_loss.27} parent=0 // pred_fallthru
    _
  // Predicated region
  $region22: #{generator_total_loss.27} parent=0 // pred_check
    _
  $region23: #{generator_total_loss.27} parent=0 // pred_check_branch
    %72 = sbr.rel (0) target = $region25
  $region24: #{generator_total_loss.27} parent=0 // pred_region
    _
  $region25: #{generator_total_loss.27} parent=0 // pred_fallthru
    _

// kernel: squeeze.66
$region0: #{squeeze.66}
  %s0 = inlined_call_operand.vmem [shape: bf16[1,4,66], index: 0, kind: input, shape index: {}]
  %s1 = inlined_call_operand.vmem [shape: bf16[4,6,11], index: 1, kind: output, shape index: {}]
  $region1: #{squeeze.66} parent=0
    #allocation0 [shape = 'u8[16384]{0}', space=vmem, size = 0x4000, scoped, tag = 'scoped mem for output reshape']
    #allocation1 [shape = 'u8[4096]{0}', space=vmem, size = 0x1000, scoped, tag = 'scoped mem for input reshape']
    %s3 = smul.u32 2, 2
    %s4 = sshll.u32 1, %s3
    %s5 = ssub.s32 %s4, 1
    %s6 = sshrl.u32 %s5, 1
    %s7 = sor.u32 %s5, %s6
    %s8 = sand.u32 %s7, 85
    %s9 = sshrl.u32 %s8, 1
    %s10 = sor.u32 %s8, %s9
    %s11 = sand.u32 51, %s10
    %s12 = sshrl.u32 %s11, 2
    %s13 = sor.u32 %s11, %s12
    %s14 = sand.u32 15, %s13
    %v15 = vld [vmem:[%s0] sm:%s14]
    %v16 = vunpack.c.l.bf16 %v15
    %v17 = vunpack.c.h.bf16 %v15
    %18 = vst [vmem:[#allocation1] sm:%s5] %v16
    %v19 = vld [vmem:[#allocation1] sm:$0xf]
    %vm20 = vcmask 89088
    %21 = vst.msk [vmem:[#allocation0] ss:$8 sm:$0xf] %vm20, %v19
    %v22 = vld [vmem:[#allocation1] sm:$0xf]
    %23 = vrot.lane.b32.xlu0 %v22, 117
    %v24 = vpop.permute.xlu0 %23
    %vm25 = vcmask 89088
    %s26 = scalar_lea.vmem [#allocation0], 1
    %27 = vst.msk [vmem:[%s26] ss:$8 sm:$0xf] %vm25, %v24
    %v28 = vld [vmem:[#allocation1] sm:$0xf]
    %29 = vrot.lane.b32.xlu0 %v28, 106
    %v30 = vpop.permute.xlu0 %29
    %vm31 = vcmask 89088
    %s32 = scalar_lea.vmem [#allocation0], 2
    %33 = vst.msk [vmem:[%s32] ss:$8 sm:$0xf] %vm31, %v30
    %v34 = vld [vmem:[#allocation1] sm:$0xf]
    %35 = vrot.lane.b32.xlu0 %v34, 95
    %v36 = vpop.permute.xlu0 %35
    %vm37 = vcmask 89088
    %s38 = scalar_lea.vmem [#allocation0], 3
    %39 = vst.msk [vmem:[%s38] ss:$8 sm:$0xf] %vm37, %v36
    %v40 = vld [vmem:[#allocation1] sm:$0xf]
    %41 = vrot.lane.b32.xlu0 %v40, 84
    %v42 = vpop.permute.xlu0 %41
    %vm43 = vcmask 89088
    %s44 = scalar_lea.vmem [#allocation0], 4
    %45 = vst.msk [vmem:[%s44] ss:$8 sm:$0xf] %vm43, %v42
    %v46 = vld [vmem:[#allocation1] sm:$0xf]
    %47 = vrot.lane.b32.xlu0 %v46, 73
    %v48 = vpop.permute.xlu0 %47
    %vm49 = vcmask 89088
    %s50 = scalar_lea.vmem [#allocation0], 5
    %51 = vst.msk [vmem:[%s50] ss:$8 sm:$0xf] %vm49, %v48
    %s53 = smul.u32 4, 2
    %s54 = sshll.u32 1, %s53
    %s55 = ssub.s32 %s54, 1
    %s56 = sshrl.u32 %s53, 1
    %v57 = vld [vmem:[#allocation0] sm:%s55]
    %v58 = vpack.c.bf16 0.0, %v57
    %s59 = sshll.u32 1, %s56
    %s60 = ssub.s32 %s59, 1
    %61 = vst [vmem:[%s1] sm:%s60] %v58
    %s62 = scalar_lea.vmem [#allocation0], 8
    %v63 = vld [vmem:[%s62] sm:%s55]
    %v64 = vpack.c.bf16 0.0, %v63
    %s65 = sshll.u32 1, %s56
    %s66 = ssub.s32 %s65, 1
    %s67 = scalar_lea.vmem %s1, 4
    %68 = vst [vmem:[%s67] sm:%s66] %v64
    %s69 = scalar_lea.vmem [#allocation0], 16
    %v70 = vld [vmem:[%s69] sm:%s55]
    %v71 = vpack.c.bf16 0.0, %v70
    %s72 = sshll.u32 1, %s56
    %s73 = ssub.s32 %s72, 1
    %s74 = smul.addr 4, 2
    %s75 = scalar_lea.vmem %s1, %s74
    %76 = vst [vmem:[%s75] sm:%s73] %v71
    %s77 = scalar_lea.vmem [#allocation0], 24
    %v78 = vld [vmem:[%s77] sm:%s55]
    %v79 = vpack.c.bf16 0.0, %v78
    %s80 = sshll.u32 1, %s56
    %s81 = ssub.s32 %s80, 1
    %s82 = smul.addr 4, 3
    %s83 = scalar_lea.vmem %s1, %s82
    %84 = vst [vmem:[%s83] sm:%s81] %v79

// kernel: generator_total_loss.20
$region0: #{generator_total_loss.20}
  #allocation0 [shape = 'u32[]', space=smem, size = 0x4, offset = 0x4, fixed_abs, tag = 'smem constant byte address 0x4 - core index']
  #allocation1 [shape = 'u32[144,128]{1,0:T(1,128)}', space=vmem, size = 0x12000, scoped, tag = 'internal scratch']
  %s0 = inlined_call_operand.vmem [shape: bf16[2,5,128], index: 0, kind: input, shape index: {}]
  %s1 = inlined_call_operand.vmem [shape: bf16[4,5], index: 1, kind: input, shape index: {}]
  %s2 = inlined_call_operand.vmem [shape: f32[4,1], index: 2, kind: input, shape index: {}]
  %s3 = inlined_call_operand.vmem [shape: f32[2,4,128], index: 3, kind: output, shape index: {0}]
  %s4 = inlined_call_operand.vmem [shape: f32[1,8,128], index: 4, kind: output, shape index: {1}]
  %s5 = inlined_call_operand.hbm [shape: f32[1,8,128], index: 5, kind: output, shape index: {2}]
  %6 = xla_tuple %s3, %s4, %s5
  %s7 = sld [smem:[#allocation0]]
  $region38: #{generator_total_loss.20} parent=0
    _
  %s9 = ssub.s32 1, %s7
  %s10 = scalar_select 0, %s9, %s7
  $region1: #{generator_total_loss.20} parent=0
    #allocation2 [shape = 'u8[4096]{0}', space=vmem, size = 0x1000, scoped, tag = 'output window, operand 2, single buffered']
    #allocation3 [shape = 's32[1]{0}', space=sflag, size = 0x4, scoped, tag = 'scoped memory for generator_total_loss.20']
    %11 = vsyncpa [#allocation3], 0
    // Predicated region
    $region2: #{generator_total_loss.20} parent=1 // pred_check
      _
    $region3: #{generator_total_loss.20} parent=1 // pred_check_branch
      %13 = sbr.rel (0) target = $region5
    $region4: #{generator_total_loss.20} parent=1 // pred_region
      _
    $region5: #{generator_total_loss.20} parent=1 // pred_fallthru
      _
    // Predicated region
    $region6: #{generator_total_loss.20} parent=1 // pred_check
      _
    $region7: #{generator_total_loss.20} parent=1 // pred_check_branch
      %15 = sbr.rel (0) target = $region9
    $region8: #{generator_total_loss.20} parent=1 // pred_region
      _
    $region9: #{generator_total_loss.20} parent=1 // pred_fallthru
      _
    // Predicated region
    $region10: #{generator_total_loss.20} parent=1 // pred_check
      _
    $region11: #{generator_total_loss.20} parent=1 // pred_check_branch
      %17 = sbr.rel (0) target = $region13
    $region12: #{generator_total_loss.20} parent=1 // pred_region
      _
    $region13: #{generator_total_loss.20} parent=1 // pred_fallthru
      _
    %v19 = vld [vmem:[%s1] sm:$0x3]
    %v20 = vld [vmem:[%s2] sm:$0xf]
    %v21 = vld [vmem:[%s0] sm:$0x7]
    %23 = vset.pattern.permute.xlu0 0
    %24 = vperm.xlu0 %23, %v20
    %v25 = vpop.permute.xlu0 %24
    %vm27 = vcmask 39936
    %v29 = vsel %vm27, %v19, 0
    %vm31 = vcmask 1041408
    %vm32 = vcmask 1042432
    %v33 = vsel %vm31, 4294967295, 65535
    %v34 = vsel %vm32, %v33, 0
    %v36 = vand.u32 %v21, %v34
    %38 = vmatprep.subr.bf16.mxu0 0
    %39 = vmatpush1.bf16.msra.mxu0 0
    %40 = vmatprep.subr.bf16.mxu0 0
    %41 = vmatpush1.bf16.msra.mxu0 0
    %42 = vmatprep.subr.bf16.mxu0 0
    %43 = vmatpush1.bf16.msra.mxu0 0
    %44 = vmatprep.subr.bf16.mxu0 0
    %45 = vmatpush1.bf16.msra.mxu0 0
    %46 = vmatprep.subr.bf16.mxu0 0
    %47 = vmatpush1.bf16.msra.mxu0 0
    %48 = vmatprep.subr.bf16.mxu0 0
    %49 = vmatpush1.bf16.msra.mxu0 0
    %50 = vmatprep.subr.bf16.mxu0 0
    %51 = vmatpush1.bf16.msra.mxu0 0
    %52 = vmatprep.subr.bf16.mxu0 0
    %53 = vmatpush1.bf16.msra.mxu0 %v36
    %54 = vmatprep.subr.bf16.mxu0 0
    %55 = vmatpush2.bf16.msra.mxu0 0
    %56 = vmatprep.subr.bf16.mxu0 0
    %57 = vmatpush2.bf16.msra.mxu0 0
    %58 = vmatprep.subr.bf16.mxu0 0
    %59 = vmatpush2.bf16.msra.mxu0 0
    %60 = vmatprep.subr.bf16.mxu0 0
    %61 = vmatpush2.bf16.msra.mxu0 0
    %62 = vmatprep.subr.bf16.mxu0 0
    %63 = vmatpush2.bf16.msra.mxu0 0
    %64 = vmatprep.subr.bf16.mxu0 0
    %65 = vmatpush2.bf16.msra.mxu0 0
    %66 = vmatprep.subr.bf16.mxu0 0
    %67 = vmatpush2.bf16.msra.mxu0 0
    %68 = vmatprep.subr.bf16.mxu0 0
    %69 = vmatpush2.bf16.msra.mxu0 0
    %70 = vmatprep.mubr.bf16.mxu0 0
    %71 = vmatmul.mubr.bf16.gmra.mxu0 %v29
    %v72 = vpop.f32.mrf.mxu0
    %v73 = vadd.f32 %v25, %v72
    %v74 = vpop.f32.mrf.mxu0
    %v75 = vpop.f32.mrf.mxu0
    %v76 = vpop.f32.mrf.mxu0
    %77 = vdwg.mxu0
    %vm78 = vcmp.gt.f32.partialorder %v73, 0.0
    %v79 = vmul.f32 %v73, 0.1
    %v80 = vsel %vm78, %v73, %v79
    %81 = vst [vmem:[%s3] sm:$0xf] %v80
    %s82 = scalar_lea.vmem %s0, 4
    %v83 = vld [vmem:[%s82] sm:$0x7]
    %v85 = vand.u32 %v83, %v34
    %87 = vmatprep.subr.bf16.mxu0 0
    %88 = vmatpush1.bf16.msra.mxu0 0
    %89 = vmatprep.subr.bf16.mxu0 0
    %90 = vmatpush1.bf16.msra.mxu0 0
    %91 = vmatprep.subr.bf16.mxu0 0
    %92 = vmatpush1.bf16.msra.mxu0 0
    %93 = vmatprep.subr.bf16.mxu0 0
    %94 = vmatpush1.bf16.msra.mxu0 0
    %95 = vmatprep.subr.bf16.mxu0 0
    %96 = vmatpush1.bf16.msra.mxu0 0
    %97 = vmatprep.subr.bf16.mxu0 0
    %98 = vmatpush1.bf16.msra.mxu0 0
    %99 = vmatprep.subr.bf16.mxu0 0
    %100 = vmatpush1.bf16.msra.mxu0 0
    %101 = vmatprep.subr.bf16.mxu0 0
    %102 = vmatpush1.bf16.msra.mxu0 %v85
    %103 = vmatprep.subr.bf16.mxu0 0
    %104 = vmatpush2.bf16.msra.mxu0 0
    %105 = vmatprep.subr.bf16.mxu0 0
    %106 = vmatpush2.bf16.msra.mxu0 0
    %107 = vmatprep.subr.bf16.mxu0 0
    %108 = vmatpush2.bf16.msra.mxu0 0
    %109 = vmatprep.subr.bf16.mxu0 0
    %110 = vmatpush2.bf16.msra.mxu0 0
    %111 = vmatprep.subr.bf16.mxu0 0
    %112 = vmatpush2.bf16.msra.mxu0 0
    %113 = vmatprep.subr.bf16.mxu0 0
    %114 = vmatpush2.bf16.msra.mxu0 0
    %115 = vmatprep.subr.bf16.mxu0 0
    %116 = vmatpush2.bf16.msra.mxu0 0
    %117 = vmatprep.subr.bf16.mxu0 0
    %118 = vmatpush2.bf16.msra.mxu0 0
    %119 = vmatprep.mubr.bf16.mxu0 0
    %120 = vmatmul.mubr.bf16.gmra.mxu0 %v29
    %v121 = vpop.f32.mrf.mxu0
    %v122 = vadd.f32 %v25, %v121
    %v123 = vpop.f32.mrf.mxu0
    %v124 = vpop.f32.mrf.mxu0
    %v125 = vpop.f32.mrf.mxu0
    %126 = vdwg.mxu0
    %vm127 = vcmp.gt.f32.partialorder %v122, 0.0
    %v128 = vmul.f32 %v122, 0.1
    %v129 = vsel %vm127, %v122, %v128
    %s130 = scalar_lea.vmem %s3, 4
    %131 = vst [vmem:[%s130] sm:$0xf] %v129
    %v132 = vsub.f32 %v80, %v129
    %v133 = vand.u32 2147483647, %v132
    %vm134 = vcmask 1043456
    %v135 = vsel %vm134, %v133, 0.0
    %136 = vadd.xlane.f32.xlu0 %v135
    %v137 = vpop.xlane.xlu0 %136
    %v138 = vrot.slane %v137, 4
    %v139 = vadd.f32 %v137, %v138
    %v140 = vrot.slane %v139, 2
    %v141 = vadd.f32 %v139, %v140
    %v142 = vrot.slane %v141, 1
    %v143 = vadd.f32 %v141, %v142
    %s144 = vtos %v143
    %v145 = vlaneseq
    %v146 = vand.u32 %v145, 127
    %s147 = smul.u32 0, 128
    %v148 = vstv %s147
    %v149 = vadd.s32 %v146, %v148
    %vm150 = vcmp.lt.s32.totalorder %v149, 66
    %v151 = vsel %vm150, 1, 0
    %v152 = vcvt.s32.f32 %v151
    %v153 = vsub.f32 1.0, %v129
    %v154 = vmul.f32 %v153, %v153
    %v155 = vmul.f32 %v154, %v152
    %v156 = vsel %vm134, %v155, 0.0
    %157 = vadd.xlane.f32.xlu0 %v156
    %v158 = vpop.xlane.xlu0 %157
    %v159 = vrot.slane %v158, 4
    %v160 = vadd.f32 %v158, %v159
    %v161 = vrot.slane %v160, 2
    %v162 = vadd.f32 %v160, %v161
    %v163 = vrot.slane %v162, 1
    %v164 = vadd.f32 %v162, %v163
    %s165 = vtos %v164
    %v166 = vstv %s144
    %167 = vst [vmem:[%s4] sm:$0xff] %v166
    %v168 = vstv %s165
    %169 = vst [vmem:[#allocation2] sm:$0xff] %v168
    // Predicated region
    $region14: #{generator_total_loss.20} parent=1 // pred_check
      _
    $region15: #{generator_total_loss.20} parent=1 // pred_check_branch
      %171 = sbr.rel (0) target = $region17
    $region16: #{generator_total_loss.20} parent=1 // pred_region
      _
    $region17: #{generator_total_loss.20} parent=1 // pred_fallthru
      _
    // Predicated region
    $region18: #{generator_total_loss.20} parent=1 // pred_check
      _
    $region19: #{generator_total_loss.20} parent=1 // pred_check_branch
      %173 = sbr.rel (0) target = $region21
    $region20: #{generator_total_loss.20} parent=1 // pred_region
      _
    $region21: #{generator_total_loss.20} parent=1 // pred_fallthru
      _
    // Predicated region
    $region22: #{generator_total_loss.20} parent=1 // pred_check
      _
    $region23: #{generator_total_loss.20} parent=1 // pred_check_branch
      %175 = sbr.rel (0) target = $region25
    $region24: #{generator_total_loss.20} parent=1 // pred_region
      %s177 = ssub.s32 128, 128
      %178 = vsyncadd [#allocation3], %s177
      %s180 = sshll.u32 [#allocation2], 4
      %s181 = int_to_ptr.vmem [resolvable:$true] %s180
      %183 = dma.vmem_to_hbm [thread:$0]  %s181, 128, %s5, [#allocation3]
    $region25: #{generator_total_loss.20} parent=1 // pred_fallthru
      _
    // Predicated region
    $region26: #{generator_total_loss.20} parent=1 // pred_check
      _
    $region27: #{generator_total_loss.20} parent=1 // pred_check_branch
      %185 = sbr.rel (0) target = $region29
    $region28: #{generator_total_loss.20} parent=1 // pred_region
      _
    $region29: #{generator_total_loss.20} parent=1 // pred_fallthru
      _
    // Predicated region
    $region30: #{generator_total_loss.20} parent=1 // pred_check
      _
    $region31: #{generator_total_loss.20} parent=1 // pred_check_branch
      %187 = sbr.rel (0) target = $region33
    $region32: #{generator_total_loss.20} parent=1 // pred_region
      _
    $region33: #{generator_total_loss.20} parent=1 // pred_fallthru
      _
    // Predicated region
    $region34: #{generator_total_loss.20} parent=1 // pred_check
      _
    $region35: #{generator_total_loss.20} parent=1 // pred_check_branch
      %189 = sbr.rel (0) target = $region37
    $region36: #{generator_total_loss.20} parent=1 // pred_region
      %190 = dma.done [#allocation3], 128
    $region37: #{generator_total_loss.20} parent=1 // pred_fallthru
      _
    %191 = vsyncpa [#allocation3], 1

// kernel: generator_total_loss.21
$region0: #{generator_total_loss.21}
  #allocation0 [shape = 'u32[]', space=smem, size = 0x4, offset = 0x4, fixed_abs, tag = 'smem constant byte address 0x4 - core index']
  #allocation1 [shape = 'u32[144,128]{1,0:T(1,128)}', space=vmem, size = 0x12000, scoped, tag = 'internal scratch']
  %s0 = inlined_call_operand.vmem [shape: bf16[2,20,128], index: 0, kind: input, shape index: {}]
  %s1 = inlined_call_operand.vmem [shape: bf16[8,20], index: 1, kind: input, shape index: {}]
  %s2 = inlined_call_operand.vmem [shape: f32[8,1], index: 2, kind: input, shape index: {}]
  %s3 = inlined_call_operand.vmem [shape: f32[2,8,128], index: 3, kind: output, shape index: {0}]
  %s4 = inlined_call_operand.vmem [shape: f32[1,8,128], index: 4, kind: output, shape index: {1}]
  %s5 = inlined_call_operand.hbm [shape: f32[1,8,128], index: 5, kind: output, shape index: {2}]
  %6 = xla_tuple %s3, %s4, %s5
  %s7 = sld [smem:[#allocation0]]
  $region38: #{generator_total_loss.21} parent=0
    _
  %s9 = ssub.s32 1, %s7
  %s10 = scalar_select 0, %s9, %s7
  $region1: #{generator_total_loss.21} parent=0
    #allocation2 [shape = 'u8[4096]{0}', space=vmem, size = 0x1000, scoped, tag = 'output window, operand 2, single buffered']
    #allocation3 [shape = 's32[1]{0}', space=sflag, size = 0x4, scoped, tag = 'scoped memory for generator_total_loss.21']
    %11 = vsyncpa [#allocation3], 0
    // Predicated region
    $region2: #{generator_total_loss.21} parent=1 // pred_check
      _
    $region3: #{generator_total_loss.21} parent=1 // pred_check_branch
      %13 = sbr.rel (0) target = $region5
    $region4: #{generator_total_loss.21} parent=1 // pred_region
      _
    $region5: #{generator_total_loss.21} parent=1 // pred_fallthru
      _
    // Predicated region
    $region6: #{generator_total_loss.21} parent=1 // pred_check
      _
    $region7: #{generator_total_loss.21} parent=1 // pred_check_branch
      %15 = sbr.rel (0) target = $region9
    $region8: #{generator_total_loss.21} parent=1 // pred_region
      _
    $region9: #{generator_total_loss.21} parent=1 // pred_fallthru
      _
    // Predicated region
    $region10: #{generator_total_loss.21} parent=1 // pred_check
      _
    $region11: #{generator_total_loss.21} parent=1 // pred_check_branch
      %17 = sbr.rel (0) target = $region13
    $region12: #{generator_total_loss.21} parent=1 // pred_region
      _
    $region13: #{generator_total_loss.21} parent=1 // pred_fallthru
      _
    %v19 = vld [vmem:[%s1] sm:$0xf]
    %v20 = vld [vmem:[%s2] sm:$0xff]
    %v21 = vld [vmem:[%s0] sm:$0xf]
    %v22 = vld [vmem:[%s0 + $0x4] sm:$0xf]
    %v23 = vld [vmem:[%s0 + $0x8] sm:$0x3]
    %25 = vset.pattern.permute.xlu0 0
    %26 = vperm.xlu0 %25, %v20
    %v27 = vpop.permute.xlu0 %26
    %v32 = vunpack.c.l.b16 %v21
    %v33 = vunpack.c.l.b16 %v22
    %v34 = vunpack.c.l.b16 %v23
    %v35 = vpack.c.b16 %v33, %v32
    %v36 = vpack.c.b16 %v34, %v34
    %vm38 = vcmask 162816
    %v40 = vsel %vm38, %v19, 0
    %vm42 = vcmask 1041408
    %v44 = vsel %vm42, %v36, 0
    %46 = vmatprep.subr.bf16.mxu0 0
    %47 = vmatpush1.bf16.msra.mxu0 0
    %48 = vmatprep.subr.bf16.mxu0 0
    %49 = vmatpush1.bf16.msra.mxu0 0
    %50 = vmatprep.subr.bf16.mxu0 0
    %51 = vmatpush1.bf16.msra.mxu0 0
    %52 = vmatprep.subr.bf16.mxu0 0
    %53 = vmatpush1.bf16.msra.mxu0 0
    %54 = vmatprep.subr.bf16.mxu0 0
    %55 = vmatpush1.bf16.msra.mxu0 0
    %56 = vmatprep.subr.bf16.mxu0 0
    %57 = vmatpush1.bf16.msra.mxu0 0
    %58 = vmatprep.subr.bf16.mxu0 0
    %59 = vmatpush1.bf16.msra.mxu0 %v44
    %60 = vmatprep.subr.bf16.mxu0 0
    %61 = vmatpush1.bf16.msra.mxu0 %v35
    %62 = vmatprep.subr.bf16.mxu0 0
    %63 = vmatpush2.bf16.msra.mxu0 0
    %64 = vmatprep.subr.bf16.mxu0 0
    %65 = vmatpush2.bf16.msra.mxu0 0
    %66 = vmatprep.subr.bf16.mxu0 0
    %67 = vmatpush2.bf16.msra.mxu0 0
    %68 = vmatprep.subr.bf16.mxu0 0
    %69 = vmatpush2.bf16.msra.mxu0 0
    %70 = vmatprep.subr.bf16.mxu0 0
    %71 = vmatpush2.bf16.msra.mxu0 0
    %72 = vmatprep.subr.bf16.mxu0 0
    %73 = vmatpush2.bf16.msra.mxu0 0
    %74 = vmatprep.subr.bf16.mxu0 0
    %75 = vmatpush2.bf16.msra.mxu0 0
    %76 = vmatprep.subr.bf16.mxu0 0
    %77 = vmatpush2.bf16.msra.mxu0 0
    %78 = vmatprep.mubr.bf16.mxu0 0
    %79 = vmatmul.mubr.bf16.gmra.mxu0 %v40
    %v80 = vpop.f32.mrf.mxu0
    %v81 = vadd.f32 %v27, %v80
    %v82 = vpop.f32.mrf.mxu0
    %v83 = vpop.f32.mrf.mxu0
    %v84 = vpop.f32.mrf.mxu0
    %85 = vdwg.mxu0
    %vm86 = vcmp.gt.f32.partialorder %v81, 0.0
    %v87 = vmul.f32 %v81, 0.1
    %v88 = vsel %vm86, %v81, %v87
    %89 = vst [vmem:[%s3] sm:$0xff] %v88
    %s90 = scalar_lea.vmem %s0, 12
    %v91 = vld [vmem:[%s90] sm:$0xf]
    %v92 = vld [vmem:[%s90 + $0x4] sm:$0xf]
    %v93 = vld [vmem:[%s90 + $0x8] sm:$0x3]
    %v97 = vunpack.c.l.b16 %v91
    %v98 = vunpack.c.l.b16 %v92
    %v99 = vunpack.c.l.b16 %v93
    %v100 = vpack.c.b16 %v98, %v97
    %v101 = vpack.c.b16 %v99, %v99
    %v104 = vsel %vm42, %v101, 0
    %106 = vmatprep.subr.bf16.mxu0 0
    %107 = vmatpush1.bf16.msra.mxu0 0
    %108 = vmatprep.subr.bf16.mxu0 0
    %109 = vmatpush1.bf16.msra.mxu0 0
    %110 = vmatprep.subr.bf16.mxu0 0
    %111 = vmatpush1.bf16.msra.mxu0 0
    %112 = vmatprep.subr.bf16.mxu0 0
    %113 = vmatpush1.bf16.msra.mxu0 0
    %114 = vmatprep.subr.bf16.mxu0 0
    %115 = vmatpush1.bf16.msra.mxu0 0
    %116 = vmatprep.subr.bf16.mxu0 0
    %117 = vmatpush1.bf16.msra.mxu0 0
    %118 = vmatprep.subr.bf16.mxu0 0
    %119 = vmatpush1.bf16.msra.mxu0 %v104
    %120 = vmatprep.subr.bf16.mxu0 0
    %121 = vmatpush1.bf16.msra.mxu0 %v100
    %122 = vmatprep.subr.bf16.mxu0 0
    %123 = vmatpush2.bf16.msra.mxu0 0
    %124 = vmatprep.subr.bf16.mxu0 0
    %125 = vmatpush2.bf16.msra.mxu0 0
    %126 = vmatprep.subr.bf16.mxu0 0
    %127 = vmatpush2.bf16.msra.mxu0 0
    %128 = vmatprep.subr.bf16.mxu0 0
    %129 = vmatpush2.bf16.msra.mxu0 0
    %130 = vmatprep.subr.bf16.mxu0 0
    %131 = vmatpush2.bf16.msra.mxu0 0
    %132 = vmatprep.subr.bf16.mxu0 0
    %133 = vmatpush2.bf16.msra.mxu0 0
    %134 = vmatprep.subr.bf16.mxu0 0
    %135 = vmatpush2.bf16.msra.mxu0 0
    %136 = vmatprep.subr.bf16.mxu0 0
    %137 = vmatpush2.bf16.msra.mxu0 0
    %138 = vmatprep.mubr.bf16.mxu0 0
    %139 = vmatmul.mubr.bf16.gmra.mxu0 %v40
    %v140 = vpop.f32.mrf.mxu0
    %v141 = vadd.f32 %v27, %v140
    %v142 = vpop.f32.mrf.mxu0
    %v143 = vpop.f32.mrf.mxu0
    %v144 = vpop.f32.mrf.mxu0
    %145 = vdwg.mxu0
    %vm146 = vcmp.gt.f32.partialorder %v141, 0.0
    %v147 = vmul.f32 %v141, 0.1
    %v148 = vsel %vm146, %v141, %v147
    %s149 = scalar_lea.vmem %s3, 8
    %150 = vst [vmem:[%s149] sm:$0xff] %v148
    %v151 = vsub.f32 %v88, %v148
    %v152 = vand.u32 2147483647, %v151
    %153 = vadd.xlane.f32.xlu0 %v152
    %v154 = vpop.xlane.xlu0 %153
    %v155 = vrot.slane %v154, 4
    %v156 = vadd.f32 %v154, %v155
    %v157 = vrot.slane %v156, 2
    %v158 = vadd.f32 %v156, %v157
    %v159 = vrot.slane %v158, 1
    %v160 = vadd.f32 %v158, %v159
    %s161 = vtos %v160
    %v162 = vlaneseq
    %v163 = vand.u32 %v162, 127
    %s164 = smul.u32 0, 128
    %v165 = vstv %s164
    %v166 = vadd.s32 %v163, %v165
    %vm167 = vcmp.lt.s32.totalorder %v166, 24
    %v168 = vsel %vm167, 1, 0
    %v169 = vcvt.s32.f32 %v168
    %v170 = vsub.f32 1.0, %v148
    %v171 = vmul.f32 %v170, %v170
    %v172 = vmul.f32 %v171, %v169
    %173 = vadd.xlane.f32.xlu0 %v172
    %v174 = vpop.xlane.xlu0 %173
    %v175 = vrot.slane %v174, 4
    %v176 = vadd.f32 %v174, %v175
    %v177 = vrot.slane %v176, 2
    %v178 = vadd.f32 %v176, %v177
    %v179 = vrot.slane %v178, 1
    %v180 = vadd.f32 %v178, %v179
    %s181 = vtos %v180
    %v182 = vstv %s161
    %183 = vst [vmem:[%s4] sm:$0xff] %v182
    %v184 = vstv %s181
    %185 = vst [vmem:[#allocation2] sm:$0xff] %v184
    // Predicated region
    $region14: #{generator_total_loss.21} parent=1 // pred_check
      _
    $region15: #{generator_total_loss.21} parent=1 // pred_check_branch
      %187 = sbr.rel (0) target = $region17
    $region16: #{generator_total_loss.21} parent=1 // pred_region
      _
    $region17: #{generator_total_loss.21} parent=1 // pred_fallthru
      _
    // Predicated region
    $region18: #{generator_total_loss.21} parent=1 // pred_check
      _
    $region19: #{generator_total_loss.21} parent=1 // pred_check_branch
      %189 = sbr.rel (0) target = $region21
    $region20: #{generator_total_loss.21} parent=1 // pred_region
      _
    $region21: #{generator_total_loss.21} parent=1 // pred_fallthru
      _
    // Predicated region
    $region22: #{generator_total_loss.21} parent=1 // pred_check
      _
    $region23: #{generator_total_loss.21} parent=1 // pred_check_branch
      %191 = sbr.rel (0) target = $region25
    $region24: #{generator_total_loss.21} parent=1 // pred_region
      %s193 = ssub.s32 128, 128
      %194 = vsyncadd [#allocation3], %s193
      %s196 = sshll.u32 [#allocation2], 4
      %s197 = int_to_ptr.vmem [resolvable:$true] %s196
      %199 = dma.vmem_to_hbm [thread:$0]  %s197, 128, %s5, [#allocation3]
    $region25: #{generator_total_loss.21} parent=1 // pred_fallthru
      _
    // Predicated region
    $region26: #{generator_total_loss.21} parent=1 // pred_check
      _
    $region27: #{generator_total_loss.21} parent=1 // pred_check_branch
      %201 = sbr.rel (0) target = $region29
    $region28: #{generator_total_loss.21} parent=1 // pred_region
      _
    $region29: #{generator_total_loss.21} parent=1 // pred_fallthru
      _
    // Predicated region
    $region30: #{generator_total_loss.21} parent=1 // pred_check
      _
    $region31: #{generator_total_loss.21} parent=1 // pred_check_branch
      %203 = sbr.rel (0) target = $region33
    $region32: #{generator_total_loss.21} parent=1 // pred_region
      _
    $region33: #{generator_total_loss.21} parent=1 // pred_fallthru
      _
    // Predicated region
    $region34: #{generator_total_loss.21} parent=1 // pred_check
      _
    $region35: #{generator_total_loss.21} parent=1 // pred_check_branch
      %205 = sbr.rel (0) target = $region37
    $region36: #{generator_total_loss.21} parent=1 // pred_region
      %206 = dma.done [#allocation3], 128
    $region37: #{generator_total_loss.21} parent=1 // pred_fallthru
      _
    %207 = vsyncpa [#allocation3], 1

// kernel: squeeze.53
$region0: #{squeeze.53}
  %s0 = inlined_call_operand.vmem [shape: bf16[1,4,64], index: 0, kind: input, shape index: {}]
  %s1 = inlined_call_operand.vmem [shape: bf16[4,4,16], index: 1, kind: output, shape index: {}]
  $region1: #{squeeze.53} parent=0
    #allocation0 [shape = 'u8[16384]{0}', space=vmem, size = 0x4000, scoped, tag = 'scoped mem for output reshape']
    #allocation1 [shape = 'u8[4096]{0}', space=vmem, size = 0x1000, scoped, tag = 'scoped mem for input reshape']
    %s3 = smul.u32 2, 2
    %s4 = sshll.u32 1, %s3
    %s5 = ssub.s32 %s4, 1
    %s6 = sshrl.u32 %s5, 1
    %s7 = sor.u32 %s5, %s6
    %s8 = sand.u32 %s7, 85
    %s9 = sshrl.u32 %s8, 1
    %s10 = sor.u32 %s8, %s9
    %s11 = sand.u32 51, %s10
    %s12 = sshrl.u32 %s11, 2
    %s13 = sor.u32 %s11, %s12
    %s14 = sand.u32 15, %s13
    %v15 = vld [vmem:[%s0] sm:%s14]
    %v16 = vunpack.c.l.bf16 %v15
    %v17 = vunpack.c.h.bf16 %v15
    %18 = vst [vmem:[#allocation1] sm:%s5] %v16
    %v19 = vld [vmem:[#allocation1] sm:$0xf]
    %vm20 = vcmask 130048
    %21 = vst.msk [vmem:[#allocation0] ss:$8 sm:$0xf] %vm20, %v19
    %v22 = vld [vmem:[#allocation1] sm:$0xf]
    %23 = vrot.lane.b32.xlu0 %v22, 112
    %v24 = vpop.permute.xlu0 %23
    %vm25 = vcmask 130048
    %s26 = scalar_lea.vmem [#allocation0], 1
    %27 = vst.msk [vmem:[%s26] ss:$8 sm:$0xf] %vm25, %v24
    %v28 = vld [vmem:[#allocation1] sm:$0xf]
    %29 = vrot.lane.b32.xlu0 %v28, 96
    %v30 = vpop.permute.xlu0 %29
    %vm31 = vcmask 130048
    %s32 = scalar_lea.vmem [#allocation0], 2
    %33 = vst.msk [vmem:[%s32] ss:$8 sm:$0xf] %vm31, %v30
    %v34 = vld [vmem:[#allocation1] sm:$0xf]
    %35 = vrot.lane.b32.xlu0 %v34, 80
    %v36 = vpop.permute.xlu0 %35
    %vm37 = vcmask 130048
    %s38 = scalar_lea.vmem [#allocation0], 3
    %39 = vst.msk [vmem:[%s38] ss:$8 sm:$0xf] %vm37, %v36
    %s41 = smul.u32 2, 2
    %s42 = sshll.u32 1, %s41
    %s43 = ssub.s32 %s42, 1
    %s44 = sshrl.u32 %s41, 1
    %v45 = vld [vmem:[#allocation0] sm:%s43]
    %v46 = vpack.c.bf16 0.0, %v45
    %s47 = sshll.u32 1, %s44
    %s48 = ssub.s32 %s47, 1
    %49 = vst [vmem:[%s1] sm:%s48] %v46
    %s50 = scalar_lea.vmem [#allocation0], 8
    %v51 = vld [vmem:[%s50] sm:%s43]
    %v52 = vpack.c.bf16 0.0, %v51
    %s53 = sshll.u32 1, %s44
    %s54 = ssub.s32 %s53, 1
    %s55 = scalar_lea.vmem %s1, 2
    %56 = vst [vmem:[%s55] sm:%s54] %v52
    %s57 = scalar_lea.vmem [#allocation0], 16
    %v58 = vld [vmem:[%s57] sm:%s43]
    %v59 = vpack.c.bf16 0.0, %v58
    %s60 = sshll.u32 1, %s44
    %s61 = ssub.s32 %s60, 1
    %s62 = smul.addr 2, 2
    %s63 = scalar_lea.vmem %s1, %s62
    %64 = vst [vmem:[%s63] sm:%s61] %v59
    %s65 = scalar_lea.vmem [#allocation0], 24
    %v66 = vld [vmem:[%s65] sm:%s43]
    %v67 = vpack.c.bf16 0.0, %v66
    %s68 = sshll.u32 1, %s44
    %s69 = ssub.s32 %s68, 1
    %s70 = smul.addr 2, 3
    %s71 = scalar_lea.vmem %s1, %s70
    %72 = vst [vmem:[%s71] sm:%s69] %v67

// kernel: generator_total_loss.22
$region0: #{generator_total_loss.22}
  #allocation0 [shape = 'u32[]', space=smem, size = 0x4, offset = 0x4, fixed_abs, tag = 'smem constant byte address 0x4 - core index']
  #allocation1 [shape = 'u32[144,128]{1,0:T(1,128)}', space=vmem, size = 0x12000, scoped, tag = 'internal scratch']
  #allocation2 [shape = 'f32[1,1]{1,0:T(1,128)S(1)}', space=vmem, size = 0x200, scoped, tag = 'scoped memory for generator_total_loss.22']
  %s0 = inlined_call_operand.vmem [shape: bf16[2,24,128], index: 0, kind: input, shape index: {}]
  %s1 = inlined_call_operand.vmem [shape: bf16[1,24], index: 1, kind: input, shape index: {}]
  %s2 = inlined_call_operand.<no memory space> [shape: f32[1,1], index: 2, kind: input, shape index: {}]
  %s3 = inlined_call_operand.vmem [shape: f32[2,1,128], index: 3, kind: output, shape index: {0}]
  %s4 = inlined_call_operand.vmem [shape: f32[1,8,128], index: 4, kind: output, shape index: {1}]
  %s5 = inlined_call_operand.vmem [shape: f32[1,8,128], index: 5, kind: output, shape index: {2}]
  %6 = xla_tuple %s3, %s4, %s5
  %s7 = sld [smem:[#allocation0]]
  $region38: #{generator_total_loss.22} parent=0
    _
  %s9 = ssub.s32 1, %s7
  %s10 = scalar_select 0, %s9, %s7
  %v11 = vstv %s2
  %12 = vst [vmem:[#allocation2] sm:$0x1] %v11
  // Predicated region
  $region2: #{generator_total_loss.22} parent=0 // pred_check
    _
  $region3: #{generator_total_loss.22} parent=0 // pred_check_branch
    %14 = sbr.rel (0) target = $region5
  $region4: #{generator_total_loss.22} parent=0 // pred_region
    _
  $region5: #{generator_total_loss.22} parent=0 // pred_fallthru
    _
  // Predicated region
  $region6: #{generator_total_loss.22} parent=0 // pred_check
    _
  $region7: #{generator_total_loss.22} parent=0 // pred_check_branch
    %16 = sbr.rel (0) target = $region9
  $region8: #{generator_total_loss.22} parent=0 // pred_region
    _
  $region9: #{generator_total_loss.22} parent=0 // pred_fallthru
    _
  // Predicated region
  $region10: #{generator_total_loss.22} parent=0 // pred_check
    _
  $region11: #{generator_total_loss.22} parent=0 // pred_check_branch
    %18 = sbr.rel (0) target = $region13
  $region12: #{generator_total_loss.22} parent=0 // pred_region
    _
  $region13: #{generator_total_loss.22} parent=0 // pred_fallthru
    _
  %v20 = vld [vmem:[%s1] sm:$0x1]
  %v21 = vld [vmem:[#allocation2] sm:$0x1]
  %v22 = vld [vmem:[%s0] sm:$0xf]
  %v23 = vld [vmem:[%s0 + $0x4] sm:$0xf]
  %v24 = vld [vmem:[%s0 + $0x8] sm:$0xf]
  %26 = vset.pattern.permute.xlu0 0
  %27 = vperm.xlu0 %26, %v21
  %v28 = vpop.permute.xlu0 %27
  %v30 = vlaneseq
  %v31 = vshrl.u32 %v30, 7
  %v32 = vsub.s32 0, %v31
  %v33 = vrot.slane %v28, %v32
  %v37 = vunpack.c.l.b16 %v22
  %v38 = vunpack.c.l.b16 %v23
  %v39 = vunpack.c.l.b16 %v24
  %v40 = vpack.c.b16 %v38, %v37
  %v41 = vpack.c.b16 %v39, %v39
  %vm43 = vcmask 195584
  %v45 = vsel %vm43, %v20, 0
  %vm47 = vcmask 1043456
  %v49 = vsel %vm47, %v41, 0
  %51 = vmatprep.subr.bf16.mxu0 0
  %52 = vmatpush1.bf16.msra.mxu0 0
  %53 = vmatprep.subr.bf16.mxu0 0
  %54 = vmatpush1.bf16.msra.mxu0 0
  %55 = vmatprep.subr.bf16.mxu0 0
  %56 = vmatpush1.bf16.msra.mxu0 0
  %57 = vmatprep.subr.bf16.mxu0 0
  %58 = vmatpush1.bf16.msra.mxu0 0
  %59 = vmatprep.subr.bf16.mxu0 0
  %60 = vmatpush1.bf16.msra.mxu0 0
  %61 = vmatprep.subr.bf16.mxu0 0
  %62 = vmatpush1.bf16.msra.mxu0 0
  %63 = vmatprep.subr.bf16.mxu0 0
  %64 = vmatpush1.bf16.msra.mxu0 %v49
  %65 = vmatprep.subr.bf16.mxu0 0
  %66 = vmatpush1.bf16.msra.mxu0 %v40
  %67 = vmatprep.subr.bf16.mxu0 0
  %68 = vmatpush2.bf16.msra.mxu0 0
  %69 = vmatprep.subr.bf16.mxu0 0
  %70 = vmatpush2.bf16.msra.mxu0 0
  %71 = vmatprep.subr.bf16.mxu0 0
  %72 = vmatpush2.bf16.msra.mxu0 0
  %73 = vmatprep.subr.bf16.mxu0 0
  %74 = vmatpush2.bf16.msra.mxu0 0
  %75 = vmatprep.subr.bf16.mxu0 0
  %76 = vmatpush2.bf16.msra.mxu0 0
  %77 = vmatprep.subr.bf16.mxu0 0
  %78 = vmatpush2.bf16.msra.mxu0 0
  %79 = vmatprep.subr.bf16.mxu0 0
  %80 = vmatpush2.bf16.msra.mxu0 0
  %81 = vmatprep.subr.bf16.mxu0 0
  %82 = vmatpush2.bf16.msra.mxu0 0
  %83 = vmatprep.mubr.bf16.mxu0 0
  %84 = vmatmul.mubr.bf16.gmra.mxu0 %v45
  %v85 = vpop.f32.mrf.mxu0
  %v86 = vadd.f32 %v33, %v85
  %v87 = vpop.f32.mrf.mxu0
  %v88 = vpop.f32.mrf.mxu0
  %v89 = vpop.f32.mrf.mxu0
  %90 = vdwg.mxu0
  %91 = vst [vmem:[%s3] sm:$0x1] %v86
  %s92 = scalar_lea.vmem %s0, 12
  %v93 = vld [vmem:[%s92] sm:$0xf]
  %v94 = vld [vmem:[%s92 + $0x4] sm:$0xf]
  %v95 = vld [vmem:[%s92 + $0x8] sm:$0xf]
  %v99 = vunpack.c.l.b16 %v93
  %v100 = vunpack.c.l.b16 %v94
  %v101 = vunpack.c.l.b16 %v95
  %v102 = vpack.c.b16 %v100, %v99
  %v103 = vpack.c.b16 %v101, %v101
  %v106 = vsel %vm47, %v103, 0
  %108 = vmatprep.subr.bf16.mxu0 0
  %109 = vmatpush1.bf16.msra.mxu0 0
  %110 = vmatprep.subr.bf16.mxu0 0
  %111 = vmatpush1.bf16.msra.mxu0 0
  %112 = vmatprep.subr.bf16.mxu0 0
  %113 = vmatpush1.bf16.msra.mxu0 0
  %114 = vmatprep.subr.bf16.mxu0 0
  %115 = vmatpush1.bf16.msra.mxu0 0
  %116 = vmatprep.subr.bf16.mxu0 0
  %117 = vmatpush1.bf16.msra.mxu0 0
  %118 = vmatprep.subr.bf16.mxu0 0
  %119 = vmatpush1.bf16.msra.mxu0 0
  %120 = vmatprep.subr.bf16.mxu0 0
  %121 = vmatpush1.bf16.msra.mxu0 %v106
  %122 = vmatprep.subr.bf16.mxu0 0
  %123 = vmatpush1.bf16.msra.mxu0 %v102
  %124 = vmatprep.subr.bf16.mxu0 0
  %125 = vmatpush2.bf16.msra.mxu0 0
  %126 = vmatprep.subr.bf16.mxu0 0
  %127 = vmatpush2.bf16.msra.mxu0 0
  %128 = vmatprep.subr.bf16.mxu0 0
  %129 = vmatpush2.bf16.msra.mxu0 0
  %130 = vmatprep.subr.bf16.mxu0 0
  %131 = vmatpush2.bf16.msra.mxu0 0
  %132 = vmatprep.subr.bf16.mxu0 0
  %133 = vmatpush2.bf16.msra.mxu0 0
  %134 = vmatprep.subr.bf16.mxu0 0
  %135 = vmatpush2.bf16.msra.mxu0 0
  %136 = vmatprep.subr.bf16.mxu0 0
  %137 = vmatpush2.bf16.msra.mxu0 0
  %138 = vmatprep.subr.bf16.mxu0 0
  %139 = vmatpush2.bf16.msra.mxu0 0
  %140 = vmatprep.mubr.bf16.mxu0 0
  %141 = vmatmul.mubr.bf16.gmra.mxu0 %v45
  %v142 = vpop.f32.mrf.mxu0
  %v143 = vadd.f32 %v33, %v142
  %v144 = vpop.f32.mrf.mxu0
  %v145 = vpop.f32.mrf.mxu0
  %v146 = vpop.f32.mrf.mxu0
  %147 = vdwg.mxu0
  %s148 = scalar_lea.vmem %s3, 1
  %149 = vst [vmem:[%s148] sm:$0x1] %v143
  %v150 = vsub.f32 %v86, %v143
  %v151 = vand.u32 2147483647, %v150
  %vm152 = vcmask 1040384
  %v153 = vsel %vm152, %v151, 0.0
  %154 = vadd.xlane.f32.xlu0 %v153
  %v155 = vpop.xlane.xlu0 %154
  %v156 = vrot.slane %v155, 4
  %v157 = vadd.f32 %v155, %v156
  %v158 = vrot.slane %v157, 2
  %v159 = vadd.f32 %v157, %v158
  %v160 = vrot.slane %v159, 1
  %v161 = vadd.f32 %v159, %v160
  %s162 = vtos %v161
  %v163 = vlaneseq
  %v164 = vand.u32 %v163, 127
  %s165 = smul.u32 0, 128
  %v166 = vstv %s165
  %v167 = vadd.s32 %v164, %v166
  %vm168 = vcmp.lt.s32.totalorder %v167, 24
  %v169 = vsel %vm168, 1, 0
  %v170 = vcvt.s32.f32 %v169
  %v171 = vsub.f32 1.0, %v143
  %v172 = vmul.f32 %v171, %v171
  %v173 = vmul.f32 %v172, %v170
  %v174 = vsel %vm152, %v173, 0.0
  %175 = vadd.xlane.f32.xlu0 %v174
  %v176 = vpop.xlane.xlu0 %175
  %v177 = vrot.slane %v176, 4
  %v178 = vadd.f32 %v176, %v177
  %v179 = vrot.slane %v178, 2
  %v180 = vadd.f32 %v178, %v179
  %v181 = vrot.slane %v180, 1
  %v182 = vadd.f32 %v180, %v181
  %s183 = vtos %v182
  %v184 = vstv %s162
  %185 = vst [vmem:[%s4] sm:$0xff] %v184
  %v186 = vstv %s183
  %187 = vst [vmem:[%s5] sm:$0xff] %v186
  // Predicated region
  $region14: #{generator_total_loss.22} parent=0 // pred_check
    _
  $region15: #{generator_total_loss.22} parent=0 // pred_check_branch
    %189 = sbr.rel (0) target = $region17
  $region16: #{generator_total_loss.22} parent=0 // pred_region
    _
  $region17: #{generator_total_loss.22} parent=0 // pred_fallthru
    _
  // Predicated region
  $region18: #{generator_total_loss.22} parent=0 // pred_check
    _
  $region19: #{generator_total_loss.22} parent=0 // pred_check_branch
    %191 = sbr.rel (0) target = $region21
  $region20: #{generator_total_loss.22} parent=0 // pred_region
    _
  $region21: #{generator_total_loss.22} parent=0 // pred_fallthru
    _
  // Predicated region
  $region22: #{generator_total_loss.22} parent=0 // pred_check
    _
  $region23: #{generator_total_loss.22} parent=0 // pred_check_branch
    %193 = sbr.rel (0) target = $region25
  $region24: #{generator_total_loss.22} parent=0 // pred_region
    _
  $region25: #{generator_total_loss.22} parent=0 // pred_fallthru
    _
  // Predicated region
  $region26: #{generator_total_loss.22} parent=0 // pred_check
    _
  $region27: #{generator_total_loss.22} parent=0 // pred_check_branch
    %195 = sbr.rel (0) target = $region29
  $region28: #{generator_total_loss.22} parent=0 // pred_region
    _
  $region29: #{generator_total_loss.22} parent=0 // pred_fallthru
    _
  // Predicated region
  $region30: #{generator_total_loss.22} parent=0 // pred_check
    _
  $region31: #{generator_total_loss.22} parent=0 // pred_check_branch
    %197 = sbr.rel (0) target = $region33
  $region32: #{generator_total_loss.22} parent=0 // pred_region
    _
  $region33: #{generator_total_loss.22} parent=0 // pred_fallthru
    _
  // Predicated region
  $region34: #{generator_total_loss.22} parent=0 // pred_check
    _
  $region35: #{generator_total_loss.22} parent=0 // pred_check_branch
    %199 = sbr.rel (0) target = $region37
  $region36: #{generator_total_loss.22} parent=0 // pred_region
    _
  $region37: #{generator_total_loss.22} parent=0 // pred_fallthru
    _

// kernel: squeeze.56
$region0: #{squeeze.56}
  %s0 = inlined_call_operand.vmem [shape: bf16[1,8,24], index: 0, kind: input, shape index: {}]
  %s1 = inlined_call_operand.vmem [shape: bf16[8,4,6], index: 1, kind: output, shape index: {}]
  $region1: #{squeeze.56} parent=0
    #allocation0 [shape = 'u8[32768]{0}', space=vmem, size = 0x8000, scoped, tag = 'scoped mem for output reshape']
    #allocation1 [shape = 'u8[4096]{0}', space=vmem, size = 0x1000, scoped, tag = 'scoped mem for input reshape']
    %s3 = smul.u32 4, 2
    %s4 = sshll.u32 1, %s3
    %s5 = ssub.s32 %s4, 1
    %s6 = sshrl.u32 %s5, 1
    %s7 = sor.u32 %s5, %s6
    %s8 = sand.u32 %s7, 85
    %s9 = sshrl.u32 %s8, 1
    %s10 = sor.u32 %s8, %s9
    %s11 = sand.u32 51, %s10
    %s12 = sshrl.u32 %s11, 2
    %s13 = sor.u32 %s11, %s12
    %s14 = sand.u32 15, %s13
    %v15 = vld [vmem:[%s0] sm:%s14]
    %v16 = vunpack.c.l.bf16 %v15
    %v17 = vunpack.c.h.bf16 %v15
    %18 = vst [vmem:[#allocation1] sm:%s5] %v16
    %v19 = vld [vmem:[#allocation1] sm:$0xff]
    %vm20 = vcmask 48128
    %21 = vst.msk [vmem:[#allocation0] ss:$8 sm:$0xf] %vm20, %v19
    %22 = vst.msk [vmem:[#allocation0] ss:$8 sm:$0xf0] %vm20, %v19
    %v23 = vld [vmem:[#allocation1] sm:$0xff]
    %24 = vrot.lane.b32.xlu0 %v23, 122
    %v25 = vpop.permute.xlu0 %24
    %vm26 = vcmask 48128
    %s27 = scalar_lea.vmem [#allocation0], 1
    %28 = vst.msk [vmem:[%s27] ss:$8 sm:$0xf] %vm26, %v25
    %s29 = scalar_lea.vmem [#allocation0], 1
    %30 = vst.msk [vmem:[%s29] ss:$8 sm:$0xf0] %vm26, %v25
    %v31 = vld [vmem:[#allocation1] sm:$0xff]
    %32 = vrot.lane.b32.xlu0 %v31, 116
    %v33 = vpop.permute.xlu0 %32
    %vm34 = vcmask 48128
    %s35 = scalar_lea.vmem [#allocation0], 2
    %36 = vst.msk [vmem:[%s35] ss:$8 sm:$0xf] %vm34, %v33
    %s37 = scalar_lea.vmem [#allocation0], 2
    %38 = vst.msk [vmem:[%s37] ss:$8 sm:$0xf0] %vm34, %v33
    %v39 = vld [vmem:[#allocation1] sm:$0xff]
    %40 = vrot.lane.b32.xlu0 %v39, 110
    %v41 = vpop.permute.xlu0 %40
    %vm42 = vcmask 48128
    %s43 = scalar_lea.vmem [#allocation0], 3
    %44 = vst.msk [vmem:[%s43] ss:$8 sm:$0xf] %vm42, %v41
    %s45 = scalar_lea.vmem [#allocation0], 3
    %46 = vst.msk [vmem:[%s45] ss:$8 sm:$0xf0] %vm42, %v41
    %s48 = smul.u32 2, 2
    %s49 = sshll.u32 1, %s48
    %s50 = ssub.s32 %s49, 1
    %s51 = sshrl.u32 %s48, 1
    %v52 = vld [vmem:[#allocation0] sm:%s50]
    %v53 = vpack.c.bf16 0.0, %v52
    %s54 = sshll.u32 1, %s51
    %s55 = ssub.s32 %s54, 1
    %56 = vst [vmem:[%s1] sm:%s55] %v53
    %s57 = scalar_lea.vmem [#allocation0], 8
    %v58 = vld [vmem:[%s57] sm:%s50]
    %v59 = vpack.c.bf16 0.0, %v58
    %s60 = sshll.u32 1, %s51
    %s61 = ssub.s32 %s60, 1
    %s62 = scalar_lea.vmem %s1, 2
    %63 = vst [vmem:[%s62] sm:%s61] %v59
    %s64 = scalar_lea.vmem [#allocation0], 16
    %v65 = vld [vmem:[%s64] sm:%s50]
    %v66 = vpack.c.bf16 0.0, %v65
    %s67 = sshll.u32 1, %s51
    %s68 = ssub.s32 %s67, 1
    %s69 = smul.addr 2, 2
    %s70 = scalar_lea.vmem %s1, %s69
    %71 = vst [vmem:[%s70] sm:%s68] %v66
    %s72 = scalar_lea.vmem [#allocation0], 24
    %v73 = vld [vmem:[%s72] sm:%s50]
    %v74 = vpack.c.bf16 0.0, %v73
    %s75 = sshll.u32 1, %s51
    %s76 = ssub.s32 %s75, 1
    %s77 = smul.addr 2, 3
    %s78 = scalar_lea.vmem %s1, %s77
    %79 = vst [vmem:[%s78] sm:%s76] %v74
    %s80 = scalar_lea.vmem [#allocation0], 32
    %v81 = vld [vmem:[%s80] sm:%s50]
    %v82 = vpack.c.bf16 0.0, %v81
    %s83 = sshll.u32 1, %s51
    %s84 = ssub.s32 %s83, 1
    %s85 = smul.addr 2, 4
    %s86 = scalar_lea.vmem %s1, %s85
    %87 = vst [vmem:[%s86] sm:%s84] %v82
    %s88 = scalar_lea.vmem [#allocation0], 40
    %v89 = vld [vmem:[%s88] sm:%s50]
    %v90 = vpack.c.bf16 0.0, %v89
    %s91 = sshll.u32 1, %s51
    %s92 = ssub.s32 %s91, 1
    %s93 = smul.addr 2, 5
    %s94 = scalar_lea.vmem %s1, %s93
    %95 = vst [vmem:[%s94] sm:%s92] %v90
    %s96 = scalar_lea.vmem [#allocation0], 48
    %v97 = vld [vmem:[%s96] sm:%s50]
    %v98 = vpack.c.bf16 0.0, %v97
    %s99 = sshll.u32 1, %s51
    %s100 = ssub.s32 %s99, 1
    %s101 = smul.addr 2, 6
    %s102 = scalar_lea.vmem %s1, %s101
    %103 = vst [vmem:[%s102] sm:%s100] %v98
    %s104 = scalar_lea.vmem [#allocation0], 56
    %v105 = vld [vmem:[%s104] sm:%s50]
    %v106 = vpack.c.bf16 0.0, %v105
    %s107 = sshll.u32 1, %s51
    %s108 = ssub.s32 %s107, 1
    %s109 = smul.addr 2, 7
    %s110 = scalar_lea.vmem %s1, %s109
    %111 = vst [vmem:[%s110] sm:%s108] %v106

// kernel: generator_total_loss.16
$region0: #{generator_total_loss.16}
  #allocation0 [shape = 'u32[]', space=smem, size = 0x4, offset = 0x4, fixed_abs, tag = 'smem constant byte address 0x4 - core index']
  #allocation1 [shape = 'u32[144,128]{1,0:T(1,128)}', space=vmem, size = 0x12000, scoped, tag = 'internal scratch']
  %s0 = inlined_call_operand.vmem [shape: bf16[2,5,128], index: 0, kind: input, shape index: {}]
  %s1 = inlined_call_operand.vmem [shape: bf16[4,5], index: 1, kind: input, shape index: {}]
  %s2 = inlined_call_operand.vmem [shape: f32[4,1], index: 2, kind: input, shape index: {}]
  %s3 = inlined_call_operand.vmem [shape: f32[2,4,128], index: 3, kind: output, shape index: {0}]
  %s4 = inlined_call_operand.vmem [shape: f32[1,8,128], index: 4, kind: output, shape index: {1}]
  %s5 = inlined_call_operand.hbm [shape: f32[1,8,128], index: 5, kind: output, shape index: {2}]
  %6 = xla_tuple %s3, %s4, %s5
  %s7 = sld [smem:[#allocation0]]
  $region38: #{generator_total_loss.16} parent=0
    _
  %s9 = ssub.s32 1, %s7
  %s10 = scalar_select 0, %s9, %s7
  $region1: #{generator_total_loss.16} parent=0
    #allocation2 [shape = 'u8[4096]{0}', space=vmem, size = 0x1000, scoped, tag = 'output window, operand 2, single buffered']
    #allocation3 [shape = 's32[1]{0}', space=sflag, size = 0x4, scoped, tag = 'scoped memory for generator_total_loss.16']
    %11 = vsyncpa [#allocation3], 0
    // Predicated region
    $region2: #{generator_total_loss.16} parent=1 // pred_check
      _
    $region3: #{generator_total_loss.16} parent=1 // pred_check_branch
      %13 = sbr.rel (0) target = $region5
    $region4: #{generator_total_loss.16} parent=1 // pred_region
      _
    $region5: #{generator_total_loss.16} parent=1 // pred_fallthru
      _
    // Predicated region
    $region6: #{generator_total_loss.16} parent=1 // pred_check
      _
    $region7: #{generator_total_loss.16} parent=1 // pred_check_branch
      %15 = sbr.rel (0) target = $region9
    $region8: #{generator_total_loss.16} parent=1 // pred_region
      _
    $region9: #{generator_total_loss.16} parent=1 // pred_fallthru
      _
    // Predicated region
    $region10: #{generator_total_loss.16} parent=1 // pred_check
      _
    $region11: #{generator_total_loss.16} parent=1 // pred_check_branch
      %17 = sbr.rel (0) target = $region13
    $region12: #{generator_total_loss.16} parent=1 // pred_region
      _
    $region13: #{generator_total_loss.16} parent=1 // pred_fallthru
      _
    %v19 = vld [vmem:[%s1] sm:$0x3]
    %v20 = vld [vmem:[%s2] sm:$0xf]
    %v21 = vld [vmem:[%s0] sm:$0x7]
    %23 = vset.pattern.permute.xlu0 0
    %24 = vperm.xlu0 %23, %v20
    %v25 = vpop.permute.xlu0 %24
    %vm27 = vcmask 39936
    %v29 = vsel %vm27, %v19, 0
    %vm31 = vcmask 1041408
    %vm32 = vcmask 1042432
    %v33 = vsel %vm31, 4294967295, 65535
    %v34 = vsel %vm32, %v33, 0
    %v36 = vand.u32 %v21, %v34
    %38 = vmatprep.subr.bf16.mxu0 0
    %39 = vmatpush1.bf16.msra.mxu0 0
    %40 = vmatprep.subr.bf16.mxu0 0
    %41 = vmatpush1.bf16.msra.mxu0 0
    %42 = vmatprep.subr.bf16.mxu0 0
    %43 = vmatpush1.bf16.msra.mxu0 0
    %44 = vmatprep.subr.bf16.mxu0 0
    %45 = vmatpush1.bf16.msra.mxu0 0
    %46 = vmatprep.subr.bf16.mxu0 0
    %47 = vmatpush1.bf16.msra.mxu0 0
    %48 = vmatprep.subr.bf16.mxu0 0
    %49 = vmatpush1.bf16.msra.mxu0 0
    %50 = vmatprep.subr.bf16.mxu0 0
    %51 = vmatpush1.bf16.msra.mxu0 0
    %52 = vmatprep.subr.bf16.mxu0 0
    %53 = vmatpush1.bf16.msra.mxu0 %v36
    %54 = vmatprep.subr.bf16.mxu0 0
    %55 = vmatpush2.bf16.msra.mxu0 0
    %56 = vmatprep.subr.bf16.mxu0 0
    %57 = vmatpush2.bf16.msra.mxu0 0
    %58 = vmatprep.subr.bf16.mxu0 0
    %59 = vmatpush2.bf16.msra.mxu0 0
    %60 = vmatprep.subr.bf16.mxu0 0
    %61 = vmatpush2.bf16.msra.mxu0 0
    %62 = vmatprep.subr.bf16.mxu0 0
    %63 = vmatpush2.bf16.msra.mxu0 0
    %64 = vmatprep.subr.bf16.mxu0 0
    %65 = vmatpush2.bf16.msra.mxu0 0
    %66 = vmatprep.subr.bf16.mxu0 0
    %67 = vmatpush2.bf16.msra.mxu0 0
    %68 = vmatprep.subr.bf16.mxu0 0
    %69 = vmatpush2.bf16.msra.mxu0 0
    %70 = vmatprep.mubr.bf16.mxu0 0
    %71 = vmatmul.mubr.bf16.gmra.mxu0 %v29
    %v72 = vpop.f32.mrf.mxu0
    %v73 = vadd.f32 %v25, %v72
    %v74 = vpop.f32.mrf.mxu0
    %v75 = vpop.f32.mrf.mxu0
    %v76 = vpop.f32.mrf.mxu0
    %77 = vdwg.mxu0
    %vm78 = vcmp.gt.f32.partialorder %v73, 0.0
    %v79 = vmul.f32 %v73, 0.1
    %v80 = vsel %vm78, %v73, %v79
    %81 = vst [vmem:[%s3] sm:$0xf] %v80
    %s82 = scalar_lea.vmem %s0, 4
    %v83 = vld [vmem:[%s82] sm:$0x7]
    %v85 = vand.u32 %v83, %v34
    %87 = vmatprep.subr.bf16.mxu0 0
    %88 = vmatpush1.bf16.msra.mxu0 0
    %89 = vmatprep.subr.bf16.mxu0 0
    %90 = vmatpush1.bf16.msra.mxu0 0
    %91 = vmatprep.subr.bf16.mxu0 0
    %92 = vmatpush1.bf16.msra.mxu0 0
    %93 = vmatprep.subr.bf16.mxu0 0
    %94 = vmatpush1.bf16.msra.mxu0 0
    %95 = vmatprep.subr.bf16.mxu0 0
    %96 = vmatpush1.bf16.msra.mxu0 0
    %97 = vmatprep.subr.bf16.mxu0 0
    %98 = vmatpush1.bf16.msra.mxu0 0
    %99 = vmatprep.subr.bf16.mxu0 0
    %100 = vmatpush1.bf16.msra.mxu0 0
    %101 = vmatprep.subr.bf16.mxu0 0
    %102 = vmatpush1.bf16.msra.mxu0 %v85
    %103 = vmatprep.subr.bf16.mxu0 0
    %104 = vmatpush2.bf16.msra.mxu0 0
    %105 = vmatprep.subr.bf16.mxu0 0
    %106 = vmatpush2.bf16.msra.mxu0 0
    %107 = vmatprep.subr.bf16.mxu0 0
    %108 = vmatpush2.bf16.msra.mxu0 0
    %109 = vmatprep.subr.bf16.mxu0 0
    %110 = vmatpush2.bf16.msra.mxu0 0
    %111 = vmatprep.subr.bf16.mxu0 0
    %112 = vmatpush2.bf16.msra.mxu0 0
    %113 = vmatprep.subr.bf16.mxu0 0
    %114 = vmatpush2.bf16.msra.mxu0 0
    %115 = vmatprep.subr.bf16.mxu0 0
    %116 = vmatpush2.bf16.msra.mxu0 0
    %117 = vmatprep.subr.bf16.mxu0 0
    %118 = vmatpush2.bf16.msra.mxu0 0
    %119 = vmatprep.mubr.bf16.mxu0 0
    %120 = vmatmul.mubr.bf16.gmra.mxu0 %v29
    %v121 = vpop.f32.mrf.mxu0
    %v122 = vadd.f32 %v25, %v121
    %v123 = vpop.f32.mrf.mxu0
    %v124 = vpop.f32.mrf.mxu0
    %v125 = vpop.f32.mrf.mxu0
    %126 = vdwg.mxu0
    %vm127 = vcmp.gt.f32.partialorder %v122, 0.0
    %v128 = vmul.f32 %v122, 0.1
    %v129 = vsel %vm127, %v122, %v128
    %s130 = scalar_lea.vmem %s3, 4
    %131 = vst [vmem:[%s130] sm:$0xf] %v129
    %v132 = vsub.f32 %v80, %v129
    %v133 = vand.u32 2147483647, %v132
    %vm134 = vcmask 1043456
    %v135 = vsel %vm134, %v133, 0.0
    %136 = vadd.xlane.f32.xlu0 %v135
    %v137 = vpop.xlane.xlu0 %136
    %v138 = vrot.slane %v137, 4
    %v139 = vadd.f32 %v137, %v138
    %v140 = vrot.slane %v139, 2
    %v141 = vadd.f32 %v139, %v140
    %v142 = vrot.slane %v141, 1
    %v143 = vadd.f32 %v141, %v142
    %s144 = vtos %v143
    %v145 = vlaneseq
    %v146 = vand.u32 %v145, 127
    %s147 = smul.u32 0, 128
    %v148 = vstv %s147
    %v149 = vadd.s32 %v146, %v148
    %vm150 = vcmp.lt.s32.totalorder %v149, 64
    %v151 = vsel %vm150, 1, 0
    %v152 = vcvt.s32.f32 %v151
    %v153 = vsub.f32 1.0, %v129
    %v154 = vmul.f32 %v153, %v153
    %v155 = vmul.f32 %v154, %v152
    %v156 = vsel %vm134, %v155, 0.0
    %157 = vadd.xlane.f32.xlu0 %v156
    %v158 = vpop.xlane.xlu0 %157
    %v159 = vrot.slane %v158, 4
    %v160 = vadd.f32 %v158, %v159
    %v161 = vrot.slane %v160, 2
    %v162 = vadd.f32 %v160, %v161
    %v163 = vrot.slane %v162, 1
    %v164 = vadd.f32 %v162, %v163
    %s165 = vtos %v164
    %v166 = vstv %s144
    %167 = vst [vmem:[%s4] sm:$0xff] %v166
    %v168 = vstv %s165
    %169 = vst [vmem:[#allocation2] sm:$0xff] %v168
    // Predicated region
    $region14: #{generator_total_loss.16} parent=1 // pred_check
      _
    $region15: #{generator_total_loss.16} parent=1 // pred_check_branch
      %171 = sbr.rel (0) target = $region17
    $region16: #{generator_total_loss.16} parent=1 // pred_region
      _
    $region17: #{generator_total_loss.16} parent=1 // pred_fallthru
      _
    // Predicated region
    $region18: #{generator_total_loss.16} parent=1 // pred_check
      _
    $region19: #{generator_total_loss.16} parent=1 // pred_check_branch
      %173 = sbr.rel (0) target = $region21
    $region20: #{generator_total_loss.16} parent=1 // pred_region
      _
    $region21: #{generator_total_loss.16} parent=1 // pred_fallthru
      _
    // Predicated region
    $region22: #{generator_total_loss.16} parent=1 // pred_check
      _
    $region23: #{generator_total_loss.16} parent=1 // pred_check_branch
      %175 = sbr.rel (0) target = $region25
    $region24: #{generator_total_loss.16} parent=1 // pred_region
      %s177 = ssub.s32 128, 128
      %178 = vsyncadd [#allocation3], %s177
      %s180 = sshll.u32 [#allocation2], 4
      %s181 = int_to_ptr.vmem [resolvable:$true] %s180
      %183 = dma.vmem_to_hbm [thread:$0]  %s181, 128, %s5, [#allocation3]
    $region25: #{generator_total_loss.16} parent=1 // pred_fallthru
      _
    // Predicated region
    $region26: #{generator_total_loss.16} parent=1 // pred_check
      _
    $region27: #{generator_total_loss.16} parent=1 // pred_check_branch
      %185 = sbr.rel (0) target = $region29
    $region28: #{generator_total_loss.16} parent=1 // pred_region
      _
    $region29: #{generator_total_loss.16} parent=1 // pred_fallthru
      _
    // Predicated region
    $region30: #{generator_total_loss.16} parent=1 // pred_check
      _
    $region31: #{generator_total_loss.16} parent=1 // pred_check_branch
      %187 = sbr.rel (0) target = $region33
    $region32: #{generator_total_loss.16} parent=1 // pred_region
      _
    $region33: #{generator_total_loss.16} parent=1 // pred_fallthru
      _
    // Predicated region
    $region34: #{generator_total_loss.16} parent=1 // pred_check
      _
    $region35: #{generator_total_loss.16} parent=1 // pred_check_branch
      %189 = sbr.rel (0) target = $region37
    $region36: #{generator_total_loss.16} parent=1 // pred_region
      %190 = dma.done [#allocation3], 128
    $region37: #{generator_total_loss.16} parent=1 // pred_fallthru
      _
    %191 = vsyncpa [#allocation3], 1

// kernel: squeeze.74
$region0: #{squeeze.74}
  %s0 = inlined_call_operand.vmem [shape: f32[1,1,6,4], index: 0, kind: input, shape index: {}]
  %s1 = inlined_call_operand.vmem [shape: f32[24], index: 1, kind: output, shape index: {}]
  $region1: #{squeeze.74} parent=0
    #allocation0 [shape = 'u8[4096]{0}', space=vmem, size = 0x1000, scoped, tag = 'scoped mem for output reshape']
    %v2 = vld [vmem:[%s0] sm:$0x1]
    %vm3 = vcmask 31744
    %4 = vst.msk [vmem:[#allocation0] sm:$0x1] %vm3, %v2
    %s5 = scalar_lea.vmem %s0, 5
    %v6 = vld [vmem:[%s5] sm:$0x1]
    %7 = vrot.lane.b32.xlu0 %v6, 20
    %v8 = vpop.permute.xlu0 %7
    %vm9 = vcmask 195744
    %10 = vst.msk [vmem:[#allocation0] sm:$0x1] %vm9, %v8
    %s11 = scalar_lea.vmem %s0, 4
    %v12 = vld [vmem:[%s11] sm:$0x1]
    %13 = vrot.lane.b32.xlu0 %v12, 16
    %v14 = vpop.permute.xlu0 %13
    %vm15 = vcmask 162944
    %16 = vst.msk [vmem:[#allocation0] sm:$0x1] %vm15, %v14
    %s17 = scalar_lea.vmem %s0, 3
    %v18 = vld [vmem:[%s17] sm:$0x1]
    %19 = vrot.lane.b32.xlu0 %v18, 12
    %v20 = vpop.permute.xlu0 %19
    %vm21 = vcmask 130144
    %22 = vst.msk [vmem:[#allocation0] sm:$0x1] %vm21, %v20
    %s23 = scalar_lea.vmem %s0, 2
    %v24 = vld [vmem:[%s23] sm:$0x1]
    %25 = vrot.lane.b32.xlu0 %v24, 8
    %v26 = vpop.permute.xlu0 %25
    %vm27 = vcmask 97344
    %28 = vst.msk [vmem:[#allocation0] sm:$0x1] %vm27, %v26
    %s29 = scalar_lea.vmem %s0, 1
    %v30 = vld [vmem:[%s29] sm:$0x1]
    %31 = vrot.lane.b32.xlu0 %v30, 4
    %v32 = vpop.permute.xlu0 %31
    %vm33 = vcmask 64544
    %34 = vst.msk [vmem:[#allocation0] sm:$0x1] %vm33, %v32
    %s36 = sshll.u32 1, 1
    %s37 = ssub.s32 %s36, 1
    %v39 = vld [vmem:[#allocation0] sm:%s37]
    %s40 = sshll.u32 1, 1
    %s41 = ssub.s32 %s40, 1
    %42 = vst [vmem:[%s1] sm:%s41] %v39

// kernel: squeeze.61
$region0: #{squeeze.61}
  %s0 = inlined_call_operand.vmem [shape: f32[1,1,4,6], index: 0, kind: input, shape index: {}]
  %s1 = inlined_call_operand.vmem [shape: f32[24], index: 1, kind: output, shape index: {}]
  $region1: #{squeeze.61} parent=0
    #allocation0 [shape = 'u8[4096]{0}', space=vmem, size = 0x1000, scoped, tag = 'scoped mem for output reshape']
    #allocation1 [shape = 'u8[4096]{0}', space=vmem, size = 0x1000, scoped, tag = 'scoped mem for input reshape']
    %s3 = sshll.u32 1, 4
    %s4 = ssub.s32 %s3, 1
    %v5 = vld [vmem:[%s0] sm:%s4]
    %6 = vst [vmem:[#allocation1] sm:%s4] %v5
    %v7 = vld [vmem:[#allocation1] sm:$0x1]
    %vm8 = vcmask 48128
    %9 = vst.msk [vmem:[#allocation0] sm:$0x1] %vm8, %v7
    %s10 = scalar_lea.vmem [#allocation1], 3
    %v11 = vld [vmem:[%s10] sm:$0x1]
    %12 = vrot.lane.b32.xlu0 %v11, 18
    %v13 = vpop.permute.xlu0 %12
    %vm14 = vcmask 195728
    %15 = vst.msk [vmem:[#allocation0] sm:$0x1] %vm14, %v13
    %s16 = scalar_lea.vmem [#allocation1], 2
    %v17 = vld [vmem:[%s16] sm:$0x1]
    %18 = vrot.lane.b32.xlu0 %v17, 12
    %v19 = vpop.permute.xlu0 %18
    %vm20 = vcmask 146528
    %21 = vst.msk [vmem:[#allocation0] sm:$0x1] %vm20, %v19
    %s22 = scalar_lea.vmem [#allocation1], 1
    %v23 = vld [vmem:[%s22] sm:$0x1]
    %24 = vrot.lane.b32.xlu0 %v23, 6
    %v25 = vpop.permute.xlu0 %24
    %vm26 = vcmask 97328
    %27 = vst.msk [vmem:[#allocation0] sm:$0x1] %vm26, %v25
    %s29 = sshll.u32 1, 1
    %s30 = ssub.s32 %s29, 1
    %v32 = vld [vmem:[#allocation0] sm:%s30]
    %s33 = sshll.u32 1, 1
    %s34 = ssub.s32 %s33, 1
    %35 = vst [vmem:[%s1] sm:%s34] %v32

// kernel: generator_total_loss.23
$region0: #{generator_total_loss.23}
  #allocation0 [shape = 'u32[]', space=smem, size = 0x4, offset = 0x4, fixed_abs, tag = 'smem constant byte address 0x4 - core index']
  #allocation1 [shape = 'u32[144,128]{1,0:T(1,128)}', space=vmem, size = 0x12000, scoped, tag = 'internal scratch']
  #allocation2 [shape = 'f32[1,1]{1,0:T(1,128)S(1)}', space=vmem, size = 0x200, scoped, tag = 'scoped memory for generator_total_loss.23']
  %s0 = inlined_call_operand.<no memory space> [shape: f32[1,1], index: 0, kind: input, shape index: {}]
  %s1 = inlined_call_operand.vmem [shape: f32[8,128], index: 1, kind: input, shape index: {}]
  %s2 = inlined_call_operand.vmem [shape: f32[1,8,128], index: 2, kind: output, shape index: {0}]
  %s3 = inlined_call_operand.vmem [shape: f32[1,8,128], index: 3, kind: output, shape index: {1}]
  %4 = xla_tuple %s2, %s3
  %s5 = sld [smem:[#allocation0]]
  $region26: #{generator_total_loss.23} parent=0
    _
  %s7 = ssub.s32 1, %s5
  %s8 = scalar_select 0, %s7, %s5
  %v9 = vstv %s0
  %10 = vst [vmem:[#allocation2] sm:$0x1] %v9
  // Predicated region
  $region2: #{generator_total_loss.23} parent=0 // pred_check
    _
  $region3: #{generator_total_loss.23} parent=0 // pred_check_branch
    %12 = sbr.rel (0) target = $region5
  $region4: #{generator_total_loss.23} parent=0 // pred_region
    _
  $region5: #{generator_total_loss.23} parent=0 // pred_fallthru
    _
  // Predicated region
  $region6: #{generator_total_loss.23} parent=0 // pred_check
    _
  $region7: #{generator_total_loss.23} parent=0 // pred_check_branch
    %14 = sbr.rel (0) target = $region9
  $region8: #{generator_total_loss.23} parent=0 // pred_region
    _
  $region9: #{generator_total_loss.23} parent=0 // pred_fallthru
    _
  %v15 = vld [vmem:[%s1] sm:$0xff]
  %v16 = vld [vmem:[#allocation2] sm:$0x1]
  %s17 = smul.u32 0, 1024
  %v18 = vlaneseq
  %v19 = vshrl.u32 %v18, 7
  %v20 = vmul.u32 %v19, 128
  %v21 = vstv %s17
  %v22 = vadd.s32 %v21, %v20
  %v23 = vlaneseq
  %v24 = vand.u32 %v23, 127
  %v25 = vadd.s32 %v22, %v24
  %v27 = vlaneseq
  %v28 = vshrl.u32 %v27, 7
  %v29 = vsub.s32 0, %v28
  %v30 = vrot.slane %v16, %v29
  %31 = vset.pattern.permute.xlu0 0
  %32 = vperm.xlu0 %31, %v30
  %v33 = vpop.permute.xlu0 %32
  %vm35 = vcmp.lt.f32.partialorder %v15, %v33
  %vm36 = vcmp.lt.s32.totalorder %v25, 24
  %vm37 = vmand %vm35, %vm36
  %v38 = vsub.f32 %v15, %v33
  %v39 = vmul.f32 %v38, %v38
  %v40 = vsel %vm37, %v39, 0.0
  %41 = vadd.xlane.f32.xlu0 %v40
  %v42 = vpop.xlane.xlu0 %41
  %v43 = vrot.slane %v42, 4
  %v44 = vadd.f32 %v42, %v43
  %v45 = vrot.slane %v44, 2
  %v46 = vadd.f32 %v44, %v45
  %v47 = vrot.slane %v46, 1
  %v48 = vadd.f32 %v46, %v47
  %s49 = vtos %v48
  %v50 = vsel %vm37, 1, 0
  %v51 = vcvt.s32.f32 %v50
  %52 = vadd.xlane.f32.xlu0 %v51
  %v53 = vpop.xlane.xlu0 %52
  %v54 = vrot.slane %v53, 4
  %v55 = vadd.f32 %v53, %v54
  %v56 = vrot.slane %v55, 2
  %v57 = vadd.f32 %v55, %v56
  %v58 = vrot.slane %v57, 1
  %v59 = vadd.f32 %v57, %v58
  %s60 = vtos %v59
  %v61 = vstv %s49
  %62 = vst [vmem:[%s2] sm:$0xff] %v61
  %v63 = vstv %s60
  %64 = vst [vmem:[%s3] sm:$0xff] %v63
  // Predicated region
  $region10: #{generator_total_loss.23} parent=0 // pred_check
    _
  $region11: #{generator_total_loss.23} parent=0 // pred_check_branch
    %66 = sbr.rel (0) target = $region13
  $region12: #{generator_total_loss.23} parent=0 // pred_region
    _
  $region13: #{generator_total_loss.23} parent=0 // pred_fallthru
    _
  // Predicated region
  $region14: #{generator_total_loss.23} parent=0 // pred_check
    _
  $region15: #{generator_total_loss.23} parent=0 // pred_check_branch
    %68 = sbr.rel (0) target = $region17
  $region16: #{generator_total_loss.23} parent=0 // pred_region
    _
  $region17: #{generator_total_loss.23} parent=0 // pred_fallthru
    _
  // Predicated region
  $region18: #{generator_total_loss.23} parent=0 // pred_check
    _
  $region19: #{generator_total_loss.23} parent=0 // pred_check_branch
    %70 = sbr.rel (0) target = $region21
  $region20: #{generator_total_loss.23} parent=0 // pred_region
    _
  $region21: #{generator_total_loss.23} parent=0 // pred_fallthru
    _
  // Predicated region
  $region22: #{generator_total_loss.23} parent=0 // pred_check
    _
  $region23: #{generator_total_loss.23} parent=0 // pred_check_branch
    %72 = sbr.rel (0) target = $region25
  $region24: #{generator_total_loss.23} parent=0 // pred_region
    _
  $region25: #{generator_total_loss.23} parent=0 // pred_fallthru
    _

</llo_original>
